<compile_context>
chip_gen: v6e
topology: v6e:2x2x1
jax: 0.10.0
libtpu: 0.0.40
codegen_flags: <defaults>
</compile_context>

<pallas_src>
import functools
import math

import jax
import jax.numpy as jnp
from jax.experimental import pallas as pl
from jax.experimental.pallas import tpu as pltpu


# ----------------------------- in-kernel math ------------------------------ #

def _gelu(x):
    c = 0.7978845608028654  # sqrt(2/pi)
    return 0.5 * x * (1.0 + jnp.tanh(c * (x + 0.044715 * x * x * x)))


def _layernorm(x, g, b, eps):
    mean = jnp.mean(x, axis=-1, keepdims=True)
    var = jnp.mean(jnp.square(x - mean), axis=-1, keepdims=True)
    return (x - mean) * jax.lax.rsqrt(var + eps) * g + b


# ----------------------------- Pallas kernels ------------------------------ #

def _feature_kernel(pat0_ref, w0_ref, gng_ref, gnb_ref, w1_ref, lng_ref,
                    lnb_ref, fpw_ref, fpb_ref, h_ref, y_sc, *, eps, k1, s1, t2):
    # conv0: (T1, Cin*K0) x (Cin*K0, C0) on the MXU, f32 accumulation.
    y = jnp.dot(pat0_ref[0].astype(jnp.bfloat16), w0_ref[...],
                preferred_element_type=jnp.float32)          # (T1, C0)
    # GroupNorm(num_groups == C0): per-channel normalization over time (axis 0).
    mean = jnp.mean(y, axis=0, keepdims=True)
    var = jnp.mean(jnp.square(y - mean), axis=0, keepdims=True)
    y = (y - mean) * jax.lax.rsqrt(var + eps) * gng_ref[...] + gnb_ref[...]
    y_sc[...] = _gelu(y)

    # conv1 im2col entirely in VMEM: K1 strided sublane reads of the conv0
    # output (stride s1), tap-major concatenation along lanes.
    taps = [y_sc[pl.ds(k, t2, stride=s1), :] for k in range(k1)]
    pat1 = jnp.concatenate(taps, axis=-1)                    # (T2, K1*C0)

    z = _gelu(jnp.dot(pat1.astype(jnp.bfloat16), w1_ref[...],
                      preferred_element_type=jnp.float32))   # (T2, C1)
    z = _layernorm(z, lng_ref[...], lnb_ref[...], eps)
    h = jnp.dot(z.astype(jnp.bfloat16), fpw_ref[...],
                preferred_element_type=jnp.float32) + fpb_ref[...]
    h_ref[0] = h.astype(h_ref.dtype)                         # bf16 stage boundary


def _encoder_kernel(h_ref, posw_ref, posb_ref, encg_ref, encb_ref,
                    wqkv_ref, bqkv_ref, wo_ref, bo_ref, ln1g_ref, ln1b_ref,
                    wi_ref, bi_ref, wo2_ref, bo2_ref, ln2g_ref, ln2b_ref,
                    fcw_ref, fcb_ref, out_ref, *, num_layers, num_heads, eps):
    x = h_ref[0].astype(jnp.float32)                         # (T, H)
    T, H = x.shape
    d = H // num_heads
    scale = 1.0 / float(d) ** 0.5

    # ---- positional conv (kernel=3, pad=1), densified block-diagonal weight.
    # Taps built in VMEM via zero-padded shifts: no HBM patch tensor, no
    # per-group Python loop, a single (T, 3H) x (3H, H) matmul.
    zrow = jnp.zeros((1, H), jnp.float32)
    x_prev = jnp.concatenate([zrow, x[:-1, :]], axis=0)      # x[t-1]
    x_next = jnp.concatenate([x[1:, :], zrow], axis=0)       # x[t+1]
    pos_in = jnp.concatenate([x_prev, x, x_next], axis=-1)   # (T, 3H), tap-major
    pos = jnp.dot(pos_in.astype(jnp.bfloat16), posw_ref[...],
                  preferred_element_type=jnp.float32) + posb_ref[...]
    x = x + _gelu(pos)
    x = _layernorm(x, encg_ref[...], encb_ref[...], eps)

    # ---- post-LN transformer layers, fully VMEM-resident.
    # TODO(synk): for num_layers >> 2 turn this static unroll into an L grid
    #             axis with L-blocked weights (see header TODO).
    for l in range(num_layers):
        xb = x.astype(jnp.bfloat16)
        # Fused QKV projection: one (T, H) x (H, 3H) matmul instead of three.
        qkv = (jnp.dot(xb, wqkv_ref[l], preferred_element_type=jnp.float32)
               + bqkv_ref[l])                                # (T, 3H)
        qkv_b = qkv.astype(jnp.bfloat16)

        # Head-major (nh, T, d) operands via leading-axis stacking, then a
        # single batched dot_general for scores and one for context.
        qh = jnp.stack([qkv_b[:, hh * d:(hh + 1) * d]
                        for hh in range(num_heads)], axis=0)
        kh = jnp.stack([qkv_b[:, H + hh * d:H + (hh + 1) * d]
                        for hh in range(num_heads)], axis=0)
        vh = jnp.stack([qkv_b[:, 2 * H + hh * d:2 * H + (hh + 1) * d]
                        for hh in range(num_heads)], axis=0)

        s = jax.lax.dot_general(qh, kh, (((2,), (2,)), ((0,), (0,))),
                                preferred_element_type=jnp.float32) * scale
        m = jnp.max(s, axis=-1, keepdims=True)
        p = jnp.exp(s - m)
        p = p * pl.reciprocal(jnp.sum(p, axis=-1, keepdims=True), approx=True)
        ctx = jax.lax.dot_general(p.astype(jnp.bfloat16), vh,
                                  (((2,), (1,)), ((0,), (0,))),
                                  preferred_element_type=jnp.float32)  # (nh,T,d)
        attn = jnp.concatenate([ctx[hh] for hh in range(num_heads)], axis=-1)
        attn = jnp.dot(attn.astype(jnp.bfloat16), wo_ref[l],
                       preferred_element_type=jnp.float32) + bo_ref[l]
        x = _layernorm(x + attn, ln1g_ref[l], ln1b_ref[l], eps)

        xb = x.astype(jnp.bfloat16)
        f = _gelu(jnp.dot(xb, wi_ref[l], preferred_element_type=jnp.float32)
                  + bi_ref[l])
        f = jnp.dot(f.astype(jnp.bfloat16), wo2_ref[l],
                    preferred_element_type=jnp.float32) + bo2_ref[l]
        x = _layernorm(x + f, ln2g_ref[l], ln2b_ref[l], eps)

    # ---- classification head on first time step, 128-lane-dense output slab.
    cls = x[0:1, :]                                          # (1, H)
    logits = jnp.dot(cls.astype(jnp.bfloat16), fcw_ref[...],
                     preferred_element_type=jnp.float32) + fcb_ref[...]
    out_ref[0] = logits                                      # (1, 128)


# ----------------------------- pallas_call wrappers ------------------------ #

def _rep(shape):
    """Whole-array block replicated across the batch grid axis."""
    n = len(shape)
    return pl.BlockSpec(shape, lambda b, _n=n: (0,) * _n)


def _vmem_limit_bytes(arrays, outs, scratch_bytes=0):
    """Explicit scoped-VMEM limit: double-buffered block sums + headroom."""
    total = scratch_bytes
    for a in list(arrays) + list(outs):
        total += 2 * math.prod(a.shape) * jnp.dtype(a.dtype).itemsize
    return int(total) + (8 << 20)


def feature_extractor(pat0, p, cfg, eps=1e-5):
    B, T1, CK0 = pat0.shape
    C0 = p["conv0_w"].shape[1]
    H = p["fp_w"].shape[1]
    (_c0, _k0, _s0), (_c1, K1, S1) = cfg.conv_layers
    T2 = (T1 - K1) // S1 + 1

    args = (pat0, p["conv0_w"], p["gn_g"], p["gn_b"], p["conv1_w"],
            p["fp_ln_g"], p["fp_ln_b"], p["fp_w"], p["fp_b"])
    out_shape = jax.ShapeDtypeStruct((B, T2, H), jnp.bfloat16)
    in_specs = [pl.BlockSpec((1, T1, CK0), lambda b: (b, 0, 0))]
    in_specs += [_rep(a.shape) for a in args[1:]]
    scratch_bytes = T1 * C0 * 4

    return pl.pallas_call(
        functools.partial(_feature_kernel, eps=eps, k1=K1, s1=S1, t2=T2),
        out_shape=out_shape,
        grid=(B,),
        in_specs=in_specs,
        out_specs=pl.BlockSpec((1, T2, H), lambda b: (b, 0, 0)),
        scratch_shapes=[pltpu.VMEM((T1, C0), jnp.float32)],
        compiler_params=pltpu.CompilerParams(
            dimension_semantics=("parallel",),
            vmem_limit_bytes=_vmem_limit_bytes(args, [out_shape], scratch_bytes)),
    )(*args), T2


def encoder_forward(h, p, cfg, eps=1e-5):
    B, T, H = h.shape
    args = (h, p["pos_w"], p["pos_b"], p["enc_ln_g"], p["enc_ln_b"],
            p["wqkv"], p["bqkv"], p["wo"], p["bo"], p["ln1_g"], p["ln1_b"],
            p["wi"], p["bi"], p["wo2"], p["bo2"], p["ln2_g"], p["ln2_b"],
            p["fc_w"], p["fc_b"])
    out_shape = jax.ShapeDtypeStruct((B, 1, 128), jnp.float32)
    in_specs = [pl.BlockSpec((1, T, H), lambda b: (b, 0, 0))]
    in_specs += [_rep(a.shape) for a in args[1:]]

    logits = pl.pallas_call(
        functools.partial(_encoder_kernel, num_layers=cfg.num_layers,
                          num_heads=cfg.num_heads, eps=eps),
        out_shape=out_shape,
        grid=(B,),
        in_specs=in_specs,
        out_specs=pl.BlockSpec((1, 1, 128), lambda b: (b, 0, 0)),
        compiler_params=pltpu.CompilerParams(
            dimension_semantics=("parallel",),
            vmem_limit_bytes=_vmem_limit_bytes(args, [out_shape])),
    )(*args)
    return logits[:, 0, :cfg.num_classes]


# ----------------------------- glue (plain JAX) ----------------------------- #

def im2col_btc(x, kernel, stride):
    """x: (B, T, C) -> patches (B, T_out, C*K), (channel, tap)-flat order."""
    B, T, C = x.shape
    T_out = (T - kernel) // stride + 1
    idx = jnp.arange(T_out)[:, None] * stride + jnp.arange(kernel)[None, :]
    patches = x[:, idx, :]                              # (B, T_out, K, C)
    patches = jnp.transpose(patches, (0, 1, 3, 2))      # (B, T_out, C, K)
    return patches.reshape(B, T_out, C * kernel)


# ----------------------------- model --------------------------------------- #

class Config:
    feature_dim = 4                          # input channels (spectrogram bins)
    conv_layers = ((32, 10, 5), (32, 3, 2))  # (dim, kernel, stride) per layer
    hidden = 32
    num_layers = 2
    num_heads = 4
    intermediate = 64
    pos_conv_kernel = 3
    pos_conv_groups = 4
    num_classes = 5
    time_steps = 128
    batch = 2


def init_params(key, cfg):
    keys = iter(jax.random.split(key, 32))

    def nrm(shape, scale=0.05):
        return scale * jax.random.normal(next(keys), shape, jnp.float32)

    H = cfg.hidden
    Cin = cfg.feature_dim
    (C0, K0, _s0), (C1, K1, _s1) = cfg.conv_layers
    G, Kp = cfg.pos_conv_groups, cfg.pos_conv_kernel
    cg = H // G
    L = cfg.num_layers
    I = cfg.intermediate
    nc = cfg.num_classes

    p = {}
    # conv0: PyTorch-layout weight (C0, Cin, K0) -> (Cin*K0, C0), (c, k)-flat.
    w0 = nrm((C0, Cin, K0), 0.1)
    p["conv0_w"] = jnp.transpose(w0.reshape(C0, Cin * K0)).astype(jnp.bfloat16)
    p["gn_g"] = jnp.ones((1, C0), jnp.float32)
    p["gn_b"] = jnp.zeros((1, C0), jnp.float32)
    # conv1: (C1, C0, K1) -> (K1*C0, C1), tap-major to match in-kernel im2col.
    w1 = nrm((C1, C0, K1), 0.1)
    p["conv1_w"] = jnp.transpose(w1, (2, 1, 0)).reshape(K1 * C0, C1).astype(jnp.bfloat16)

    # feature projection
    p["fp_ln_g"] = jnp.ones((1, C1), jnp.float32)
    p["fp_ln_b"] = jnp.zeros((1, C1), jnp.float32)
    p["fp_w"] = nrm((C1, H)).astype(jnp.bfloat16)
    p["fp_b"] = jnp.zeros((1, H), jnp.float32)

    # grouped positional conv, densified to block-diagonal (Kp*H, H) weight
    # (row index = tap*H + h_in; zeros off the per-group diagonal blocks).
    wg = nrm((Kp, G, cg, cg), 0.1)
    dense = jnp.zeros((Kp, H, H), jnp.float32)
    for g in range(G):
        dense = dense.at[:, g * cg:(g + 1) * cg, g * cg:(g + 1) * cg].set(wg[:, g])
    p["pos_w"] = dense.reshape(Kp * H, H).astype(jnp.bfloat16)
    p["pos_b"] = jnp.zeros((1, H), jnp.float32)
    p["enc_ln_g"] = jnp.ones((1, H), jnp.float32)
    p["enc_ln_b"] = jnp.zeros((1, H), jnp.float32)

    # transformer layers, stacked on a leading L axis; QKV fused to (H, 3H).
    p["wqkv"] = jnp.concatenate(
        [nrm((L, H, H)), nrm((L, H, H)), nrm((L, H, H))], axis=-1).astype(jnp.bfloat16)
    p["bqkv"] = jnp.zeros((L, 1, 3 * H), jnp.float32)
    p["wo"] = nrm((L, H, H)).astype(jnp.bfloat16)
    p["bo"] = jnp.zeros((L, 1, H), jnp.float32)
    p["ln1_g"] = jnp.ones((L, 1, H), jnp.float32)
    p["ln1_b"] = jnp.zeros((L, 1, H), jnp.float32)
    p["wi"] = nrm((L, H, I)).astype(jnp.bfloat16)
    p["bi"] = jnp.zeros((L, 1, I), jnp.float32)
    p["wo2"] = nrm((L, I, H)).astype(jnp.bfloat16)
    p["bo2"] = jnp.zeros((L, 1, H), jnp.float32)
    p["ln2_g"] = jnp.ones((L, 1, H), jnp.float32)
    p["ln2_b"] = jnp.zeros((L, 1, H), jnp.float32)

    # classification head, zero-padded to 128 output lanes for lane-dense stores.
    fcw = nrm((H, nc))
    p["fc_w"] = jnp.zeros((H, 128), jnp.float32).at[:, :nc].set(fcw).astype(jnp.bfloat16)
    p["fc_b"] = jnp.zeros((1, 128), jnp.float32)
    return p


def forward(params, x, cfg):
    """x: (batch, feature_dim, time_steps), PyTorch NCT layout."""
    (_c0, K0, S0), _ = cfg.conv_layers
    xt = jnp.transpose(x, (0, 2, 1))                  # (B, T, Cin)
    pat0 = im2col_btc(xt, K0, S0)                     # (B, T1, Cin*K0)
    h, _t2 = feature_extractor(pat0, params, cfg)     # (B, T2, H) bf16
    return encoder_forward(h, params, cfg)            # (B, num_classes)


if __name__ == "__main__":
    cfg = Config()
    key = jax.random.PRNGKey(0)
    pkey, xkey = jax.random.split(key)
    params = init_params(pkey, cfg)
    # inputs: (batch_size, feature_dim, time_steps), PyTorch NCT layout
    x = jax.random.normal(xkey, (cfg.batch, cfg.feature_dim, cfg.time_steps),
                          dtype=jnp.float32)

    fwd = jax.jit(lambda p, xx: forward(p, xx, cfg))
    out = jax.block_until_ready(fwd(params, x))
    assert out.shape == (cfg.batch, cfg.num_classes)
    assert bool(jnp.all(jnp.isfinite(out)))
    print("KERNEL_OK")
</pallas_src>

<mosaic_0001>
module attributes {stable_mosaic.version = 11 : i64} {
  func.func @_feature_kernel(%arg0: i32, %arg1: memref<1x24x40xf32, #tpu.memory_space<vmem>>, %arg2: memref<40x32xbf16, #tpu.memory_space<vmem>>, %arg3: memref<1x32xf32, #tpu.memory_space<vmem>>, %arg4: memref<1x32xf32, #tpu.memory_space<vmem>>, %arg5: memref<96x32xbf16, #tpu.memory_space<vmem>>, %arg6: memref<1x32xf32, #tpu.memory_space<vmem>>, %arg7: memref<1x32xf32, #tpu.memory_space<vmem>>, %arg8: memref<32x32xbf16, #tpu.memory_space<vmem>>, %arg9: memref<1x32xf32, #tpu.memory_space<vmem>>, %arg10: memref<1x11x32xbf16, #tpu.memory_space<vmem>>, %arg11: memref<24x32xf32, #tpu.memory_space<vmem>>) attributes {dimension_semantics = [#tpu.dimension_semantics<parallel>], iteration_bounds = array<i64: 2>, scalar_prefetch = 0 : i64, scratch_operands = 1 : i64, tpu.core_type = #tpu.core_type<tc>, window_params = [{transform_indices = @transform_0, window_bounds = array<i64: 1, 24, 40>}, {pipeline_mode = #tpu.pipeline_mode<synchronous>, transform_indices = @transform_1, window_bounds = array<i64: 40, 32>}, {pipeline_mode = #tpu.pipeline_mode<synchronous>, transform_indices = @transform_2, window_bounds = array<i64: 1, 32>}, {pipeline_mode = #tpu.pipeline_mode<synchronous>, transform_indices = @transform_3, window_bounds = array<i64: 1, 32>}, {pipeline_mode = #tpu.pipeline_mode<synchronous>, transform_indices = @transform_4, window_bounds = array<i64: 96, 32>}, {pipeline_mode = #tpu.pipeline_mode<synchronous>, transform_indices = @transform_5, window_bounds = array<i64: 1, 32>}, {pipeline_mode = #tpu.pipeline_mode<synchronous>, transform_indices = @transform_6, window_bounds = array<i64: 1, 32>}, {pipeline_mode = #tpu.pipeline_mode<synchronous>, transform_indices = @transform_7, window_bounds = array<i64: 32, 32>}, {pipeline_mode = #tpu.pipeline_mode<synchronous>, transform_indices = @transform_8, window_bounds = array<i64: 1, 32>}, {transform_indices = @transform_9, window_bounds = array<i64: 1, 11, 32>}]} {
    %c0 = arith.constant 0 : index
    %c0_0 = arith.constant 0 : index
    %c0_1 = arith.constant 0 : index
    %0 = vector.load %arg1[%c0, %c0_0, %c0_1] : memref<1x24x40xf32, #tpu.memory_space<vmem>>, vector<1x24x40xf32>
    %1 = vector.shape_cast %0 : vector<1x24x40xf32> to vector<24x40xf32>
    %2 = arith.truncf %1 : vector<24x40xf32> to vector<24x40xbf16>
    %c0_2 = arith.constant 0 : index
    %c0_3 = arith.constant 0 : index
    %3 = vector.load %arg2[%c0_2, %c0_3] : memref<40x32xbf16, #tpu.memory_space<vmem>>, vector<40x32xbf16>
    %cst = arith.constant dense<0.000000e+00> : vector<24x32xf32>
    %4 = tpu.matmul %2, %3, %cst {dimension_numbers = #tpu.dot_dimension_numbers<[1], [0], [0], [1], [0, 0, 1, 1], [], []>} : vector<24x40xbf16>, vector<40x32xbf16>, vector<24x32xf32> -> vector<24x32xf32>
    %cst_4 = arith.constant dense<0.000000e+00> : vector<32xf32>
    %5 = vector.multi_reduction <add>, %4, %cst_4 [0] : vector<24x32xf32> to vector<32xf32>
    %6 = vector.shape_cast %5 : vector<32xf32> to vector<1x32xf32>
    %cst_5 = arith.constant 2.400000e+01 : f32
    %7 = vector.broadcast %cst_5 : f32 to vector<1x32xf32>
    %8 = arith.divf %6, %7 : vector<1x32xf32>
    %9 = vector.broadcast %8 : vector<1x32xf32> to vector<24x32xf32>
    %10 = arith.subf %4, %9 : vector<24x32xf32>
    %11 = arith.mulf %10, %10 : vector<24x32xf32>
    %cst_6 = arith.constant dense<0.000000e+00> : vector<32xf32>
    %12 = vector.multi_reduction <add>, %11, %cst_6 [0] : vector<24x32xf32> to vector<32xf32>
    %13 = vector.shape_cast %12 : vector<32xf32> to vector<1x32xf32>
    %cst_7 = arith.constant 2.400000e+01 : f32
    %14 = vector.broadcast %cst_7 : f32 to vector<1x32xf32>
    %15 = arith.divf %13, %14 : vector<1x32xf32>
    %16 = vector.broadcast %8 : vector<1x32xf32> to vector<24x32xf32>
    %17 = arith.subf %4, %16 : vector<24x32xf32>
    %cst_8 = arith.constant 9.99999974E-6 : f32
    %18 = vector.broadcast %cst_8 : f32 to vector<1x32xf32>
    %19 = arith.addf %15, %18 : vector<1x32xf32>
    %20 = math.rsqrt %19 : vector<1x32xf32>
    %21 = vector.broadcast %20 : vector<1x32xf32> to vector<24x32xf32>
    %22 = arith.mulf %17, %21 : vector<24x32xf32>
    %c0_9 = arith.constant 0 : index
    %c0_10 = arith.constant 0 : index
    %23 = vector.load %arg3[%c0_9, %c0_10] : memref<1x32xf32, #tpu.memory_space<vmem>>, vector<1x32xf32>
    %24 = vector.broadcast %23 : vector<1x32xf32> to vector<24x32xf32>
    %25 = arith.mulf %22, %24 : vector<24x32xf32>
    %c0_11 = arith.constant 0 : index
    %c0_12 = arith.constant 0 : index
    %26 = vector.load %arg4[%c0_11, %c0_12] : memref<1x32xf32, #tpu.memory_space<vmem>>, vector<1x32xf32>
    %27 = vector.broadcast %26 : vector<1x32xf32> to vector<24x32xf32>
    %28 = arith.addf %25, %27 : vector<24x32xf32>
    %cst_13 = arith.constant 5.000000e-01 : f32
    %29 = vector.broadcast %cst_13 : f32 to vector<24x32xf32>
    %30 = arith.mulf %29, %28 : vector<24x32xf32>
    %cst_14 = arith.constant 4.471500e-02 : f32
    %31 = vector.broadcast %cst_14 : f32 to vector<24x32xf32>
    %32 = arith.mulf %31, %28 : vector<24x32xf32>
    %33 = arith.mulf %32, %28 : vector<24x32xf32>
    %34 = arith.mulf %33, %28 : vector<24x32xf32>
    %35 = arith.addf %28, %34 : vector<24x32xf32>
    %cst_15 = arith.constant 0.797884583 : f32
    %36 = vector.broadcast %cst_15 : f32 to vector<24x32xf32>
    %37 = arith.mulf %36, %35 : vector<24x32xf32>
    %38 = math.tanh %37 : vector<24x32xf32>
    %cst_16 = arith.constant 1.000000e+00 : f32
    %39 = vector.broadcast %cst_16 : f32 to vector<24x32xf32>
    %40 = arith.addf %39, %38 : vector<24x32xf32>
    %41 = arith.mulf %30, %40 : vector<24x32xf32>
    %c0_17 = arith.constant 0 : index
    %c0_18 = arith.constant 0 : index
    %42 = vector.load %arg11[%c0_17, %c0_18] : memref<24x32xf32, #tpu.memory_space<vmem>>, vector<24x32xf32>
    tpu.vector_store %arg11[%c0_17, %c0_18], %41 {strides = array<i32>} : memref<24x32xf32, #tpu.memory_space<vmem>>, vector<24x32xf32>,
    %c0_19 = arith.constant 0 : index
    %c0_20 = arith.constant 0 : index
    %43 = tpu.strided_load %arg11[%c0_19, %c0_20] {strides = array<i32: 2, 1>} : memref<24x32xf32, #tpu.memory_space<vmem>>, vector<11x32xf32>
    %c1 = arith.constant 1 : index
    %c0_21 = arith.constant 0 : index
    %44 = tpu.strided_load %arg11[%c1, %c0_21] {strides = array<i32: 2, 1>} : memref<24x32xf32, #tpu.memory_space<vmem>>, vector<11x32xf32>
    %c2 = arith.constant 2 : index
    %c0_22 = arith.constant 0 : index
    %45 = tpu.strided_load %arg11[%c2, %c0_22] {strides = array<i32: 2, 1>} : memref<24x32xf32, #tpu.memory_space<vmem>>, vector<11x32xf32>
    %46 = tpu.concatenate %43, %44, %45 in 1 : vector<11x32xf32>, vector<11x32xf32>, vector<11x32xf32> -> vector<11x96xf32>
    %47 = arith.truncf %46 : vector<11x96xf32> to vector<11x96xbf16>
    %c0_23 = arith.constant 0 : index
    %c0_24 = arith.constant 0 : index
    %48 = vector.load %arg5[%c0_23, %c0_24] : memref<96x32xbf16, #tpu.memory_space<vmem>>, vector<96x32xbf16>
    %cst_25 = arith.constant dense<0.000000e+00> : vector<11x32xf32>
    %49 = tpu.matmul %47, %48, %cst_25 {dimension_numbers = #tpu.dot_dimension_numbers<[1], [0], [0], [1], [0, 0, 1, 1], [], []>} : vector<11x96xbf16>, vector<96x32xbf16>, vector<11x32xf32> -> vector<11x32xf32>
    %cst_26 = arith.constant 5.000000e-01 : f32
    %50 = vector.broadcast %cst_26 : f32 to vector<11x32xf32>
    %51 = arith.mulf %50, %49 : vector<11x32xf32>
    %cst_27 = arith.constant 4.471500e-02 : f32
    %52 = vector.broadcast %cst_27 : f32 to vector<11x32xf32>
    %53 = arith.mulf %52, %49 : vector<11x32xf32>
    %54 = arith.mulf %53, %49 : vector<11x32xf32>
    %55 = arith.mulf %54, %49 : vector<11x32xf32>
    %56 = arith.addf %49, %55 : vector<11x32xf32>
    %cst_28 = arith.constant 0.797884583 : f32
    %57 = vector.broadcast %cst_28 : f32 to vector<11x32xf32>
    %58 = arith.mulf %57, %56 : vector<11x32xf32>
    %59 = math.tanh %58 : vector<11x32xf32>
    %cst_29 = arith.constant 1.000000e+00 : f32
    %60 = vector.broadcast %cst_29 : f32 to vector<11x32xf32>
    %61 = arith.addf %60, %59 : vector<11x32xf32>
    %62 = arith.mulf %51, %61 : vector<11x32xf32>
    %c0_30 = arith.constant 0 : index
    %c0_31 = arith.constant 0 : index
    %63 = vector.load %arg6[%c0_30, %c0_31] : memref<1x32xf32, #tpu.memory_space<vmem>>, vector<1x32xf32>
    %c0_32 = arith.constant 0 : index
    %c0_33 = arith.constant 0 : index
    %64 = vector.load %arg7[%c0_32, %c0_33] : memref<1x32xf32, #tpu.memory_space<vmem>>, vector<1x32xf32>
    %cst_34 = arith.constant dense<0.000000e+00> : vector<11xf32>
    %65 = vector.multi_reduction <add>, %62, %cst_34 [1] : vector<11x32xf32> to vector<11xf32>
    %66 = vector.shape_cast %65 : vector<11xf32> to vector<11x1xf32>
    %cst_35 = arith.constant 3.200000e+01 : f32
    %67 = vector.broadcast %cst_35 : f32 to vector<11x1xf32>
    %68 = arith.divf %66, %67 : vector<11x1xf32>
    %69 = vector.broadcast %68 : vector<11x1xf32> to vector<11x32xf32>
    %70 = arith.subf %62, %69 : vector<11x32xf32>
    %71 = arith.mulf %70, %70 : vector<11x32xf32>
    %cst_36 = arith.constant dense<0.000000e+00> : vector<11xf32>
    %72 = vector.multi_reduction <add>, %71, %cst_36 [1] : vector<11x32xf32> to vector<11xf32>
    %73 = vector.shape_cast %72 : vector<11xf32> to vector<11x1xf32>
    %cst_37 = arith.constant 3.200000e+01 : f32
    %74 = vector.broadcast %cst_37 : f32 to vector<11x1xf32>
    %75 = arith.divf %73, %74 : vector<11x1xf32>
    %76 = vector.broadcast %68 : vector<11x1xf32> to vector<11x32xf32>
    %77 = arith.subf %62, %76 : vector<11x32xf32>
    %cst_38 = arith.constant 9.99999974E-6 : f32
    %78 = vector.broadcast %cst_38 : f32 to vector<11x1xf32>
    %79 = arith.addf %75, %78 : vector<11x1xf32>
    %80 = math.rsqrt %79 : vector<11x1xf32>
    %81 = vector.broadcast %80 : vector<11x1xf32> to vector<11x32xf32>
    %82 = arith.mulf %77, %81 : vector<11x32xf32>
    %83 = vector.broadcast %63 : vector<1x32xf32> to vector<11x32xf32>
    %84 = arith.mulf %82, %83 : vector<11x32xf32>
    %85 = vector.broadcast %64 : vector<1x32xf32> to vector<11x32xf32>
    %86 = arith.addf %84, %85 : vector<11x32xf32>
    %87 = arith.truncf %86 : vector<11x32xf32> to vector<11x32xbf16>
    %c0_39 = arith.constant 0 : index
    %c0_40 = arith.constant 0 : index
    %88 = vector.load %arg8[%c0_39, %c0_40] : memref<32x32xbf16, #tpu.memory_space<vmem>>, vector<32x32xbf16>
    %cst_41 = arith.constant dense<0.000000e+00> : vector<11x32xf32>
    %89 = tpu.matmul %87, %88, %cst_41 {dimension_numbers = #tpu.dot_dimension_numbers<[1], [0], [0], [1], [0, 0, 1, 1], [], []>} : vector<11x32xbf16>, vector<32x32xbf16>, vector<11x32xf32> -> vector<11x32xf32>
    %c0_42 = arith.constant 0 : index
    %c0_43 = arith.constant 0 : index
    %90 = vector.load %arg9[%c0_42, %c0_43] : memref<1x32xf32, #tpu.memory_space<vmem>>, vector<1x32xf32>
    %91 = vector.broadcast %90 : vector<1x32xf32> to vector<11x32xf32>
    %92 = arith.addf %89, %91 : vector<11x32xf32>
    %93 = arith.truncf %92 : vector<11x32xf32> to vector<11x32xbf16>
    %c0_44 = arith.constant 0 : index
    %c0_45 = arith.constant 0 : index
    %c0_46 = arith.constant 0 : index
    %94 = vector.load %arg10[%c0_44, %c0_45, %c0_46] : memref<1x11x32xbf16, #tpu.memory_space<vmem>>, vector<1x11x32xbf16>
    %95 = vector.shape_cast %94 : vector<1x11x32xbf16> to vector<11x32xbf16>
    %96 = vector.shape_cast %93 : vector<11x32xbf16> to vector<1x11x32xbf16>
    tpu.vector_store %arg10[%c0_44, %c0_45, %c0_46], %96 {strides = array<i32>} : memref<1x11x32xbf16, #tpu.memory_space<vmem>>, vector<1x11x32xbf16>,
    return
  }
  func.func @transform_0(%arg0: i32) -> (i32, i32, i32) {
    %c0_i32 = arith.constant 0 : i32
    %c0_i32_0 = arith.constant 0 : i32
    %c0_i32_1 = arith.constant 0 : i32
    return %arg0, %c0_i32, %c0_i32_0 : i32, i32, i32
  }
  func.func @transform_1(%arg0: i32) -> (i32, i32) {
    %c0_i32 = arith.constant 0 : i32
    %c0_i32_0 = arith.constant 0 : i32
    %c0_i32_1 = arith.constant 0 : i32
    return %c0_i32, %c0_i32_0 : i32, i32
  }
  func.func @transform_2(%arg0: i32) -> (i32, i32) {
    %c0_i32 = arith.constant 0 : i32
    %c0_i32_0 = arith.constant 0 : i32
    %c0_i32_1 = arith.constant 0 : i32
    return %c0_i32, %c0_i32_0 : i32, i32
  }
  func.func @transform_3(%arg0: i32) -> (i32, i32) {
    %c0_i32 = arith.constant 0 : i32
    %c0_i32_0 = arith.constant 0 : i32
    %c0_i32_1 = arith.constant 0 : i32
    return %c0_i32, %c0_i32_0 : i32, i32
  }
  func.func @transform_4(%arg0: i32) -> (i32, i32) {
    %c0_i32 = arith.constant 0 : i32
    %c0_i32_0 = arith.constant 0 : i32
    %c0_i32_1 = arith.constant 0 : i32
    return %c0_i32, %c0_i32_0 : i32, i32
  }
  func.func @transform_5(%arg0: i32) -> (i32, i32) {
    %c0_i32 = arith.constant 0 : i32
    %c0_i32_0 = arith.constant 0 : i32
    %c0_i32_1 = arith.constant 0 : i32
    return %c0_i32, %c0_i32_0 : i32, i32
  }
  func.func @transform_6(%arg0: i32) -> (i32, i32) {
    %c0_i32 = arith.constant 0 : i32
    %c0_i32_0 = arith.constant 0 : i32
    %c0_i32_1 = arith.constant 0 : i32
    return %c0_i32, %c0_i32_0 : i32, i32
  }
  func.func @transform_7(%arg0: i32) -> (i32, i32) {
    %c0_i32 = arith.constant 0 : i32
    %c0_i32_0 = arith.constant 0 : i32
    %c0_i32_1 = arith.constant 0 : i32
    return %c0_i32, %c0_i32_0 : i32, i32
  }
  func.func @transform_8(%arg0: i32) -> (i32, i32) {
    %c0_i32 = arith.constant 0 : i32
    %c0_i32_0 = arith.constant 0 : i32
    %c0_i32_1 = arith.constant 0 : i32
    return %c0_i32, %c0_i32_0 : i32, i32
  }
  func.func @transform_9(%arg0: i32) -> (i32, i32, i32) {
    %c0_i32 = arith.constant 0 : i32
    %c0_i32_0 = arith.constant 0 : i32
    %c0_i32_1 = arith.constant 0 : i32
    return %arg0, %c0_i32, %c0_i32_0 : i32, i32, i32
  }
}

module attributes {stable_mosaic.version = 11 : i64} {
  func.func @_encoder_kernel(%arg0: i32, %arg1: memref<1x11x32xbf16, #tpu.memory_space<vmem>>, %arg2: memref<96x32xbf16, #tpu.memory_space<vmem>>, %arg3: memref<1x32xf32, #tpu.memory_space<vmem>>, %arg4: memref<1x32xf32, #tpu.memory_space<vmem>>, %arg5: memref<1x32xf32, #tpu.memory_space<vmem>>, %arg6: memref<2x32x96xbf16, #tpu.memory_space<vmem>>, %arg7: memref<2x1x96xf32, #tpu.memory_space<vmem>>, %arg8: memref<2x32x32xbf16, #tpu.memory_space<vmem>>, %arg9: memref<2x1x32xf32, #tpu.memory_space<vmem>>, %arg10: memref<2x1x32xf32, #tpu.memory_space<vmem>>, %arg11: memref<2x1x32xf32, #tpu.memory_space<vmem>>, %arg12: memref<2x32x64xbf16, #tpu.memory_space<vmem>>, %arg13: memref<2x1x64xf32, #tpu.memory_space<vmem>>, %arg14: memref<2x64x32xbf16, #tpu.memory_space<vmem>>, %arg15: memref<2x1x32xf32, #tpu.memory_space<vmem>>, %arg16: memref<2x1x32xf32, #tpu.memory_space<vmem>>, %arg17: memref<2x1x32xf32, #tpu.memory_space<vmem>>, %arg18: memref<32x128xbf16, #tpu.memory_space<vmem>>, %arg19: memref<1x128xf32, #tpu.memory_space<vmem>>, %arg20: memref<1x1x128xf32, #tpu.memory_space<vmem>>) attributes {dimension_semantics = [#tpu.dimension_semantics<parallel>], iteration_bounds = array<i64: 2>, scalar_prefetch = 0 : i64, scratch_operands = 0 : i64, tpu.core_type = #tpu.core_type<tc>, window_params = [{transform_indices = @transform_0, window_bounds = array<i64: 1, 11, 32>}, {pipeline_mode = #tpu.pipeline_mode<synchronous>, transform_indices = @transform_1, window_bounds = array<i64: 96, 32>}, {pipeline_mode = #tpu.pipeline_mode<synchronous>, transform_indices = @transform_2, window_bounds = array<i64: 1, 32>}, {pipeline_mode = #tpu.pipeline_mode<synchronous>, transform_indices = @transform_3, window_bounds = array<i64: 1, 32>}, {pipeline_mode = #tpu.pipeline_mode<synchronous>, transform_indices = @transform_4, window_bounds = array<i64: 1, 32>}, {pipeline_mode = #tpu.pipeline_mode<synchronous>, transform_indices = @transform_5, window_bounds = array<i64: 2, 32, 96>}, {pipeline_mode = #tpu.pipeline_mode<synchronous>, transform_indices = @transform_6, window_bounds = array<i64: 2, 1, 96>}, {pipeline_mode = #tpu.pipeline_mode<synchronous>, transform_indices = @transform_7, window_bounds = array<i64: 2, 32, 32>}, {pipeline_mode = #tpu.pipeline_mode<synchronous>, transform_indices = @transform_8, window_bounds = array<i64: 2, 1, 32>}, {pipeline_mode = #tpu.pipeline_mode<synchronous>, transform_indices = @transform_9, window_bounds = array<i64: 2, 1, 32>}, {pipeline_mode = #tpu.pipeline_mode<synchronous>, transform_indices = @transform_10, window_bounds = array<i64: 2, 1, 32>}, {pipeline_mode = #tpu.pipeline_mode<synchronous>, transform_indices = @transform_11, window_bounds = array<i64: 2, 32, 64>}, {pipeline_mode = #tpu.pipeline_mode<synchronous>, transform_indices = @transform_12, window_bounds = array<i64: 2, 1, 64>}, {pipeline_mode = #tpu.pipeline_mode<synchronous>, transform_indices = @transform_13, window_bounds = array<i64: 2, 64, 32>}, {pipeline_mode = #tpu.pipeline_mode<synchronous>, transform_indices = @transform_14, window_bounds = array<i64: 2, 1, 32>}, {pipeline_mode = #tpu.pipeline_mode<synchronous>, transform_indices = @transform_15, window_bounds = array<i64: 2, 1, 32>}, {pipeline_mode = #tpu.pipeline_mode<synchronous>, transform_indices = @transform_16, window_bounds = array<i64: 2, 1, 32>}, {pipeline_mode = #tpu.pipeline_mode<synchronous>, transform_indices = @transform_17, window_bounds = array<i64: 32, 128>}, {pipeline_mode = #tpu.pipeline_mode<synchronous>, transform_indices = @transform_18, window_bounds = array<i64: 1, 128>}, {transform_indices = @transform_19, window_bounds = array<i64: 1, 1, 128>}]} {
    %c0 = arith.constant 0 : index
    %c0_0 = arith.constant 0 : index
    %c0_1 = arith.constant 0 : index
    %0 = vector.load %arg1[%c0, %c0_0, %c0_1] : memref<1x11x32xbf16, #tpu.memory_space<vmem>>, vector<1x11x32xbf16>
    %1 = vector.shape_cast %0 : vector<1x11x32xbf16> to vector<11x32xbf16>
    %2 = arith.extf %1 : vector<11x32xbf16> to vector<11x32xf32>
    %cst = arith.constant 0.000000e+00 : f32
    %3 = vector.broadcast %cst : f32 to vector<1x32xf32>
    %4 = vector.extract_strided_slice %2 {offsets = [0, 0], sizes = [10, 32], strides = [1, 1]} : vector<11x32xf32> to vector<10x32xf32>
    %5 = tpu.concatenate %3, %4 in 0 : vector<1x32xf32>, vector<10x32xf32> -> vector<11x32xf32>
    %6 = vector.extract_strided_slice %2 {offsets = [1, 0], sizes = [10, 32], strides = [1, 1]} : vector<11x32xf32> to vector<10x32xf32>
    %7 = tpu.concatenate %6, %3 in 0 : vector<10x32xf32>, vector<1x32xf32> -> vector<11x32xf32>
    %8 = tpu.concatenate %5, %2, %7 in 1 : vector<11x32xf32>, vector<11x32xf32>, vector<11x32xf32> -> vector<11x96xf32>
    %9 = arith.truncf %8 : vector<11x96xf32> to vector<11x96xbf16>
    %c0_2 = arith.constant 0 : index
    %c0_3 = arith.constant 0 : index
    %10 = vector.load %arg2[%c0_2, %c0_3] : memref<96x32xbf16, #tpu.memory_space<vmem>>, vector<96x32xbf16>
    %cst_4 = arith.constant dense<0.000000e+00> : vector<11x32xf32>
    %11 = tpu.matmul %9, %10, %cst_4 {dimension_numbers = #tpu.dot_dimension_numbers<[1], [0], [0], [1], [0, 0, 1, 1], [], []>} : vector<11x96xbf16>, vector<96x32xbf16>, vector<11x32xf32> -> vector<11x32xf32>
    %c0_5 = arith.constant 0 : index
    %c0_6 = arith.constant 0 : index
    %12 = vector.load %arg3[%c0_5, %c0_6] : memref<1x32xf32, #tpu.memory_space<vmem>>, vector<1x32xf32>
    %13 = vector.broadcast %12 : vector<1x32xf32> to vector<11x32xf32>
    %14 = arith.addf %11, %13 : vector<11x32xf32>
    %cst_7 = arith.constant 5.000000e-01 : f32
    %15 = vector.broadcast %cst_7 : f32 to vector<11x32xf32>
    %16 = arith.mulf %15, %14 : vector<11x32xf32>
    %cst_8 = arith.constant 4.471500e-02 : f32
    %17 = vector.broadcast %cst_8 : f32 to vector<11x32xf32>
    %18 = arith.mulf %17, %14 : vector<11x32xf32>
    %19 = arith.mulf %18, %14 : vector<11x32xf32>
    %20 = arith.mulf %19, %14 : vector<11x32xf32>
    %21 = arith.addf %14, %20 : vector<11x32xf32>
    %cst_9 = arith.constant 0.797884583 : f32
    %22 = vector.broadcast %cst_9 : f32 to vector<11x32xf32>
    %23 = arith.mulf %22, %21 : vector<11x32xf32>
    %24 = math.tanh %23 : vector<11x32xf32>
    %cst_10 = arith.constant 1.000000e+00 : f32
    %25 = vector.broadcast %cst_10 : f32 to vector<11x32xf32>
    %26 = arith.addf %25, %24 : vector<11x32xf32>
    %27 = arith.mulf %16, %26 : vector<11x32xf32>
    %28 = arith.addf %2, %27 : vector<11x32xf32>
    %c0_11 = arith.constant 0 : index
    %c0_12 = arith.constant 0 : index
    %29 = vector.load %arg4[%c0_11, %c0_12] : memref<1x32xf32, #tpu.memory_space<vmem>>, vector<1x32xf32>
    %c0_13 = arith.constant 0 : index
    %c0_14 = arith.constant 0 : index
    %30 = vector.load %arg5[%c0_13, %c0_14] : memref<1x32xf32, #tpu.memory_space<vmem>>, vector<1x32xf32>
    %cst_15 = arith.constant dense<0.000000e+00> : vector<11xf32>
    %31 = vector.multi_reduction <add>, %28, %cst_15 [1] : vector<11x32xf32> to vector<11xf32>
    %32 = vector.shape_cast %31 : vector<11xf32> to vector<11x1xf32>
    %cst_16 = arith.constant 3.200000e+01 : f32
    %33 = vector.broadcast %cst_16 : f32 to vector<11x1xf32>
    %34 = arith.divf %32, %33 : vector<11x1xf32>
    %35 = vector.broadcast %34 : vector<11x1xf32> to vector<11x32xf32>
    %36 = arith.subf %28, %35 : vector<11x32xf32>
    %37 = arith.mulf %36, %36 : vector<11x32xf32>
    %cst_17 = arith.constant dense<0.000000e+00> : vector<11xf32>
    %38 = vector.multi_reduction <add>, %37, %cst_17 [1] : vector<11x32xf32> to vector<11xf32>
    %39 = vector.shape_cast %38 : vector<11xf32> to vector<11x1xf32>
    %cst_18 = arith.constant 3.200000e+01 : f32
    %40 = vector.broadcast %cst_18 : f32 to vector<11x1xf32>
    %41 = arith.divf %39, %40 : vector<11x1xf32>
    %42 = vector.broadcast %34 : vector<11x1xf32> to vector<11x32xf32>
    %43 = arith.subf %28, %42 : vector<11x32xf32>
    %cst_19 = arith.constant 9.99999974E-6 : f32
    %44 = vector.broadcast %cst_19 : f32 to vector<11x1xf32>
    %45 = arith.addf %41, %44 : vector<11x1xf32>
    %46 = math.rsqrt %45 : vector<11x1xf32>
    %47 = vector.broadcast %46 : vector<11x1xf32> to vector<11x32xf32>
    %48 = arith.mulf %43, %47 : vector<11x32xf32>
    %49 = vector.broadcast %29 : vector<1x32xf32> to vector<11x32xf32>
    %50 = arith.mulf %48, %49 : vector<11x32xf32>
    %51 = vector.broadcast %30 : vector<1x32xf32> to vector<11x32xf32>
    %52 = arith.addf %50, %51 : vector<11x32xf32>
    %53 = arith.truncf %52 : vector<11x32xf32> to vector<11x32xbf16>
    %c0_20 = arith.constant 0 : index
    %c0_21 = arith.constant 0 : index
    %c0_22 = arith.constant 0 : index
    %54 = vector.load %arg6[%c0_20, %c0_21, %c0_22] : memref<2x32x96xbf16, #tpu.memory_space<vmem>>, vector<1x32x96xbf16>
    %55 = vector.shape_cast %54 : vector<1x32x96xbf16> to vector<32x96xbf16>
    %cst_23 = arith.constant dense<0.000000e+00> : vector<11x96xf32>
    %56 = tpu.matmul %53, %55, %cst_23 {dimension_numbers = #tpu.dot_dimension_numbers<[1], [0], [0], [1], [0, 0, 1, 1], [], []>} : vector<11x32xbf16>, vector<32x96xbf16>, vector<11x96xf32> -> vector<11x96xf32>
    %c0_24 = arith.constant 0 : index
    %c0_25 = arith.constant 0 : index
    %c0_26 = arith.constant 0 : index
    %57 = vector.load %arg7[%c0_24, %c0_25, %c0_26] : memref<2x1x96xf32, #tpu.memory_space<vmem>>, vector<1x1x96xf32>
    %58 = vector.shape_cast %57 : vector<1x1x96xf32> to vector<1x96xf32>
    %59 = vector.broadcast %58 : vector<1x96xf32> to vector<11x96xf32>
    %60 = arith.addf %56, %59 : vector<11x96xf32>
    %61 = arith.truncf %60 : vector<11x96xf32> to vector<11x96xbf16>
    %62 = vector.extract_strided_slice %61 {offsets = [0, 0], sizes = [11, 8], strides = [1, 1]} : vector<11x96xbf16> to vector<11x8xbf16>
    %63 = vector.extract_strided_slice %61 {offsets = [0, 8], sizes = [11, 8], strides = [1, 1]} : vector<11x96xbf16> to vector<11x8xbf16>
    %64 = vector.extract_strided_slice %61 {offsets = [0, 16], sizes = [11, 8], strides = [1, 1]} : vector<11x96xbf16> to vector<11x8xbf16>
    %65 = vector.extract_strided_slice %61 {offsets = [0, 24], sizes = [11, 8], strides = [1, 1]} : vector<11x96xbf16> to vector<11x8xbf16>
    %66 = vector.shape_cast %62 : vector<11x8xbf16> to vector<1x11x8xbf16>
    %67 = vector.shape_cast %63 : vector<11x8xbf16> to vector<1x11x8xbf16>
    %68 = vector.shape_cast %64 : vector<11x8xbf16> to vector<1x11x8xbf16>
    %69 = vector.shape_cast %65 : vector<11x8xbf16> to vector<1x11x8xbf16>
    %70 = tpu.concatenate %66, %67, %68, %69 in 0 : vector<1x11x8xbf16>, vector<1x11x8xbf16>, vector<1x11x8xbf16>, vector<1x11x8xbf16> -> vector<4x11x8xbf16>
    %71 = vector.extract_strided_slice %61 {offsets = [0, 32], sizes = [11, 8], strides = [1, 1]} : vector<11x96xbf16> to vector<11x8xbf16>
    %72 = vector.extract_strided_slice %61 {offsets = [0, 40], sizes = [11, 8], strides = [1, 1]} : vector<11x96xbf16> to vector<11x8xbf16>
    %73 = vector.extract_strided_slice %61 {offsets = [0, 48], sizes = [11, 8], strides = [1, 1]} : vector<11x96xbf16> to vector<11x8xbf16>
    %74 = vector.extract_strided_slice %61 {offsets = [0, 56], sizes = [11, 8], strides = [1, 1]} : vector<11x96xbf16> to vector<11x8xbf16>
    %75 = vector.shape_cast %71 : vector<11x8xbf16> to vector<1x11x8xbf16>
    %76 = vector.shape_cast %72 : vector<11x8xbf16> to vector<1x11x8xbf16>
    %77 = vector.shape_cast %73 : vector<11x8xbf16> to vector<1x11x8xbf16>
    %78 = vector.shape_cast %74 : vector<11x8xbf16> to vector<1x11x8xbf16>
    %79 = tpu.concatenate %75, %76, %77, %78 in 0 : vector<1x11x8xbf16>, vector<1x11x8xbf16>, vector<1x11x8xbf16>, vector<1x11x8xbf16> -> vector<4x11x8xbf16>
    %80 = vector.extract_strided_slice %61 {offsets = [0, 64], sizes = [11, 8], strides = [1, 1]} : vector<11x96xbf16> to vector<11x8xbf16>
    %81 = vector.extract_strided_slice %61 {offsets = [0, 72], sizes = [11, 8], strides = [1, 1]} : vector<11x96xbf16> to vector<11x8xbf16>
    %82 = vector.extract_strided_slice %61 {offsets = [0, 80], sizes = [11, 8], strides = [1, 1]} : vector<11x96xbf16> to vector<11x8xbf16>
    %83 = vector.extract_strided_slice %61 {offsets = [0, 88], sizes = [11, 8], strides = [1, 1]} : vector<11x96xbf16> to vector<11x8xbf16>
    %84 = vector.shape_cast %80 : vector<11x8xbf16> to vector<1x11x8xbf16>
    %85 = vector.shape_cast %81 : vector<11x8xbf16> to vector<1x11x8xbf16>
    %86 = vector.shape_cast %82 : vector<11x8xbf16> to vector<1x11x8xbf16>
    %87 = vector.shape_cast %83 : vector<11x8xbf16> to vector<1x11x8xbf16>
    %88 = tpu.concatenate %84, %85, %86, %87 in 0 : vector<1x11x8xbf16>, vector<1x11x8xbf16>, vector<1x11x8xbf16>, vector<1x11x8xbf16> -> vector<4x11x8xbf16>
    %cst_27 = arith.constant dense<0.000000e+00> : vector<4x11x11xf32>
    %89 = tpu.matmul %70, %79, %cst_27 {dimension_numbers = #tpu.dot_dimension_numbers<[2], [2], [1], [1], [0, 0, 0, 1, 1, 1], [0], [0]>} : vector<4x11x8xbf16>, vector<4x11x8xbf16>, vector<4x11x11xf32> -> vector<4x11x11xf32>
    %cst_28 = arith.constant 0.353553385 : f32
    %90 = vector.broadcast %cst_28 : f32 to vector<4x11x11xf32>
    %91 = arith.mulf %89, %90 : vector<4x11x11xf32>
    %cst_29 = arith.constant dense<0xFF800000> : vector<4x11xf32>
    %92 = vector.multi_reduction <maximumf>, %91, %cst_29 [2] : vector<4x11x11xf32> to vector<4x11xf32>
    %93 = vector.shape_cast %92 : vector<4x11xf32> to vector<4x11x1xf32>
    %94 = vector.broadcast %93 : vector<4x11x1xf32> to vector<4x11x11xf32>
    %95 = arith.subf %91, %94 : vector<4x11x11xf32>
    %96 = math.exp %95 : vector<4x11x11xf32>
    %cst_30 = arith.constant dense<0.000000e+00> : vector<4x11xf32>
    %97 = vector.multi_reduction <add>, %96, %cst_30 [2] : vector<4x11x11xf32> to vector<4x11xf32>
    %98 = vector.shape_cast %97 : vector<4x11xf32> to vector<4x11x1xf32>
    %99 = tpu.reciprocal %98 {approx = true} : vector<4x11x1xf32> -> vector<4x11x1xf32>
    %100 = vector.broadcast %99 : vector<4x11x1xf32> to vector<4x11x11xf32>
    %101 = arith.mulf %96, %100 : vector<4x11x11xf32>
    %102 = arith.truncf %101 : vector<4x11x11xf32> to vector<4x11x11xbf16>
    %cst_31 = arith.constant dense<0.000000e+00> : vector<4x11x8xf32>
    %103 = tpu.matmul %102, %88, %cst_31 {dimension_numbers = #tpu.dot_dimension_numbers<[2], [1], [1], [2], [0, 0, 0, 1, 1, 2], [0], [0]>} : vector<4x11x11xbf16>, vector<4x11x8xbf16>, vector<4x11x8xf32> -> vector<4x11x8xf32>
    %104 = vector.extract_strided_slice %103 {offsets = [0, 0, 0], sizes = [1, 11, 8], strides = [1, 1, 1]} : vector<4x11x8xf32> to vector<1x11x8xf32>
    %105 = vector.shape_cast %104 : vector<1x11x8xf32> to vector<11x8xf32>
    %106 = vector.extract_strided_slice %103 {offsets = [1, 0, 0], sizes = [1, 11, 8], strides = [1, 1, 1]} : vector<4x11x8xf32> to vector<1x11x8xf32>
    %107 = vector.shape_cast %106 : vector<1x11x8xf32> to vector<11x8xf32>
    %108 = vector.extract_strided_slice %103 {offsets = [2, 0, 0], sizes = [1, 11, 8], strides = [1, 1, 1]} : vector<4x11x8xf32> to vector<1x11x8xf32>
    %109 = vector.shape_cast %108 : vector<1x11x8xf32> to vector<11x8xf32>
    %110 = vector.extract_strided_slice %103 {offsets = [3, 0, 0], sizes = [1, 11, 8], strides = [1, 1, 1]} : vector<4x11x8xf32> to vector<1x11x8xf32>
    %111 = vector.shape_cast %110 : vector<1x11x8xf32> to vector<11x8xf32>
    %112 = tpu.concatenate %105, %107, %109, %111 in 1 : vector<11x8xf32>, vector<11x8xf32>, vector<11x8xf32>, vector<11x8xf32> -> vector<11x32xf32>
    %113 = arith.truncf %112 : vector<11x32xf32> to vector<11x32xbf16>
    %c0_32 = arith.constant 0 : index
    %c0_33 = arith.constant 0 : index
    %c0_34 = arith.constant 0 : index
    %114 = vector.load %arg8[%c0_32, %c0_33, %c0_34] : memref<2x32x32xbf16, #tpu.memory_space<vmem>>, vector<1x32x32xbf16>
    %115 = vector.shape_cast %114 : vector<1x32x32xbf16> to vector<32x32xbf16>
    %cst_35 = arith.constant dense<0.000000e+00> : vector<11x32xf32>
    %116 = tpu.matmul %113, %115, %cst_35 {dimension_numbers = #tpu.dot_dimension_numbers<[1], [0], [0], [1], [0, 0, 1, 1], [], []>} : vector<11x32xbf16>, vector<32x32xbf16>, vector<11x32xf32> -> vector<11x32xf32>
    %c0_36 = arith.constant 0 : index
    %c0_37 = arith.constant 0 : index
    %c0_38 = arith.constant 0 : index
    %117 = vector.load %arg9[%c0_36, %c0_37, %c0_38] : memref<2x1x32xf32, #tpu.memory_space<vmem>>, vector<1x1x32xf32>
    %118 = vector.shape_cast %117 : vector<1x1x32xf32> to vector<1x32xf32>
    %119 = vector.broadcast %118 : vector<1x32xf32> to vector<11x32xf32>
    %120 = arith.addf %116, %119 : vector<11x32xf32>
    %121 = arith.addf %52, %120 : vector<11x32xf32>
    %c0_39 = arith.constant 0 : index
    %c0_40 = arith.constant 0 : index
    %c0_41 = arith.constant 0 : index
    %122 = vector.load %arg10[%c0_39, %c0_40, %c0_41] : memref<2x1x32xf32, #tpu.memory_space<vmem>>, vector<1x1x32xf32>
    %123 = vector.shape_cast %122 : vector<1x1x32xf32> to vector<1x32xf32>
    %c0_42 = arith.constant 0 : index
    %c0_43 = arith.constant 0 : index
    %c0_44 = arith.constant 0 : index
    %124 = vector.load %arg11[%c0_42, %c0_43, %c0_44] : memref<2x1x32xf32, #tpu.memory_space<vmem>>, vector<1x1x32xf32>
    %125 = vector.shape_cast %124 : vector<1x1x32xf32> to vector<1x32xf32>
    %cst_45 = arith.constant dense<0.000000e+00> : vector<11xf32>
    %126 = vector.multi_reduction <add>, %121, %cst_45 [1] : vector<11x32xf32> to vector<11xf32>
    %127 = vector.shape_cast %126 : vector<11xf32> to vector<11x1xf32>
    %cst_46 = arith.constant 3.200000e+01 : f32
    %128 = vector.broadcast %cst_46 : f32 to vector<11x1xf32>
    %129 = arith.divf %127, %128 : vector<11x1xf32>
    %130 = vector.broadcast %129 : vector<11x1xf32> to vector<11x32xf32>
    %131 = arith.subf %121, %130 : vector<11x32xf32>
    %132 = arith.mulf %131, %131 : vector<11x32xf32>
    %cst_47 = arith.constant dense<0.000000e+00> : vector<11xf32>
    %133 = vector.multi_reduction <add>, %132, %cst_47 [1] : vector<11x32xf32> to vector<11xf32>
    %134 = vector.shape_cast %133 : vector<11xf32> to vector<11x1xf32>
    %cst_48 = arith.constant 3.200000e+01 : f32
    %135 = vector.broadcast %cst_48 : f32 to vector<11x1xf32>
    %136 = arith.divf %134, %135 : vector<11x1xf32>
    %137 = vector.broadcast %129 : vector<11x1xf32> to vector<11x32xf32>
    %138 = arith.subf %121, %137 : vector<11x32xf32>
    %cst_49 = arith.constant 9.99999974E-6 : f32
    %139 = vector.broadcast %cst_49 : f32 to vector<11x1xf32>
    %140 = arith.addf %136, %139 : vector<11x1xf32>
    %141 = math.rsqrt %140 : vector<11x1xf32>
    %142 = vector.broadcast %141 : vector<11x1xf32> to vector<11x32xf32>
    %143 = arith.mulf %138, %142 : vector<11x32xf32>
    %144 = vector.broadcast %123 : vector<1x32xf32> to vector<11x32xf32>
    %145 = arith.mulf %143, %144 : vector<11x32xf32>
    %146 = vector.broadcast %125 : vector<1x32xf32> to vector<11x32xf32>
    %147 = arith.addf %145, %146 : vector<11x32xf32>
    %148 = arith.truncf %147 : vector<11x32xf32> to vector<11x32xbf16>
    %c0_50 = arith.constant 0 : index
    %c0_51 = arith.constant 0 : index
    %c0_52 = arith.constant 0 : index
    %149 = vector.load %arg12[%c0_50, %c0_51, %c0_52] : memref<2x32x64xbf16, #tpu.memory_space<vmem>>, vector<1x32x64xbf16>
    %150 = vector.shape_cast %149 : vector<1x32x64xbf16> to vector<32x64xbf16>
    %cst_53 = arith.constant dense<0.000000e+00> : vector<11x64xf32>
    %151 = tpu.matmul %148, %150, %cst_53 {dimension_numbers = #tpu.dot_dimension_numbers<[1], [0], [0], [1], [0, 0, 1, 1], [], []>} : vector<11x32xbf16>, vector<32x64xbf16>, vector<11x64xf32> -> vector<11x64xf32>
    %c0_54 = arith.constant 0 : index
    %c0_55 = arith.constant 0 : index
    %c0_56 = arith.constant 0 : index
    %152 = vector.load %arg13[%c0_54, %c0_55, %c0_56] : memref<2x1x64xf32, #tpu.memory_space<vmem>>, vector<1x1x64xf32>
    %153 = vector.shape_cast %152 : vector<1x1x64xf32> to vector<1x64xf32>
    %154 = vector.broadcast %153 : vector<1x64xf32> to vector<11x64xf32>
    %155 = arith.addf %151, %154 : vector<11x64xf32>
    %cst_57 = arith.constant 5.000000e-01 : f32
    %156 = vector.broadcast %cst_57 : f32 to vector<11x64xf32>
    %157 = arith.mulf %156, %155 : vector<11x64xf32>
    %cst_58 = arith.constant 4.471500e-02 : f32
    %158 = vector.broadcast %cst_58 : f32 to vector<11x64xf32>
    %159 = arith.mulf %158, %155 : vector<11x64xf32>
    %160 = arith.mulf %159, %155 : vector<11x64xf32>
    %161 = arith.mulf %160, %155 : vector<11x64xf32>
    %162 = arith.addf %155, %161 : vector<11x64xf32>
    %cst_59 = arith.constant 0.797884583 : f32
    %163 = vector.broadcast %cst_59 : f32 to vector<11x64xf32>
    %164 = arith.mulf %163, %162 : vector<11x64xf32>
    %165 = math.tanh %164 : vector<11x64xf32>
    %cst_60 = arith.constant 1.000000e+00 : f32
    %166 = vector.broadcast %cst_60 : f32 to vector<11x64xf32>
    %167 = arith.addf %166, %165 : vector<11x64xf32>
    %168 = arith.mulf %157, %167 : vector<11x64xf32>
    %169 = arith.truncf %168 : vector<11x64xf32> to vector<11x64xbf16>
    %c0_61 = arith.constant 0 : index
    %c0_62 = arith.constant 0 : index
    %c0_63 = arith.constant 0 : index
    %170 = vector.load %arg14[%c0_61, %c0_62, %c0_63] : memref<2x64x32xbf16, #tpu.memory_space<vmem>>, vector<1x64x32xbf16>
    %171 = vector.shape_cast %170 : vector<1x64x32xbf16> to vector<64x32xbf16>
    %cst_64 = arith.constant dense<0.000000e+00> : vector<11x32xf32>
    %172 = tpu.matmul %169, %171, %cst_64 {dimension_numbers = #tpu.dot_dimension_numbers<[1], [0], [0], [1], [0, 0, 1, 1], [], []>} : vector<11x64xbf16>, vector<64x32xbf16>, vector<11x32xf32> -> vector<11x32xf32>
    %c0_65 = arith.constant 0 : index
    %c0_66 = arith.constant 0 : index
    %c0_67 = arith.constant 0 : index
    %173 = vector.load %arg15[%c0_65, %c0_66, %c0_67] : memref<2x1x32xf32, #tpu.memory_space<vmem>>, vector<1x1x32xf32>
    %174 = vector.shape_cast %173 : vector<1x1x32xf32> to vector<1x32xf32>
    %175 = vector.broadcast %174 : vector<1x32xf32> to vector<11x32xf32>
    %176 = arith.addf %172, %175 : vector<11x32xf32>
    %177 = arith.addf %147, %176 : vector<11x32xf32>
    %c0_68 = arith.constant 0 : index
    %c0_69 = arith.constant 0 : index
    %c0_70 = arith.constant 0 : index
    %178 = vector.load %arg16[%c0_68, %c0_69, %c0_70] : memref<2x1x32xf32, #tpu.memory_space<vmem>>, vector<1x1x32xf32>
    %179 = vector.shape_cast %178 : vector<1x1x32xf32> to vector<1x32xf32>
    %c0_71 = arith.constant 0 : index
    %c0_72 = arith.constant 0 : index
    %c0_73 = arith.constant 0 : index
    %180 = vector.load %arg17[%c0_71, %c0_72, %c0_73] : memref<2x1x32xf32, #tpu.memory_space<vmem>>, vector<1x1x32xf32>
    %181 = vector.shape_cast %180 : vector<1x1x32xf32> to vector<1x32xf32>
    %cst_74 = arith.constant dense<0.000000e+00> : vector<11xf32>
    %182 = vector.multi_reduction <add>, %177, %cst_74 [1] : vector<11x32xf32> to vector<11xf32>
    %183 = vector.shape_cast %182 : vector<11xf32> to vector<11x1xf32>
    %cst_75 = arith.constant 3.200000e+01 : f32
    %184 = vector.broadcast %cst_75 : f32 to vector<11x1xf32>
    %185 = arith.divf %183, %184 : vector<11x1xf32>
    %186 = vector.broadcast %185 : vector<11x1xf32> to vector<11x32xf32>
    %187 = arith.subf %177, %186 : vector<11x32xf32>
    %188 = arith.mulf %187, %187 : vector<11x32xf32>
    %cst_76 = arith.constant dense<0.000000e+00> : vector<11xf32>
    %189 = vector.multi_reduction <add>, %188, %cst_76 [1] : vector<11x32xf32> to vector<11xf32>
    %190 = vector.shape_cast %189 : vector<11xf32> to vector<11x1xf32>
    %cst_77 = arith.constant 3.200000e+01 : f32
    %191 = vector.broadcast %cst_77 : f32 to vector<11x1xf32>
    %192 = arith.divf %190, %191 : vector<11x1xf32>
    %193 = vector.broadcast %185 : vector<11x1xf32> to vector<11x32xf32>
    %194 = arith.subf %177, %193 : vector<11x32xf32>
    %cst_78 = arith.constant 9.99999974E-6 : f32
    %195 = vector.broadcast %cst_78 : f32 to vector<11x1xf32>
    %196 = arith.addf %192, %195 : vector<11x1xf32>
    %197 = math.rsqrt %196 : vector<11x1xf32>
    %198 = vector.broadcast %197 : vector<11x1xf32> to vector<11x32xf32>
    %199 = arith.mulf %194, %198 : vector<11x32xf32>
    %200 = vector.broadcast %179 : vector<1x32xf32> to vector<11x32xf32>
    %201 = arith.mulf %199, %200 : vector<11x32xf32>
    %202 = vector.broadcast %181 : vector<1x32xf32> to vector<11x32xf32>
    %203 = arith.addf %201, %202 : vector<11x32xf32>
    %204 = arith.truncf %203 : vector<11x32xf32> to vector<11x32xbf16>
    %c1 = arith.constant 1 : index
    %c0_79 = arith.constant 0 : index
    %c0_80 = arith.constant 0 : index
    %205 = vector.load %arg6[%c1, %c0_79, %c0_80] : memref<2x32x96xbf16, #tpu.memory_space<vmem>>, vector<1x32x96xbf16>
    %206 = vector.shape_cast %205 : vector<1x32x96xbf16> to vector<32x96xbf16>
    %cst_81 = arith.constant dense<0.000000e+00> : vector<11x96xf32>
    %207 = tpu.matmul %204, %206, %cst_81 {dimension_numbers = #tpu.dot_dimension_numbers<[1], [0], [0], [1], [0, 0, 1, 1], [], []>} : vector<11x32xbf16>, vector<32x96xbf16>, vector<11x96xf32> -> vector<11x96xf32>
    %c1_82 = arith.constant 1 : index
    %c0_83 = arith.constant 0 : index
    %c0_84 = arith.constant 0 : index
    %208 = vector.load %arg7[%c1_82, %c0_83, %c0_84] : memref<2x1x96xf32, #tpu.memory_space<vmem>>, vector<1x1x96xf32>
    %209 = vector.shape_cast %208 : vector<1x1x96xf32> to vector<1x96xf32>
    %210 = vector.broadcast %209 : vector<1x96xf32> to vector<11x96xf32>
    %211 = arith.addf %207, %210 : vector<11x96xf32>
    %212 = arith.truncf %211 : vector<11x96xf32> to vector<11x96xbf16>
    %213 = vector.extract_strided_slice %212 {offsets = [0, 0], sizes = [11, 8], strides = [1, 1]} : vector<11x96xbf16> to vector<11x8xbf16>
    %214 = vector.extract_strided_slice %212 {offsets = [0, 8], sizes = [11, 8], strides = [1, 1]} : vector<11x96xbf16> to vector<11x8xbf16>
    %215 = vector.extract_strided_slice %212 {offsets = [0, 16], sizes = [11, 8], strides = [1, 1]} : vector<11x96xbf16> to vector<11x8xbf16>
    %216 = vector.extract_strided_slice %212 {offsets = [0, 24], sizes = [11, 8], strides = [1, 1]} : vector<11x96xbf16> to vector<11x8xbf16>
    %217 = vector.shape_cast %213 : vector<11x8xbf16> to vector<1x11x8xbf16>
    %218 = vector.shape_cast %214 : vector<11x8xbf16> to vector<1x11x8xbf16>
    %219 = vector.shape_cast %215 : vector<11x8xbf16> to vector<1x11x8xbf16>
    %220 = vector.shape_cast %216 : vector<11x8xbf16> to vector<1x11x8xbf16>
    %221 = tpu.concatenate %217, %218, %219, %220 in 0 : vector<1x11x8xbf16>, vector<1x11x8xbf16>, vector<1x11x8xbf16>, vector<1x11x8xbf16> -> vector<4x11x8xbf16>
    %222 = vector.extract_strided_slice %212 {offsets = [0, 32], sizes = [11, 8], strides = [1, 1]} : vector<11x96xbf16> to vector<11x8xbf16>
    %223 = vector.extract_strided_slice %212 {offsets = [0, 40], sizes = [11, 8], strides = [1, 1]} : vector<11x96xbf16> to vector<11x8xbf16>
    %224 = vector.extract_strided_slice %212 {offsets = [0, 48], sizes = [11, 8], strides = [1, 1]} : vector<11x96xbf16> to vector<11x8xbf16>
    %225 = vector.extract_strided_slice %212 {offsets = [0, 56], sizes = [11, 8], strides = [1, 1]} : vector<11x96xbf16> to vector<11x8xbf16>
    %226 = vector.shape_cast %222 : vector<11x8xbf16> to vector<1x11x8xbf16>
    %227 = vector.shape_cast %223 : vector<11x8xbf16> to vector<1x11x8xbf16>
    %228 = vector.shape_cast %224 : vector<11x8xbf16> to vector<1x11x8xbf16>
    %229 = vector.shape_cast %225 : vector<11x8xbf16> to vector<1x11x8xbf16>
    %230 = tpu.concatenate %226, %227, %228, %229 in 0 : vector<1x11x8xbf16>, vector<1x11x8xbf16>, vector<1x11x8xbf16>, vector<1x11x8xbf16> -> vector<4x11x8xbf16>
    %231 = vector.extract_strided_slice %212 {offsets = [0, 64], sizes = [11, 8], strides = [1, 1]} : vector<11x96xbf16> to vector<11x8xbf16>
    %232 = vector.extract_strided_slice %212 {offsets = [0, 72], sizes = [11, 8], strides = [1, 1]} : vector<11x96xbf16> to vector<11x8xbf16>
    %233 = vector.extract_strided_slice %212 {offsets = [0, 80], sizes = [11, 8], strides = [1, 1]} : vector<11x96xbf16> to vector<11x8xbf16>
    %234 = vector.extract_strided_slice %212 {offsets = [0, 88], sizes = [11, 8], strides = [1, 1]} : vector<11x96xbf16> to vector<11x8xbf16>
    %235 = vector.shape_cast %231 : vector<11x8xbf16> to vector<1x11x8xbf16>
    %236 = vector.shape_cast %232 : vector<11x8xbf16> to vector<1x11x8xbf16>
    %237 = vector.shape_cast %233 : vector<11x8xbf16> to vector<1x11x8xbf16>
    %238 = vector.shape_cast %234 : vector<11x8xbf16> to vector<1x11x8xbf16>
    %239 = tpu.concatenate %235, %236, %237, %238 in 0 : vector<1x11x8xbf16>, vector<1x11x8xbf16>, vector<1x11x8xbf16>, vector<1x11x8xbf16> -> vector<4x11x8xbf16>
    %cst_85 = arith.constant dense<0.000000e+00> : vector<4x11x11xf32>
    %240 = tpu.matmul %221, %230, %cst_85 {dimension_numbers = #tpu.dot_dimension_numbers<[2], [2], [1], [1], [0, 0, 0, 1, 1, 1], [0], [0]>} : vector<4x11x8xbf16>, vector<4x11x8xbf16>, vector<4x11x11xf32> -> vector<4x11x11xf32>
    %cst_86 = arith.constant 0.353553385 : f32
    %241 = vector.broadcast %cst_86 : f32 to vector<4x11x11xf32>
    %242 = arith.mulf %240, %241 : vector<4x11x11xf32>
    %cst_87 = arith.constant dense<0xFF800000> : vector<4x11xf32>
    %243 = vector.multi_reduction <maximumf>, %242, %cst_87 [2] : vector<4x11x11xf32> to vector<4x11xf32>
    %244 = vector.shape_cast %243 : vector<4x11xf32> to vector<4x11x1xf32>
    %245 = vector.broadcast %244 : vector<4x11x1xf32> to vector<4x11x11xf32>
    %246 = arith.subf %242, %245 : vector<4x11x11xf32>
    %247 = math.exp %246 : vector<4x11x11xf32>
    %cst_88 = arith.constant dense<0.000000e+00> : vector<4x11xf32>
    %248 = vector.multi_reduction <add>, %247, %cst_88 [2] : vector<4x11x11xf32> to vector<4x11xf32>
    %249 = vector.shape_cast %248 : vector<4x11xf32> to vector<4x11x1xf32>
    %250 = tpu.reciprocal %249 {approx = true} : vector<4x11x1xf32> -> vector<4x11x1xf32>
    %251 = vector.broadcast %250 : vector<4x11x1xf32> to vector<4x11x11xf32>
    %252 = arith.mulf %247, %251 : vector<4x11x11xf32>
    %253 = arith.truncf %252 : vector<4x11x11xf32> to vector<4x11x11xbf16>
    %cst_89 = arith.constant dense<0.000000e+00> : vector<4x11x8xf32>
    %254 = tpu.matmul %253, %239, %cst_89 {dimension_numbers = #tpu.dot_dimension_numbers<[2], [1], [1], [2], [0, 0, 0, 1, 1, 2], [0], [0]>} : vector<4x11x11xbf16>, vector<4x11x8xbf16>, vector<4x11x8xf32> -> vector<4x11x8xf32>
    %255 = vector.extract_strided_slice %254 {offsets = [0, 0, 0], sizes = [1, 11, 8], strides = [1, 1, 1]} : vector<4x11x8xf32> to vector<1x11x8xf32>
    %256 = vector.shape_cast %255 : vector<1x11x8xf32> to vector<11x8xf32>
    %257 = vector.extract_strided_slice %254 {offsets = [1, 0, 0], sizes = [1, 11, 8], strides = [1, 1, 1]} : vector<4x11x8xf32> to vector<1x11x8xf32>
    %258 = vector.shape_cast %257 : vector<1x11x8xf32> to vector<11x8xf32>
    %259 = vector.extract_strided_slice %254 {offsets = [2, 0, 0], sizes = [1, 11, 8], strides = [1, 1, 1]} : vector<4x11x8xf32> to vector<1x11x8xf32>
    %260 = vector.shape_cast %259 : vector<1x11x8xf32> to vector<11x8xf32>
    %261 = vector.extract_strided_slice %254 {offsets = [3, 0, 0], sizes = [1, 11, 8], strides = [1, 1, 1]} : vector<4x11x8xf32> to vector<1x11x8xf32>
    %262 = vector.shape_cast %261 : vector<1x11x8xf32> to vector<11x8xf32>
    %263 = tpu.concatenate %256, %258, %260, %262 in 1 : vector<11x8xf32>, vector<11x8xf32>, vector<11x8xf32>, vector<11x8xf32> -> vector<11x32xf32>
    %264 = arith.truncf %263 : vector<11x32xf32> to vector<11x32xbf16>
    %c1_90 = arith.constant 1 : index
    %c0_91 = arith.constant 0 : index
    %c0_92 = arith.constant 0 : index
    %265 = vector.load %arg8[%c1_90, %c0_91, %c0_92] : memref<2x32x32xbf16, #tpu.memory_space<vmem>>, vector<1x32x32xbf16>
    %266 = vector.shape_cast %265 : vector<1x32x32xbf16> to vector<32x32xbf16>
    %cst_93 = arith.constant dense<0.000000e+00> : vector<11x32xf32>
    %267 = tpu.matmul %264, %266, %cst_93 {dimension_numbers = #tpu.dot_dimension_numbers<[1], [0], [0], [1], [0, 0, 1, 1], [], []>} : vector<11x32xbf16>, vector<32x32xbf16>, vector<11x32xf32> -> vector<11x32xf32>
    %c1_94 = arith.constant 1 : index
    %c0_95 = arith.constant 0 : index
    %c0_96 = arith.constant 0 : index
    %268 = vector.load %arg9[%c1_94, %c0_95, %c0_96] : memref<2x1x32xf32, #tpu.memory_space<vmem>>, vector<1x1x32xf32>
    %269 = vector.shape_cast %268 : vector<1x1x32xf32> to vector<1x32xf32>
    %270 = vector.broadcast %269 : vector<1x32xf32> to vector<11x32xf32>
    %271 = arith.addf %267, %270 : vector<11x32xf32>
    %272 = arith.addf %203, %271 : vector<11x32xf32>
    %c1_97 = arith.constant 1 : index
    %c0_98 = arith.constant 0 : index
    %c0_99 = arith.constant 0 : index
    %273 = vector.load %arg10[%c1_97, %c0_98, %c0_99] : memref<2x1x32xf32, #tpu.memory_space<vmem>>, vector<1x1x32xf32>
    %274 = vector.shape_cast %273 : vector<1x1x32xf32> to vector<1x32xf32>
    %c1_100 = arith.constant 1 : index
    %c0_101 = arith.constant 0 : index
    %c0_102 = arith.constant 0 : index
    %275 = vector.load %arg11[%c1_100, %c0_101, %c0_102] : memref<2x1x32xf32, #tpu.memory_space<vmem>>, vector<1x1x32xf32>
    %276 = vector.shape_cast %275 : vector<1x1x32xf32> to vector<1x32xf32>
    %cst_103 = arith.constant dense<0.000000e+00> : vector<11xf32>
    %277 = vector.multi_reduction <add>, %272, %cst_103 [1] : vector<11x32xf32> to vector<11xf32>
    %278 = vector.shape_cast %277 : vector<11xf32> to vector<11x1xf32>
    %cst_104 = arith.constant 3.200000e+01 : f32
    %279 = vector.broadcast %cst_104 : f32 to vector<11x1xf32>
    %280 = arith.divf %278, %279 : vector<11x1xf32>
    %281 = vector.broadcast %280 : vector<11x1xf32> to vector<11x32xf32>
    %282 = arith.subf %272, %281 : vector<11x32xf32>
    %283 = arith.mulf %282, %282 : vector<11x32xf32>
    %cst_105 = arith.constant dense<0.000000e+00> : vector<11xf32>
    %284 = vector.multi_reduction <add>, %283, %cst_105 [1] : vector<11x32xf32> to vector<11xf32>
    %285 = vector.shape_cast %284 : vector<11xf32> to vector<11x1xf32>
    %cst_106 = arith.constant 3.200000e+01 : f32
    %286 = vector.broadcast %cst_106 : f32 to vector<11x1xf32>
    %287 = arith.divf %285, %286 : vector<11x1xf32>
    %288 = vector.broadcast %280 : vector<11x1xf32> to vector<11x32xf32>
    %289 = arith.subf %272, %288 : vector<11x32xf32>
    %cst_107 = arith.constant 9.99999974E-6 : f32
    %290 = vector.broadcast %cst_107 : f32 to vector<11x1xf32>
    %291 = arith.addf %287, %290 : vector<11x1xf32>
    %292 = math.rsqrt %291 : vector<11x1xf32>
    %293 = vector.broadcast %292 : vector<11x1xf32> to vector<11x32xf32>
    %294 = arith.mulf %289, %293 : vector<11x32xf32>
    %295 = vector.broadcast %274 : vector<1x32xf32> to vector<11x32xf32>
    %296 = arith.mulf %294, %295 : vector<11x32xf32>
    %297 = vector.broadcast %276 : vector<1x32xf32> to vector<11x32xf32>
    %298 = arith.addf %296, %297 : vector<11x32xf32>
    %299 = arith.truncf %298 : vector<11x32xf32> to vector<11x32xbf16>
    %c1_108 = arith.constant 1 : index
    %c0_109 = arith.constant 0 : index
    %c0_110 = arith.constant 0 : index
    %300 = vector.load %arg12[%c1_108, %c0_109, %c0_110] : memref<2x32x64xbf16, #tpu.memory_space<vmem>>, vector<1x32x64xbf16>
    %301 = vector.shape_cast %300 : vector<1x32x64xbf16> to vector<32x64xbf16>
    %cst_111 = arith.constant dense<0.000000e+00> : vector<11x64xf32>
    %302 = tpu.matmul %299, %301, %cst_111 {dimension_numbers = #tpu.dot_dimension_numbers<[1], [0], [0], [1], [0, 0, 1, 1], [], []>} : vector<11x32xbf16>, vector<32x64xbf16>, vector<11x64xf32> -> vector<11x64xf32>
    %c1_112 = arith.constant 1 : index
    %c0_113 = arith.constant 0 : index
    %c0_114 = arith.constant 0 : index
    %303 = vector.load %arg13[%c1_112, %c0_113, %c0_114] : memref<2x1x64xf32, #tpu.memory_space<vmem>>, vector<1x1x64xf32>
    %304 = vector.shape_cast %303 : vector<1x1x64xf32> to vector<1x64xf32>
    %305 = vector.broadcast %304 : vector<1x64xf32> to vector<11x64xf32>
    %306 = arith.addf %302, %305 : vector<11x64xf32>
    %cst_115 = arith.constant 5.000000e-01 : f32
    %307 = vector.broadcast %cst_115 : f32 to vector<11x64xf32>
    %308 = arith.mulf %307, %306 : vector<11x64xf32>
    %cst_116 = arith.constant 4.471500e-02 : f32
    %309 = vector.broadcast %cst_116 : f32 to vector<11x64xf32>
    %310 = arith.mulf %309, %306 : vector<11x64xf32>
    %311 = arith.mulf %310, %306 : vector<11x64xf32>
    %312 = arith.mulf %311, %306 : vector<11x64xf32>
    %313 = arith.addf %306, %312 : vector<11x64xf32>
    %cst_117 = arith.constant 0.797884583 : f32
    %314 = vector.broadcast %cst_117 : f32 to vector<11x64xf32>
    %315 = arith.mulf %314, %313 : vector<11x64xf32>
    %316 = math.tanh %315 : vector<11x64xf32>
    %cst_118 = arith.constant 1.000000e+00 : f32
    %317 = vector.broadcast %cst_118 : f32 to vector<11x64xf32>
    %318 = arith.addf %317, %316 : vector<11x64xf32>
    %319 = arith.mulf %308, %318 : vector<11x64xf32>
    %320 = arith.truncf %319 : vector<11x64xf32> to vector<11x64xbf16>
    %c1_119 = arith.constant 1 : index
    %c0_120 = arith.constant 0 : index
    %c0_121 = arith.constant 0 : index
    %321 = vector.load %arg14[%c1_119, %c0_120, %c0_121] : memref<2x64x32xbf16, #tpu.memory_space<vmem>>, vector<1x64x32xbf16>
    %322 = vector.shape_cast %321 : vector<1x64x32xbf16> to vector<64x32xbf16>
    %cst_122 = arith.constant dense<0.000000e+00> : vector<11x32xf32>
    %323 = tpu.matmul %320, %322, %cst_122 {dimension_numbers = #tpu.dot_dimension_numbers<[1], [0], [0], [1], [0, 0, 1, 1], [], []>} : vector<11x64xbf16>, vector<64x32xbf16>, vector<11x32xf32> -> vector<11x32xf32>
    %c1_123 = arith.constant 1 : index
    %c0_124 = arith.constant 0 : index
    %c0_125 = arith.constant 0 : index
    %324 = vector.load %arg15[%c1_123, %c0_124, %c0_125] : memref<2x1x32xf32, #tpu.memory_space<vmem>>, vector<1x1x32xf32>
    %325 = vector.shape_cast %324 : vector<1x1x32xf32> to vector<1x32xf32>
    %326 = vector.broadcast %325 : vector<1x32xf32> to vector<11x32xf32>
    %327 = arith.addf %323, %326 : vector<11x32xf32>
    %328 = arith.addf %298, %327 : vector<11x32xf32>
    %c1_126 = arith.constant 1 : index
    %c0_127 = arith.constant 0 : index
    %c0_128 = arith.constant 0 : index
    %329 = vector.load %arg16[%c1_126, %c0_127, %c0_128] : memref<2x1x32xf32, #tpu.memory_space<vmem>>, vector<1x1x32xf32>
    %330 = vector.shape_cast %329 : vector<1x1x32xf32> to vector<1x32xf32>
    %c1_129 = arith.constant 1 : index
    %c0_130 = arith.constant 0 : index
    %c0_131 = arith.constant 0 : index
    %331 = vector.load %arg17[%c1_129, %c0_130, %c0_131] : memref<2x1x32xf32, #tpu.memory_space<vmem>>, vector<1x1x32xf32>
    %332 = vector.shape_cast %331 : vector<1x1x32xf32> to vector<1x32xf32>
    %cst_132 = arith.constant dense<0.000000e+00> : vector<11xf32>
    %333 = vector.multi_reduction <add>, %328, %cst_132 [1] : vector<11x32xf32> to vector<11xf32>
    %334 = vector.shape_cast %333 : vector<11xf32> to vector<11x1xf32>
    %cst_133 = arith.constant 3.200000e+01 : f32
    %335 = vector.broadcast %cst_133 : f32 to vector<11x1xf32>
    %336 = arith.divf %334, %335 : vector<11x1xf32>
    %337 = vector.broadcast %336 : vector<11x1xf32> to vector<11x32xf32>
    %338 = arith.subf %328, %337 : vector<11x32xf32>
    %339 = arith.mulf %338, %338 : vector<11x32xf32>
    %cst_134 = arith.constant dense<0.000000e+00> : vector<11xf32>
    %340 = vector.multi_reduction <add>, %339, %cst_134 [1] : vector<11x32xf32> to vector<11xf32>
    %341 = vector.shape_cast %340 : vector<11xf32> to vector<11x1xf32>
    %cst_135 = arith.constant 3.200000e+01 : f32
    %342 = vector.broadcast %cst_135 : f32 to vector<11x1xf32>
    %343 = arith.divf %341, %342 : vector<11x1xf32>
    %344 = vector.broadcast %336 : vector<11x1xf32> to vector<11x32xf32>
    %345 = arith.subf %328, %344 : vector<11x32xf32>
    %cst_136 = arith.constant 9.99999974E-6 : f32
    %346 = vector.broadcast %cst_136 : f32 to vector<11x1xf32>
    %347 = arith.addf %343, %346 : vector<11x1xf32>
    %348 = math.rsqrt %347 : vector<11x1xf32>
    %349 = vector.broadcast %348 : vector<11x1xf32> to vector<11x32xf32>
    %350 = arith.mulf %345, %349 : vector<11x32xf32>
    %351 = vector.broadcast %330 : vector<1x32xf32> to vector<11x32xf32>
    %352 = arith.mulf %350, %351 : vector<11x32xf32>
    %353 = vector.broadcast %332 : vector<1x32xf32> to vector<11x32xf32>
    %354 = arith.addf %352, %353 : vector<11x32xf32>
    %355 = vector.extract_strided_slice %354 {offsets = [0, 0], sizes = [1, 32], strides = [1, 1]} : vector<11x32xf32> to vector<1x32xf32>
    %356 = arith.truncf %355 : vector<1x32xf32> to vector<1x32xbf16>
    %c0_137 = arith.constant 0 : index
    %c0_138 = arith.constant 0 : index
    %357 = vector.load %arg18[%c0_137, %c0_138] : memref<32x128xbf16, #tpu.memory_space<vmem>>, vector<32x128xbf16>
    %cst_139 = arith.constant dense<0.000000e+00> : vector<1x128xf32>
    %358 = tpu.matmul %356, %357, %cst_139 {dimension_numbers = #tpu.dot_dimension_numbers<[1], [0], [0], [1], [0, 0, 1, 1], [], []>} : vector<1x32xbf16>, vector<32x128xbf16>, vector<1x128xf32> -> vector<1x128xf32>
    %c0_140 = arith.constant 0 : index
    %c0_141 = arith.constant 0 : index
    %359 = vector.load %arg19[%c0_140, %c0_141] : memref<1x128xf32, #tpu.memory_space<vmem>>, vector<1x128xf32>
    %360 = arith.addf %358, %359 : vector<1x128xf32>
    %c0_142 = arith.constant 0 : index
    %c0_143 = arith.constant 0 : index
    %c0_144 = arith.constant 0 : index
    %361 = vector.load %arg20[%c0_142, %c0_143, %c0_144] : memref<1x1x128xf32, #tpu.memory_space<vmem>>, vector<1x1x128xf32>
    %362 = vector.shape_cast %361 : vector<1x1x128xf32> to vector<1x128xf32>
    %363 = vector.shape_cast %360 : vector<1x128xf32> to vector<1x1x128xf32>
    tpu.vector_store %arg20[%c0_142, %c0_143, %c0_144], %363 {strides = array<i32>} : memref<1x1x128xf32, #tpu.memory_space<vmem>>, vector<1x1x128xf32>,
    return
  }
  func.func @transform_0(%arg0: i32) -> (i32, i32, i32) {
    %c0_i32 = arith.constant 0 : i32
    %c0_i32_0 = arith.constant 0 : i32
    %c0_i32_1 = arith.constant 0 : i32
    return %arg0, %c0_i32, %c0_i32_0 : i32, i32, i32
  }
  func.func @transform_1(%arg0: i32) -> (i32, i32) {
    %c0_i32 = arith.constant 0 : i32
    %c0_i32_0 = arith.constant 0 : i32
    %c0_i32_1 = arith.constant 0 : i32
    return %c0_i32, %c0_i32_0 : i32, i32
  }
  func.func @transform_2(%arg0: i32) -> (i32, i32) {
    %c0_i32 = arith.constant 0 : i32
    %c0_i32_0 = arith.constant 0 : i32
    %c0_i32_1 = arith.constant 0 : i32
    return %c0_i32, %c0_i32_0 : i32, i32
  }
  func.func @transform_3(%arg0: i32) -> (i32, i32) {
    %c0_i32 = arith.constant 0 : i32
    %c0_i32_0 = arith.constant 0 : i32
    %c0_i32_1 = arith.constant 0 : i32
    return %c0_i32, %c0_i32_0 : i32, i32
  }
  func.func @transform_4(%arg0: i32) -> (i32, i32) {
    %c0_i32 = arith.constant 0 : i32
    %c0_i32_0 = arith.constant 0 : i32
    %c0_i32_1 = arith.constant 0 : i32
    return %c0_i32, %c0_i32_0 : i32, i32
  }
  func.func @transform_5(%arg0: i32) -> (i32, i32, i32) {
    %c0_i32 = arith.constant 0 : i32
    %c0_i32_0 = arith.constant 0 : i32
    %c0_i32_1 = arith.constant 0 : i32
    %c0_i32_2 = arith.constant 0 : i32
    return %c0_i32, %c0_i32_0, %c0_i32_1 : i32, i32, i32
  }
  func.func @transform_6(%arg0: i32) -> (i32, i32, i32) {
    %c0_i32 = arith.constant 0 : i32
    %c0_i32_0 = arith.constant 0 : i32
    %c0_i32_1 = arith.constant 0 : i32
    %c0_i32_2 = arith.constant 0 : i32
    return %c0_i32, %c0_i32_0, %c0_i32_1 : i32, i32, i32
  }
  func.func @transform_7(%arg0: i32) -> (i32, i32, i32) {
    %c0_i32 = arith.constant 0 : i32
    %c0_i32_0 = arith.constant 0 : i32
    %c0_i32_1 = arith.constant 0 : i32
    %c0_i32_2 = arith.constant 0 : i32
    return %c0_i32, %c0_i32_0, %c0_i32_1 : i32, i32, i32
  }
  func.func @transform_8(%arg0: i32) -> (i32, i32, i32) {
    %c0_i32 = arith.constant 0 : i32
    %c0_i32_0 = arith.constant 0 : i32
    %c0_i32_1 = arith.constant 0 : i32
    %c0_i32_2 = arith.constant 0 : i32
    return %c0_i32, %c0_i32_0, %c0_i32_1 : i32, i32, i32
  }
  func.func @transform_9(%arg0: i32) -> (i32, i32, i32) {
    %c0_i32 = arith.constant 0 : i32
    %c0_i32_0 = arith.constant 0 : i32
    %c0_i32_1 = arith.constant 0 : i32
    %c0_i32_2 = arith.constant 0 : i32
    return %c0_i32, %c0_i32_0, %c0_i32_1 : i32, i32, i32
  }
  func.func @transform_10(%arg0: i32) -> (i32, i32, i32) {
    %c0_i32 = arith.constant 0 : i32
    %c0_i32_0 = arith.constant 0 : i32
    %c0_i32_1 = arith.constant 0 : i32
    %c0_i32_2 = arith.constant 0 : i32
    return %c0_i32, %c0_i32_0, %c0_i32_1 : i32, i32, i32
  }
  func.func @transform_11(%arg0: i32) -> (i32, i32, i32) {
    %c0_i32 = arith.constant 0 : i32
    %c0_i32_0 = arith.constant 0 : i32
    %c0_i32_1 = arith.constant 0 : i32
    %c0_i32_2 = arith.constant 0 : i32
    return %c0_i32, %c0_i32_0, %c0_i32_1 : i32, i32, i32
  }
  func.func @transform_12(%arg0: i32) -> (i32, i32, i32) {
    %c0_i32 = arith.constant 0 : i32
    %c0_i32_0 = arith.constant 0 : i32
    %c0_i32_1 = arith.constant 0 : i32
    %c0_i32_2 = arith.constant 0 : i32
    return %c0_i32, %c0_i32_0, %c0_i32_1 : i32, i32, i32
  }
  func.func @transform_13(%arg0: i32) -> (i32, i32, i32) {
    %c0_i32 = arith.constant 0 : i32
    %c0_i32_0 = arith.constant 0 : i32
    %c0_i32_1 = arith.constant 0 : i32
    %c0_i32_2 = arith.constant 0 : i32
    return %c0_i32, %c0_i32_0, %c0_i32_1 : i32, i32, i32
  }
  func.func @transform_14(%arg0: i32) -> (i32, i32, i32) {
    %c0_i32 = arith.constant 0 : i32
    %c0_i32_0 = arith.constant 0 : i32
    %c0_i32_1 = arith.constant 0 : i32
    %c0_i32_2 = arith.constant 0 : i32
    return %c0_i32, %c0_i32_0, %c0_i32_1 : i32, i32, i32
  }
  func.func @transform_15(%arg0: i32) -> (i32, i32, i32) {
    %c0_i32 = arith.constant 0 : i32
    %c0_i32_0 = arith.constant 0 : i32
    %c0_i32_1 = arith.constant 0 : i32
    %c0_i32_2 = arith.constant 0 : i32
    return %c0_i32, %c0_i32_0, %c0_i32_1 : i32, i32, i32
  }
  func.func @transform_16(%arg0: i32) -> (i32, i32, i32) {
    %c0_i32 = arith.constant 0 : i32
    %c0_i32_0 = arith.constant 0 : i32
    %c0_i32_1 = arith.constant 0 : i32
    %c0_i32_2 = arith.constant 0 : i32
    return %c0_i32, %c0_i32_0, %c0_i32_1 : i32, i32, i32
  }
  func.func @transform_17(%arg0: i32) -> (i32, i32) {
    %c0_i32 = arith.constant 0 : i32
    %c0_i32_0 = arith.constant 0 : i32
    %c0_i32_1 = arith.constant 0 : i32
    return %c0_i32, %c0_i32_0 : i32, i32
  }
  func.func @transform_18(%arg0: i32) -> (i32, i32) {
    %c0_i32 = arith.constant 0 : i32
    %c0_i32_0 = arith.constant 0 : i32
    %c0_i32_1 = arith.constant 0 : i32
    return %c0_i32, %c0_i32_0 : i32, i32
  }
  func.func @transform_19(%arg0: i32) -> (i32, i32, i32) {
    %c0_i32 = arith.constant 0 : i32
    %c0_i32_0 = arith.constant 0 : i32
    %c0_i32_1 = arith.constant 0 : i32
    return %arg0, %c0_i32, %c0_i32_0 : i32, i32, i32
  }
}

</mosaic_0001>

<llo_original>
// kernel: _lambda_.2
$region0: #{_lambda_.2}
  #allocation0 [shape = 'u32[]', space=smem, size = 0x4, offset = 0x4, fixed_abs, tag = 'smem constant byte address 0x4 - core index']
  #allocation1 [shape = 'u32[144,128]{1,0:T(1,128)}', space=vmem, size = 0x12000, scoped, tag = 'internal scratch']
  #allocation2 [shape = 'f32[24,32]{1,0:T(8,128)}', space=vmem, size = 0x3000, scoped, tag = 'scratch operand']
  %s0 = inlined_call_operand.vmem [shape: f32[2,24,40], index: 0, kind: input, shape index: {}]
  %s1 = inlined_call_operand.vmem [shape: bf16[40,32], index: 1, kind: input, shape index: {}]
  %s2 = inlined_call_operand.vmem [shape: f32[1,32], index: 2, kind: input, shape index: {}]
  %s3 = inlined_call_operand.vmem [shape: f32[1,32], index: 3, kind: input, shape index: {}]
  %s4 = inlined_call_operand.vmem [shape: bf16[96,32], index: 4, kind: input, shape index: {}]
  %s5 = inlined_call_operand.vmem [shape: f32[1,32], index: 5, kind: input, shape index: {}]
  %s6 = inlined_call_operand.vmem [shape: f32[1,32], index: 6, kind: input, shape index: {}]
  %s7 = inlined_call_operand.vmem [shape: bf16[32,32], index: 7, kind: input, shape index: {}]
  %s8 = inlined_call_operand.vmem [shape: f32[1,32], index: 8, kind: input, shape index: {}]
  %s9 = inlined_call_operand.vmem [shape: bf16[2,11,32], index: 9, kind: output, shape index: {}]
  %s10 = sld [smem:[#allocation0]]
  $region69: #{_lambda_.2} parent=0
    _
  %s12 = ssub.s32 1, %s10
  %s13 = scalar_select 0, %s12, %s10
  loop: start=0, step=1, limit=4
  $region2: #{_lambda_.2} parent=0 // loop_pre_header
    _
  $region3: #{_lambda_.2} parent=0 // loop_header
    %s15 = sphi 0, %s19
    %p16 = scmp.ge.s32.totalorder %s15, 4
    %s25 = sphi 0, %s27
    %s28 = sphi 0, %s25
    %s29 = sphi 0, %s28
    %s45 = sphi 0, %s29
    %s49 = sphi 0, %s49
    %s51 = sphi 0, %s49
    %s52 = sphi 0, %s51
    %s66 = sphi 0, %s52
    %s70 = sphi 0, %s70
    %s72 = sphi 0, %s70
    %s73 = sphi 0, %s72
    %s87 = sphi 0, %s73
    %s91 = sphi 0, %s91
    %s93 = sphi 0, %s91
    %s94 = sphi 0, %s93
    %s108 = sphi 0, %s94
    %s112 = sphi 0, %s112
    %s114 = sphi 0, %s112
    %s115 = sphi 0, %s114
    %s129 = sphi 0, %s115
    %s133 = sphi 0, %s133
    %s135 = sphi 0, %s133
    %s136 = sphi 0, %s135
    %s150 = sphi 0, %s136
    %s154 = sphi 0, %s154
    %s156 = sphi 0, %s154
    %s157 = sphi 0, %s156
    %s171 = sphi 0, %s157
    %s175 = sphi 0, %s175
    %s177 = sphi 0, %s175
    %s178 = sphi 0, %s177
    %s192 = sphi 0, %s178
    %s196 = sphi 0, %s196
    %s198 = sphi 0, %s196
    %s199 = sphi 0, %s198
    %s213 = sphi 0, %s199
    %s219 = sphi 0, %s221
    %s222 = sphi 0, %s219
    %s223 = sphi 0, %s222
    %s239 = sphi 0, %s223
  $region4: #{_lambda_.2} parent=0 // loop_header_branch
    %18 = sbr.rel (%p16) target = $region8
  $region5: #{_lambda_.2} parent=0 // loop_body
    %s20 = ssub.s32 %s15, 1
    %s21 = ssub.s32 %s15, 2
    %s22 = sadd.s32 %s15, 1
    %s23 = ssub.s32 %s15, %s22
    %p24 = scmp.eq.s32.totalorder %s23, 0
    %s26 = sadd.s32 %s25, 1
    %s27 = scalar_select %p24, %s25, %s26
    %p30 = pneg %p24
    %p31 = scmp.eq.s32.totalorder %s15, 1
    %p32 = por %p30, %p31
    %p33 = scmp.ne.s32.totalorder %s25, %s28
    %p34 = scmp.eq.s32.totalorder %s15, 0
    %p35 = por %p33, %p34
    %p36 = scmp.ne.s32.totalorder %s25, %s28
    %p37 = scmp.eq.s32.totalorder %s20, 1
    %p38 = por %p36, %p37
    %p39 = scmp.ne.s32.totalorder %s28, %s29
    %p40 = scmp.eq.s32.totalorder %s20, 0
    %p41 = por %p39, %p40
    %p42 = scmp.ne.s32.totalorder %s28, %s29
    %p43 = scmp.eq.s32.totalorder %s21, 1
    %p44 = por %p42, %p43
    %p46 = scmp.ne.s32.totalorder %s29, %s45
    %p47 = scmp.eq.s32.totalorder %s21, 0
    %p48 = por %p46, %p47
    %s50 = sadd.s32 %s49, 1
    %p53 = scmp.eq.s32.totalorder %s15, 1
    %p54 = scmp.ne.s32.totalorder %s49, %s51
    %p55 = scmp.eq.s32.totalorder %s15, 0
    %p56 = por %p54, %p55
    %p57 = scmp.ne.s32.totalorder %s49, %s51
    %p58 = scmp.eq.s32.totalorder %s20, 1
    %p59 = por %p57, %p58
    %p60 = scmp.ne.s32.totalorder %s51, %s52
    %p61 = scmp.eq.s32.totalorder %s20, 0
    %p62 = por %p60, %p61
    %p63 = scmp.ne.s32.totalorder %s51, %s52
    %p64 = scmp.eq.s32.totalorder %s21, 1
    %p65 = por %p63, %p64
    %p67 = scmp.ne.s32.totalorder %s52, %s66
    %p68 = scmp.eq.s32.totalorder %s21, 0
    %p69 = por %p67, %p68
    %s71 = sadd.s32 %s70, 1
    %p74 = scmp.eq.s32.totalorder %s15, 1
    %p75 = scmp.ne.s32.totalorder %s70, %s72
    %p76 = scmp.eq.s32.totalorder %s15, 0
    %p77 = por %p75, %p76
    %p78 = scmp.ne.s32.totalorder %s70, %s72
    %p79 = scmp.eq.s32.totalorder %s20, 1
    %p80 = por %p78, %p79
    %p81 = scmp.ne.s32.totalorder %s72, %s73
    %p82 = scmp.eq.s32.totalorder %s20, 0
    %p83 = por %p81, %p82
    %p84 = scmp.ne.s32.totalorder %s72, %s73
    %p85 = scmp.eq.s32.totalorder %s21, 1
    %p86 = por %p84, %p85
    %p88 = scmp.ne.s32.totalorder %s73, %s87
    %p89 = scmp.eq.s32.totalorder %s21, 0
    %p90 = por %p88, %p89
    %s92 = sadd.s32 %s91, 1
    %p95 = scmp.eq.s32.totalorder %s15, 1
    %p96 = scmp.ne.s32.totalorder %s91, %s93
    %p97 = scmp.eq.s32.totalorder %s15, 0
    %p98 = por %p96, %p97
    %p99 = scmp.ne.s32.totalorder %s91, %s93
    %p100 = scmp.eq.s32.totalorder %s20, 1
    %p101 = por %p99, %p100
    %p102 = scmp.ne.s32.totalorder %s93, %s94
    %p103 = scmp.eq.s32.totalorder %s20, 0
    %p104 = por %p102, %p103
    %p105 = scmp.ne.s32.totalorder %s93, %s94
    %p106 = scmp.eq.s32.totalorder %s21, 1
    %p107 = por %p105, %p106
    %p109 = scmp.ne.s32.totalorder %s94, %s108
    %p110 = scmp.eq.s32.totalorder %s21, 0
    %p111 = por %p109, %p110
    %s113 = sadd.s32 %s112, 1
    %p116 = scmp.eq.s32.totalorder %s15, 1
    %p117 = scmp.ne.s32.totalorder %s112, %s114
    %p118 = scmp.eq.s32.totalorder %s15, 0
    %p119 = por %p117, %p118
    %p120 = scmp.ne.s32.totalorder %s112, %s114
    %p121 = scmp.eq.s32.totalorder %s20, 1
    %p122 = por %p120, %p121
    %p123 = scmp.ne.s32.totalorder %s114, %s115
    %p124 = scmp.eq.s32.totalorder %s20, 0
    %p125 = por %p123, %p124
    %p126 = scmp.ne.s32.totalorder %s114, %s115
    %p127 = scmp.eq.s32.totalorder %s21, 1
    %p128 = por %p126, %p127
    %p130 = scmp.ne.s32.totalorder %s115, %s129
    %p131 = scmp.eq.s32.totalorder %s21, 0
    %p132 = por %p130, %p131
    %s134 = sadd.s32 %s133, 1
    %p137 = scmp.eq.s32.totalorder %s15, 1
    %p138 = scmp.ne.s32.totalorder %s133, %s135
    %p139 = scmp.eq.s32.totalorder %s15, 0
    %p140 = por %p138, %p139
    %p141 = scmp.ne.s32.totalorder %s133, %s135
    %p142 = scmp.eq.s32.totalorder %s20, 1
    %p143 = por %p141, %p142
    %p144 = scmp.ne.s32.totalorder %s135, %s136
    %p145 = scmp.eq.s32.totalorder %s20, 0
    %p146 = por %p144, %p145
    %p147 = scmp.ne.s32.totalorder %s135, %s136
    %p148 = scmp.eq.s32.totalorder %s21, 1
    %p149 = por %p147, %p148
    %p151 = scmp.ne.s32.totalorder %s136, %s150
    %p152 = scmp.eq.s32.totalorder %s21, 0
    %p153 = por %p151, %p152
    %s155 = sadd.s32 %s154, 1
    %p158 = scmp.eq.s32.totalorder %s15, 1
    %p159 = scmp.ne.s32.totalorder %s154, %s156
    %p160 = scmp.eq.s32.totalorder %s15, 0
    %p161 = por %p159, %p160
    %p162 = scmp.ne.s32.totalorder %s154, %s156
    %p163 = scmp.eq.s32.totalorder %s20, 1
    %p164 = por %p162, %p163
    %p165 = scmp.ne.s32.totalorder %s156, %s157
    %p166 = scmp.eq.s32.totalorder %s20, 0
    %p167 = por %p165, %p166
    %p168 = scmp.ne.s32.totalorder %s156, %s157
    %p169 = scmp.eq.s32.totalorder %s21, 1
    %p170 = por %p168, %p169
    %p172 = scmp.ne.s32.totalorder %s157, %s171
    %p173 = scmp.eq.s32.totalorder %s21, 0
    %p174 = por %p172, %p173
    %s176 = sadd.s32 %s175, 1
    %p179 = scmp.eq.s32.totalorder %s15, 1
    %p180 = scmp.ne.s32.totalorder %s175, %s177
    %p181 = scmp.eq.s32.totalorder %s15, 0
    %p182 = por %p180, %p181
    %p183 = scmp.ne.s32.totalorder %s175, %s177
    %p184 = scmp.eq.s32.totalorder %s20, 1
    %p185 = por %p183, %p184
    %p186 = scmp.ne.s32.totalorder %s177, %s178
    %p187 = scmp.eq.s32.totalorder %s20, 0
    %p188 = por %p186, %p187
    %p189 = scmp.ne.s32.totalorder %s177, %s178
    %p190 = scmp.eq.s32.totalorder %s21, 1
    %p191 = por %p189, %p190
    %p193 = scmp.ne.s32.totalorder %s178, %s192
    %p194 = scmp.eq.s32.totalorder %s21, 0
    %p195 = por %p193, %p194
    %s197 = sadd.s32 %s196, 1
    %p200 = scmp.eq.s32.totalorder %s15, 1
    %p201 = scmp.ne.s32.totalorder %s196, %s198
    %p202 = scmp.eq.s32.totalorder %s15, 0
    %p203 = por %p201, %p202
    %p204 = scmp.ne.s32.totalorder %s196, %s198
    %p205 = scmp.eq.s32.totalorder %s20, 1
    %p206 = por %p204, %p205
    %p207 = scmp.ne.s32.totalorder %s198, %s199
    %p208 = scmp.eq.s32.totalorder %s20, 0
    %p209 = por %p207, %p208
    %p210 = scmp.ne.s32.totalorder %s198, %s199
    %p211 = scmp.eq.s32.totalorder %s21, 1
    %p212 = por %p210, %p211
    %p214 = scmp.ne.s32.totalorder %s199, %s213
    %p215 = scmp.eq.s32.totalorder %s21, 0
    %p216 = por %p214, %p215
    %s217 = ssub.s32 %s15, %s22
    %p218 = scmp.eq.s32.totalorder %s217, 0
    %s220 = sadd.s32 %s219, 1
    %s221 = scalar_select %p218, %s219, %s220
    %p224 = pneg %p218
    %p225 = scmp.eq.s32.totalorder %s15, 1
    %p226 = por %p224, %p225
    %p227 = scmp.ne.s32.totalorder %s219, %s222
    %p228 = scmp.eq.s32.totalorder %s15, 0
    %p229 = por %p227, %p228
    %p230 = scmp.ne.s32.totalorder %s219, %s222
    %p231 = scmp.eq.s32.totalorder %s20, 1
    %p232 = por %p230, %p231
    %p233 = scmp.ne.s32.totalorder %s222, %s223
    %p234 = scmp.eq.s32.totalorder %s20, 0
    %p235 = por %p233, %p234
    %p236 = scmp.ne.s32.totalorder %s222, %s223
    %p237 = scmp.eq.s32.totalorder %s21, 1
    %p238 = por %p236, %p237
    %p240 = scmp.ne.s32.totalorder %s223, %s239
    %p241 = scmp.eq.s32.totalorder %s21, 0
    %p242 = por %p240, %p241
    %p243 = scmp.le.s32.totalorder 1, %s15
    %p244 = scmp.lt.s32.totalorder %s15, 3
    %p245 = pnand %p243, %p244
    %p246 = pneg %p245
    // Predicated region
    $region9: #{_lambda_.2} parent=5 // pred_check
      _
    $region10: #{_lambda_.2} parent=5 // pred_check_branch
      %248 = sbr.rel (%p245) target = $region12
    $region11: #{_lambda_.2} parent=5 // pred_region
      %s249 = ssub.s32 %s15, 1
      // Predicated region
      $region13: #{_lambda_.2} parent=11 // pred_check
        %p250 = pneg %p62
      $region14: #{_lambda_.2} parent=11 // pred_check_branch
        %252 = sbr.rel (%p250) target = $region16
      $region15: #{_lambda_.2} parent=11 // pred_region
        _
      $region16: #{_lambda_.2} parent=11 // pred_fallthru
        _
      // Predicated region
      $region17: #{_lambda_.2} parent=11 // pred_check
        %p253 = pneg %p83
      $region18: #{_lambda_.2} parent=11 // pred_check_branch
        %255 = sbr.rel (%p253) target = $region20
      $region19: #{_lambda_.2} parent=11 // pred_region
        _
      $region20: #{_lambda_.2} parent=11 // pred_fallthru
        _
      // Predicated region
      $region21: #{_lambda_.2} parent=11 // pred_check
        %p256 = pneg %p104
      $region22: #{_lambda_.2} parent=11 // pred_check_branch
        %258 = sbr.rel (%p256) target = $region24
      $region23: #{_lambda_.2} parent=11 // pred_region
        _
      $region24: #{_lambda_.2} parent=11 // pred_fallthru
        _
      // Predicated region
      $region25: #{_lambda_.2} parent=11 // pred_check
        %p259 = pneg %p125
      $region26: #{_lambda_.2} parent=11 // pred_check_branch
        %261 = sbr.rel (%p259) target = $region28
      $region27: #{_lambda_.2} parent=11 // pred_region
        _
      $region28: #{_lambda_.2} parent=11 // pred_fallthru
        _
      // Predicated region
      $region29: #{_lambda_.2} parent=11 // pred_check
        %p262 = pneg %p146
      $region30: #{_lambda_.2} parent=11 // pred_check_branch
        %264 = sbr.rel (%p262) target = $region32
      $region31: #{_lambda_.2} parent=11 // pred_region
        _
      $region32: #{_lambda_.2} parent=11 // pred_fallthru
        _
      // Predicated region
      $region33: #{_lambda_.2} parent=11 // pred_check
        %p265 = pneg %p167
      $region34: #{_lambda_.2} parent=11 // pred_check_branch
        %267 = sbr.rel (%p265) target = $region36
      $region35: #{_lambda_.2} parent=11 // pred_region
        _
      $region36: #{_lambda_.2} parent=11 // pred_fallthru
        _
      // Predicated region
      $region37: #{_lambda_.2} parent=11 // pred_check
        %p268 = pneg %p188
      $region38: #{_lambda_.2} parent=11 // pred_check_branch
        %270 = sbr.rel (%p268) target = $region40
      $region39: #{_lambda_.2} parent=11 // pred_region
        _
      $region40: #{_lambda_.2} parent=11 // pred_fallthru
        _
      // Predicated region
      $region41: #{_lambda_.2} parent=11 // pred_check
        %p271 = pneg %p209
      $region42: #{_lambda_.2} parent=11 // pred_check_branch
        %273 = sbr.rel (%p271) target = $region44
      $region43: #{_lambda_.2} parent=11 // pred_region
        _
      $region44: #{_lambda_.2} parent=11 // pred_fallthru
        _
    $region12: #{_lambda_.2} parent=5 // pred_fallthru
      _
    %p274 = scmp.lt.s32.totalorder %s15, 2
    // Predicated region
    $region45: #{_lambda_.2} parent=5 // pred_check
      %p275 = pneg %p274
    $region46: #{_lambda_.2} parent=5 // pred_check_branch
      %277 = sbr.rel (%p275) target = $region48
    $region47: #{_lambda_.2} parent=5 // pred_region
      // Predicated region
      $region49: #{_lambda_.2} parent=47 // pred_check
        %p278 = pneg %p35
      $region50: #{_lambda_.2} parent=47 // pred_check_branch
        %280 = sbr.rel (%p278) target = $region52
      $region51: #{_lambda_.2} parent=47 // pred_region
        %p281 = scmp.lt.s32.totalorder %s15, 1
        %s282 = scalar_select %p281, %s15, 1
        %s283 = smul.addr %s282, 3
        %s284 = smul.addr %s283, 8
        %s285 = scalar_lea.vmem %s0, %s284
      $region52: #{_lambda_.2} parent=47 // pred_fallthru
        _
    $region48: #{_lambda_.2} parent=5 // pred_fallthru
      _
    %p286 = scmp.le.s32.totalorder 1, %s15
    %p287 = scmp.lt.s32.totalorder %s15, 3
    %p288 = pnand %p286, %p287
    %p289 = pneg %p288
    // Predicated region
    $region53: #{_lambda_.2} parent=5 // pred_check
      _
    $region54: #{_lambda_.2} parent=5 // pred_check_branch
      %291 = sbr.rel (%p288) target = $region56
    $region55: #{_lambda_.2} parent=5 // pred_region
      %s292 = ssub.s32 %s15, 1
      %p293 = scmp.lt.s32.totalorder %s20, 1
      %s294 = scalar_select %p293, %s20, 1
      %s295 = smul.addr %s294, 3
      %s296 = smul.addr %s295, 8
      %s297 = scalar_lea.vmem %s0, %s296
      %p298 = pneg %p41
      %p299 = pneg %p38
      %p300 = pneg %p62
      %p301 = pneg %p59
      %p302 = pneg %p83
      %p303 = pneg %p80
      %p304 = pneg %p104
      %p305 = pneg %p101
      %p306 = pneg %p125
      %p307 = pneg %p122
      %p308 = pneg %p146
      %p309 = pneg %p143
      %p310 = pneg %p167
      %p311 = pneg %p164
      %p312 = pneg %p188
      %p313 = pneg %p185
      %p314 = pneg %p209
      %p315 = pneg %p206
      %p316 = pneg %p235
      %p317 = pneg %p232
      %p318 = scmp.lt.s32.totalorder %s20, 1
      %s319 = scalar_select %p318, %s20, 1
      %s320 = smul.addr %s319, 2
      %s321 = smul.addr %s320, 4
      %s322 = scalar_lea.vmem %s9, %s321
      %p323 = scmp.lt.s32.totalorder %s20, 1
      %s324 = scalar_select %p323, %s20, 1
      %s325 = smul.addr %s324, 3
      %s326 = smul.addr %s325, 8
      %s327 = scalar_lea.vmem %s0, %s326
      %p328 = scmp.lt.s32.totalorder %s20, 1
      %s329 = scalar_select %p328, %s20, 1
      %s330 = smul.addr %s329, 2
      %s331 = smul.addr %s330, 4
      %s332 = scalar_lea.vmem %s9, %s331
      %v334 = vld [vmem:[%s327] sm:$0xff]
      %v335 = vld [vmem:[%s327 + $0x8] sm:$0xff]
      %v336 = vld [vmem:[%s327 + $0x10] sm:$0xff]
      %v337 = vpack.c.bf16 %v335, %v334
      %v338 = vpack.c.bf16 %v336, %v336
      %v339 = vld [vmem:[%s1] sm:$0xf]
      %v340 = vld [vmem:[%s1 + $0x4] sm:$0xf]
      %v341 = vld [vmem:[%s1 + $0x8] sm:$0xf]
      %v342 = vld [vmem:[%s1 + $0xc] sm:$0xf]
      %v343 = vld [vmem:[%s1 + $0x10] sm:$0xf]
      %v349 = vunpack.c.l.b16 %v339
      %v350 = vunpack.c.l.b16 %v340
      %v351 = vunpack.c.l.b16 %v341
      %v352 = vunpack.c.l.b16 %v342
      %v353 = vunpack.c.l.b16 %v343
      %v354 = vpack.c.b16 %v350, %v349
      %v355 = vpack.c.b16 %v352, %v351
      %v356 = vpack.c.b16 %v353, %v353
      %vm359 = vcmask 326656
      %v361 = vsel %vm359, %v337, 0
      %v364 = vsel %vm359, %v338, 0
      %vm366 = vcmask 1043456
      %v368 = vsel %vm366, %v356, 0
      %370 = vmatprep.subr.bf16.mxu0 0
      %371 = vmatpush1.bf16.msra.mxu0 0
      %372 = vmatprep.subr.bf16.mxu0 0
      %373 = vmatpush1.bf16.msra.mxu0 0
      %374 = vmatprep.subr.bf16.mxu0 0
      %375 = vmatpush1.bf16.msra.mxu0 0
      %376 = vmatprep.subr.bf16.mxu0 0
      %377 = vmatpush1.bf16.msra.mxu0 0
      %378 = vmatprep.subr.bf16.mxu0 0
      %379 = vmatpush1.bf16.msra.mxu0 0
      %380 = vmatprep.subr.bf16.mxu0 0
      %381 = vmatpush1.bf16.msra.mxu0 %v368
      %382 = vmatprep.subr.bf16.mxu0 0
      %383 = vmatpush1.bf16.msra.mxu0 %v355
      %384 = vmatprep.subr.bf16.mxu0 0
      %385 = vmatpush1.bf16.msra.mxu0 %v354
      %386 = vmatprep.subr.bf16.mxu0 0
      %387 = vmatpush2.bf16.msra.mxu0 0
      %388 = vmatprep.subr.bf16.mxu0 0
      %389 = vmatpush2.bf16.msra.mxu0 0
      %390 = vmatprep.subr.bf16.mxu0 0
      %391 = vmatpush2.bf16.msra.mxu0 0
      %392 = vmatprep.subr.bf16.mxu0 0
      %393 = vmatpush2.bf16.msra.mxu0 0
      %394 = vmatprep.subr.bf16.mxu0 0
      %395 = vmatpush2.bf16.msra.mxu0 0
      %396 = vmatprep.subr.bf16.mxu0 0
      %397 = vmatpush2.bf16.msra.mxu0 0
      %398 = vmatprep.subr.bf16.mxu0 0
      %399 = vmatpush2.bf16.msra.mxu0 0
      %400 = vmatprep.subr.bf16.mxu0 0
      %401 = vmatpush2.bf16.msra.mxu0 0
      %402 = vmatprep.mubr.bf16.mxu0 0
      %403 = vmatmul.mubr.bf16.gmra.mxu0 %v361
      %v404 = vpop.f32.mrf.mxu0
      %v405 = vadd.f32 0.0, %v404
      %v406 = vpop.f32.mrf.mxu0
      %v407 = vpop.f32.mrf.mxu0
      %v408 = vadd.f32 0.0, %v407
      %v409 = vpop.f32.mrf.mxu0
      %410 = vmatprep.mubr.bf16.mxu0 0
      %411 = vmatmul.mubr.bf16.gmra.mxu0 %v364
      %v412 = vpop.f32.mrf.mxu0
      %v413 = vadd.f32 0.0, %v412
      %v414 = vpop.f32.mrf.mxu0
      %v415 = vpop.f32.mrf.mxu0
      %v416 = vpop.f32.mrf.mxu0
      %417 = vdwg.mxu0
      %vm418 = vcmask 261120
      %v419 = vsel %vm418, %v405, 0.0
      %v420 = vsel %vm418, %v408, 0.0
      %v421 = vadd.f32 %v419, %v420
      %v422 = vsel %vm418, %v413, 0.0
      %v423 = vadd.f32 %v421, %v422
      %v424 = vrot.slane %v423, 4
      %v425 = vadd.f32 %v423, %v424
      %v426 = vrot.slane %v425, 2
      %v427 = vadd.f32 %v425, %v426
      %v428 = vrot.slane %v427, 1
      %v429 = vadd.f32 %v427, %v428
      %v430 = vrcp.pop 24.0
      %v431 = vmul.f32 %v429, %v430
      %v432 = vsub.f32 %v405, %v431
      %v433 = vsub.f32 %v408, %v431
      %v434 = vsub.f32 %v413, %v431
      %v435 = vmul.f32 %v432, %v432
      %v436 = vmul.f32 %v433, %v433
      %v437 = vmul.f32 %v434, %v434
      %v438 = vsel %vm418, %v435, 0.0
      %v439 = vsel %vm418, %v436, 0.0
      %v440 = vadd.f32 %v438, %v439
      %v441 = vsel %vm418, %v437, 0.0
      %v442 = vadd.f32 %v440, %v441
      %v443 = vrot.slane %v442, 4
      %v444 = vadd.f32 %v442, %v443
      %v445 = vrot.slane %v444, 2
      %v446 = vadd.f32 %v444, %v445
      %v447 = vrot.slane %v446, 1
      %v448 = vadd.f32 %v446, %v447
      %v449 = vmul.f32 %v448, %v430
      %v450 = vadd.f32 %v449, 1e-05
      %v451 = vrsqrt.pop %v450
      %v452 = vmul.f32 %v432, %v451
      %v453 = vmul.f32 %v433, %v451
      %v454 = vmul.f32 %v434, %v451
      %v455 = vld [vmem:[%s2] sm:$0x1]
      %v457 = vlaneseq
      %v458 = vshrl.u32 %v457, 7
      %v459 = vsub.s32 0, %v458
      %v460 = vrot.slane %v455, %v459
      %v462 = vmul.f32 %v452, %v460
      %v463 = vmul.f32 %v453, %v460
      %v464 = vmul.f32 %v454, %v460
      %v465 = vld [vmem:[%s3] sm:$0x1]
      %v467 = vlaneseq
      %v468 = vshrl.u32 %v467, 7
      %v469 = vsub.s32 0, %v468
      %v470 = vrot.slane %v465, %v469
      %v472 = vadd.f32 %v462, %v470
      %v473 = vadd.f32 %v463, %v470
      %v474 = vadd.f32 %v464, %v470
      %v475 = vmul.f32 %v472, 0.5
      %v476 = vmul.f32 %v473, 0.5
      %v477 = vmul.f32 %v474, 0.5
      %v478 = vmul.f32 %v472, 0.044715
      %v479 = vmul.f32 %v473, 0.044715
      %v480 = vmul.f32 %v474, 0.044715
      %v481 = vmul.f32 %v478, %v472
      %v482 = vmul.f32 %v479, %v473
      %v483 = vmul.f32 %v480, %v474
      %v484 = vmul.f32 %v481, %v472
      %v485 = vmul.f32 %v482, %v473
      %v486 = vmul.f32 %v483, %v474
      %v487 = vadd.f32 %v472, %v484
      %v488 = vadd.f32 %v473, %v485
      %v489 = vadd.f32 %v474, %v486
      %v490 = vmul.f32 %v487, 0.7978846
      %v491 = vmul.f32 %v488, 0.7978846
      %v492 = vmul.f32 %v489, 0.7978846
      %v493 = vtanh.pop %v490
      %v494 = vtanh.pop %v491
      %v495 = vtanh.pop %v492
      %v496 = vadd.f32 %v493, 1.0
      %v497 = vadd.f32 %v494, 1.0
      %v498 = vadd.f32 %v495, 1.0
      %v499 = vmul.f32 %v475, %v496
      %v500 = vmul.f32 %v476, %v497
      %v501 = vmul.f32 %v477, %v498
      %502 = vst.msk [vmem:[#allocation2] sm:$0xff] %vm418, %v499
      %503 = vst.msk [vmem:[#allocation2 + $0x8] sm:$0xff] %vm418, %v500
      %504 = vst.msk [vmem:[#allocation2 + $0x10] sm:$0xff] %vm418, %v501
      %v505 = vld [vmem:[#allocation2] ss:$2 sm:$0xff]
      %s506 = scalar_lea.vmem [#allocation2], 16
      %v507 = vld [vmem:[%s506] ss:$2 sm:$0x7]
      %s508 = scalar_lea.vmem [#allocation2], 1
      %v509 = vld [vmem:[%s508] ss:$2 sm:$0xff]
      %s510 = scalar_lea.vmem [#allocation2], 17
      %v511 = vld [vmem:[%s510] ss:$2 sm:$0x7]
      %s512 = scalar_lea.vmem [#allocation2], 2
      %v513 = vld [vmem:[%s512] ss:$2 sm:$0xff]
      %s514 = scalar_lea.vmem [#allocation2], 18
      %v515 = vld [vmem:[%s514] ss:$2 sm:$0x7]
      %518 = vrot.lane.b32.xlu0 %v509, 32
      %v519 = vpop.permute.xlu0 %518
      %520 = vrot.lane.b32.xlu0 %v511, 32
      %v521 = vpop.permute.xlu0 %520
      %526 = vrot.lane.b32.xlu0 %v513, 64
      %v527 = vpop.permute.xlu0 %526
      %528 = vrot.lane.b32.xlu0 %v515, 64
      %v529 = vpop.permute.xlu0 %528
      %v532 = vsel %vm418, %v505, %v519
      %v533 = vsel %vm418, %v507, %v521
      %vm534 = vcmask 523264
      %v535 = vsel %vm534, %v532, %v527
      %v536 = vsel %vm534, %v533, %v529
      %v537 = vpack.c.bf16 %v536, %v535
      %v538 = vld [vmem:[%s4] sm:$0xf]
      %v539 = vld [vmem:[%s4 + $0x4] sm:$0xf]
      %v540 = vld [vmem:[%s4 + $0x8] sm:$0xf]
      %v541 = vld [vmem:[%s4 + $0xc] sm:$0xf]
      %v542 = vld [vmem:[%s4 + $0x10] sm:$0xf]
      %v543 = vld [vmem:[%s4 + $0x14] sm:$0xf]
      %v544 = vld [vmem:[%s4 + $0x18] sm:$0xf]
      %v545 = vld [vmem:[%s4 + $0x1c] sm:$0xf]
      %v546 = vld [vmem:[%s4 + $0x20] sm:$0xf]
      %v547 = vld [vmem:[%s4 + $0x24] sm:$0xf]
      %v548 = vld [vmem:[%s4 + $0x28] sm:$0xf]
      %v549 = vld [vmem:[%s4 + $0x2c] sm:$0xf]
      %v562 = vunpack.c.l.b16 %v538
      %v563 = vunpack.c.l.b16 %v539
      %v564 = vunpack.c.l.b16 %v540
      %v565 = vunpack.c.l.b16 %v541
      %v566 = vunpack.c.l.b16 %v542
      %v567 = vunpack.c.l.b16 %v543
      %v568 = vunpack.c.l.b16 %v544
      %v569 = vunpack.c.l.b16 %v545
      %v570 = vunpack.c.l.b16 %v546
      %v571 = vunpack.c.l.b16 %v547
      %v572 = vunpack.c.l.b16 %v548
      %v573 = vunpack.c.l.b16 %v549
      %v574 = vpack.c.b16 %v563, %v562
      %v575 = vpack.c.b16 %v565, %v564
      %v576 = vpack.c.b16 %v567, %v566
      %v577 = vpack.c.b16 %v569, %v568
      %v578 = vpack.c.b16 %v571, %v570
      %v579 = vpack.c.b16 %v573, %v572
      %vm586 = vcmask 785408
      %v588 = vsel %vm586, %v537, 0
      %590 = vmatprep.subr.bf16.mxu0 0
      %591 = vmatpush1.bf16.msra.mxu0 0
      %592 = vmatprep.subr.bf16.mxu0 0
      %593 = vmatpush1.bf16.msra.mxu0 0
      %594 = vmatprep.subr.bf16.mxu0 0
      %595 = vmatpush1.bf16.msra.mxu0 %v579
      %596 = vmatprep.subr.bf16.mxu0 0
      %597 = vmatpush1.bf16.msra.mxu0 %v578
      %598 = vmatprep.subr.bf16.mxu0 0
      %599 = vmatpush1.bf16.msra.mxu0 %v577
      %600 = vmatprep.subr.bf16.mxu0 0
      %601 = vmatpush1.bf16.msra.mxu0 %v576
      %602 = vmatprep.subr.bf16.mxu0 0
      %603 = vmatpush1.bf16.msra.mxu0 %v575
      %604 = vmatprep.subr.bf16.mxu0 0
      %605 = vmatpush1.bf16.msra.mxu0 %v574
      %606 = vmatprep.subr.bf16.mxu0 0
      %607 = vmatpush2.bf16.msra.mxu0 0
      %608 = vmatprep.subr.bf16.mxu0 0
      %609 = vmatpush2.bf16.msra.mxu0 0
      %610 = vmatprep.subr.bf16.mxu0 0
      %611 = vmatpush2.bf16.msra.mxu0 0
      %612 = vmatprep.subr.bf16.mxu0 0
      %613 = vmatpush2.bf16.msra.mxu0 0
      %614 = vmatprep.subr.bf16.mxu0 0
      %615 = vmatpush2.bf16.msra.mxu0 0
      %616 = vmatprep.subr.bf16.mxu0 0
      %617 = vmatpush2.bf16.msra.mxu0 0
      %618 = vmatprep.subr.bf16.mxu0 0
      %619 = vmatpush2.bf16.msra.mxu0 0
      %620 = vmatprep.subr.bf16.mxu0 0
      %621 = vmatpush2.bf16.msra.mxu0 0
      %622 = vmatprep.mubr.bf16.mxu0 0
      %623 = vmatmul.mubr.bf16.gmra.mxu0 %v588
      %v624 = vpop.f32.mrf.mxu0
      %v625 = vadd.f32 0.0, %v624
      %v626 = vpop.f32.mrf.mxu0
      %v627 = vpop.f32.mrf.mxu0
      %v628 = vadd.f32 0.0, %v627
      %v629 = vpop.f32.mrf.mxu0
      %630 = vdwg.mxu0
      %v631 = vmul.f32 %v625, 0.5
      %v632 = vmul.f32 %v628, 0.5
      %v633 = vmul.f32 %v625, 0.044715
      %v634 = vmul.f32 %v628, 0.044715
      %v635 = vmul.f32 %v633, %v625
      %v636 = vmul.f32 %v634, %v628
      %v637 = vmul.f32 %v635, %v625
      %v638 = vmul.f32 %v636, %v628
      %v639 = vadd.f32 %v625, %v637
      %v640 = vadd.f32 %v628, %v638
      %v641 = vmul.f32 %v639, 0.7978846
      %v642 = vmul.f32 %v640, 0.7978846
      %v643 = vtanh.pop %v641
      %v644 = vtanh.pop %v642
      %v645 = vadd.f32 %v643, 1.0
      %v646 = vadd.f32 %v644, 1.0
      %v647 = vmul.f32 %v631, %v645
      %v648 = vmul.f32 %v632, %v646
      %v649 = vld [vmem:[%s5] sm:$0x1]
      %v650 = vld [vmem:[%s6] sm:$0x1]
      %v651 = vsel %vm418, %v647, 0.0
      %652 = vadd.xlane.f32.xlu0 %v651
      %v653 = vpop.xlane.xlu0 %652
      %vm654 = vcmask 256000
      %v655 = vsel %vm654, %v648, 0.0
      %656 = vadd.xlane.f32.xlu0 %v655
      %v657 = vpop.xlane.xlu0 %656
      %v658 = vrcp.pop 32.0
      %v659 = vmul.f32 %v653, %v658
      %v660 = vmul.f32 %v657, %v658
      %v661 = vsub.f32 %v647, %v659
      %v662 = vsub.f32 %v648, %v660
      %v663 = vmul.f32 %v661, %v661
      %v664 = vmul.f32 %v662, %v662
      %v665 = vsel %vm418, %v663, 0.0
      %666 = vadd.xlane.f32.xlu0 %v665
      %v667 = vpop.xlane.xlu0 %666
      %v668 = vsel %vm654, %v664, 0.0
      %669 = vadd.xlane.f32.xlu0 %v668
      %v670 = vpop.xlane.xlu0 %669
      %v671 = vmul.f32 %v667, %v658
      %v672 = vmul.f32 %v670, %v658
      %v673 = vadd.f32 %v671, 1e-05
      %v674 = vadd.f32 %v672, 1e-05
      %v675 = vrsqrt.pop %v673
      %v676 = vrsqrt.pop %v674
      %v677 = vmul.f32 %v661, %v675
      %v678 = vmul.f32 %v662, %v676
      %v680 = vlaneseq
      %v681 = vshrl.u32 %v680, 7
      %v682 = vsub.s32 0, %v681
      %v683 = vrot.slane %v649, %v682
      %v685 = vmul.f32 %v677, %v683
      %v686 = vmul.f32 %v678, %v683
      %v688 = vlaneseq
      %v689 = vshrl.u32 %v688, 7
      %v690 = vsub.s32 0, %v689
      %v691 = vrot.slane %v650, %v690
      %v693 = vadd.f32 %v685, %v691
      %v694 = vadd.f32 %v686, %v691
      %v695 = vpack.c.bf16 %v694, %v693
      %v696 = vld [vmem:[%s7] sm:$0xf]
      %v697 = vld [vmem:[%s7 + $0x4] sm:$0xf]
      %v698 = vld [vmem:[%s7 + $0x8] sm:$0xf]
      %v699 = vld [vmem:[%s7 + $0xc] sm:$0xf]
      %v700 = vld [vmem:[%s8] sm:$0x1]
      %v702 = vlaneseq
      %v703 = vshrl.u32 %v702, 7
      %v704 = vsub.s32 0, %v703
      %v705 = vrot.slane %v700, %v704
      %v711 = vunpack.c.l.b16 %v696
      %v712 = vunpack.c.l.b16 %v697
      %v713 = vunpack.c.l.b16 %v698
      %v714 = vunpack.c.l.b16 %v699
      %v715 = vpack.c.b16 %v712, %v711
      %v716 = vpack.c.b16 %v714, %v713
      %v720 = vsel %vm418, %v695, 0
      %722 = vmatprep.subr.bf16.mxu0 0
      %723 = vmatpush1.bf16.msra.mxu0 0
      %724 = vmatprep.subr.bf16.mxu0 0
      %725 = vmatpush1.bf16.msra.mxu0 0
      %726 = vmatprep.subr.bf16.mxu0 0
      %727 = vmatpush1.bf16.msra.mxu0 0
      %728 = vmatprep.subr.bf16.mxu0 0
      %729 = vmatpush1.bf16.msra.mxu0 0
      %730 = vmatprep.subr.bf16.mxu0 0
      %731 = vmatpush1.bf16.msra.mxu0 0
      %732 = vmatprep.subr.bf16.mxu0 0
      %733 = vmatpush1.bf16.msra.mxu0 0
      %734 = vmatprep.subr.bf16.mxu0 0
      %735 = vmatpush1.bf16.msra.mxu0 %v716
      %736 = vmatprep.subr.bf16.mxu0 0
      %737 = vmatpush1.bf16.msra.mxu0 %v715
      %738 = vmatprep.subr.bf16.mxu0 0
      %739 = vmatpush2.bf16.msra.mxu0 0
      %740 = vmatprep.subr.bf16.mxu0 0
      %741 = vmatpush2.bf16.msra.mxu0 0
      %742 = vmatprep.subr.bf16.mxu0 0
      %743 = vmatpush2.bf16.msra.mxu0 0
      %744 = vmatprep.subr.bf16.mxu0 0
      %745 = vmatpush2.bf16.msra.mxu0 0
      %746 = vmatprep.subr.bf16.mxu0 0
      %747 = vmatpush2.bf16.msra.mxu0 0
      %748 = vmatprep.subr.bf16.mxu0 0
      %749 = vmatpush2.bf16.msra.mxu0 0
      %750 = vmatprep.subr.bf16.mxu0 0
      %751 = vmatpush2.bf16.msra.mxu0 0
      %752 = vmatprep.subr.bf16.mxu0 0
      %753 = vmatpush2.bf16.msra.mxu0 0
      %754 = vmatprep.mubr.bf16.mxu0 0
      %755 = vmatmul.mubr.bf16.gmra.mxu0 %v720
      %v756 = vpop.f32.mrf.mxu0
      %v757 = vadd.f32 %v705, %v756
      %v758 = vpop.f32.mrf.mxu0
      %v759 = vpop.f32.mrf.mxu0
      %v760 = vadd.f32 %v705, %v759
      %v761 = vpop.f32.mrf.mxu0
      %762 = vdwg.mxu0
      %v763 = vpack.c.bf16 %v760, %v757
      %v765 = vunpack.c.l.b16 %v763
      %v766 = vunpack.c.h.b16 %v763
      %v767 = vpack.c.b16 %v765, %v765
      %v768 = vpack.c.b16 %v766, %v766
      %vm771 = vcmask 257024
      %772 = vst.msk [vmem:[%s332] sm:$0xf] %vm771, %v767
      %vm773 = vcmask 254976
      %vm774 = vsmask.f32 1280
      %vm775 = vmand %vm773, %vm774
      %v776 = vld [vmem:[%s332 + $0x4] sm:$0x3]
      %v777 = vsel %vm775, %v768, %v776
      %778 = vst [vmem:[%s332 + $0x4] sm:$0x3] %v777
      %p779 = scmp.lt.s32.totalorder %s20, 1
      %s780 = scalar_select %p779, %s20, 1
      %s781 = smul.addr %s780, 2
      %s782 = smul.addr %s781, 4
      %s783 = scalar_lea.vmem %s9, %s782
      // Predicated region
      $region57: #{_lambda_.2} parent=55 // pred_check
        %p784 = pneg %p232
      $region58: #{_lambda_.2} parent=55 // pred_check_branch
        %786 = sbr.rel (%p784) target = $region60
      $region59: #{_lambda_.2} parent=55 // pred_region
        _
      $region60: #{_lambda_.2} parent=55 // pred_fallthru
        _
    $region56: #{_lambda_.2} parent=5 // pred_fallthru
      _
    %p787 = scmp.le.s32.totalorder 2, %s15
    // Predicated region
    $region61: #{_lambda_.2} parent=5 // pred_check
      %p788 = pneg %p787
    $region62: #{_lambda_.2} parent=5 // pred_check_branch
      %790 = sbr.rel (%p788) target = $region64
    $region63: #{_lambda_.2} parent=5 // pred_region
      %s791 = ssub.s32 %s15, 2
      // Predicated region
      $region65: #{_lambda_.2} parent=63 // pred_check
        %p792 = pneg %p238
      $region66: #{_lambda_.2} parent=63 // pred_check_branch
        %794 = sbr.rel (%p792) target = $region68
      $region67: #{_lambda_.2} parent=63 // pred_region
        %p795 = scmp.lt.s32.totalorder %s21, 1
        %s796 = scalar_select %p795, %s21, 1
        %s797 = smul.addr %s796, 2
        %s798 = smul.addr %s797, 4
        %s799 = scalar_lea.vmem %s9, %s798
      $region68: #{_lambda_.2} parent=63 // pred_fallthru
        _
    $region64: #{_lambda_.2} parent=5 // pred_fallthru
      _
  $region6: #{_lambda_.2} parent=0 // loop_footer
    %s19 = sadd.s32 1, %s15
  $region7: #{_lambda_.2} parent=0 // loop_footer_branch
    %14 = sbr.rel target = $region3
  $region8: #{_lambda_.2} parent=0 // loop_exit
    _

// kernel: _lambda_.3
$region0: #{_lambda_.3}
  #allocation0 [shape = 'u32[]', space=smem, size = 0x4, offset = 0x4, fixed_abs, tag = 'smem constant byte address 0x4 - core index']
  #allocation1 [shape = 'u32[144,128]{1,0:T(1,128)}', space=vmem, size = 0x12000, scoped, tag = 'internal scratch']
  %s0 = inlined_call_operand.vmem [shape: bf16[2,11,32], index: 0, kind: input, shape index: {}]
  %s1 = inlined_call_operand.vmem [shape: bf16[96,32], index: 1, kind: input, shape index: {}]
  %s2 = inlined_call_operand.vmem [shape: f32[1,32], index: 2, kind: input, shape index: {}]
  %s3 = inlined_call_operand.vmem [shape: f32[1,32], index: 3, kind: input, shape index: {}]
  %s4 = inlined_call_operand.vmem [shape: f32[1,32], index: 4, kind: input, shape index: {}]
  %s5 = inlined_call_operand.vmem [shape: bf16[2,32,96], index: 5, kind: input, shape index: {}]
  %s6 = inlined_call_operand.vmem [shape: f32[2,1,96], index: 6, kind: input, shape index: {}]
  %s7 = inlined_call_operand.vmem [shape: bf16[2,32,32], index: 7, kind: input, shape index: {}]
  %s8 = inlined_call_operand.vmem [shape: f32[2,1,32], index: 8, kind: input, shape index: {}]
  %s9 = inlined_call_operand.vmem [shape: f32[2,1,32], index: 9, kind: input, shape index: {}]
  %s10 = inlined_call_operand.vmem [shape: f32[2,1,32], index: 10, kind: input, shape index: {}]
  %s11 = inlined_call_operand.vmem [shape: bf16[2,32,64], index: 11, kind: input, shape index: {}]
  %s12 = inlined_call_operand.vmem [shape: f32[2,1,64], index: 12, kind: input, shape index: {}]
  %s13 = inlined_call_operand.vmem [shape: bf16[2,64,32], index: 13, kind: input, shape index: {}]
  %s14 = inlined_call_operand.vmem [shape: f32[2,1,32], index: 14, kind: input, shape index: {}]
  %s15 = inlined_call_operand.vmem [shape: f32[2,1,32], index: 15, kind: input, shape index: {}]
  %s16 = inlined_call_operand.vmem [shape: f32[2,1,32], index: 16, kind: input, shape index: {}]
  %s17 = inlined_call_operand.vmem [shape: bf16[32,128], index: 17, kind: input, shape index: {}]
  %s18 = inlined_call_operand.vmem [shape: f32[1,128], index: 18, kind: input, shape index: {}]
  %s19 = inlined_call_operand.hbm [shape: f32[2,1,128], index: 19, kind: output, shape index: {}]
  %s20 = sld [smem:[#allocation0]]
  $region109: #{_lambda_.3} parent=0
    _
  %s22 = ssub.s32 1, %s20
  %s23 = scalar_select 0, %s22, %s20
  $region1: #{_lambda_.3} parent=0
    #allocation2 [shape = 'u8[1024]{0}', space=vmem, size = 0x400, scoped, tag = 'output window, operand 0']
    #allocation3 [shape = 's32[2]{0}', space=sflag, size = 0x8, scoped, tag = 'scoped memory for _lambda_.3']
    %24 = vsyncpa [#allocation3], 0
    %s25 = scalar_lea.sflag [#allocation3], 1
    %26 = vsyncpa %s25, 0
    loop: start=0, step=1, limit=4
    $region2: #{_lambda_.3} parent=1 // loop_pre_header
      _
    $region3: #{_lambda_.3} parent=1 // loop_header
      %s28 = sphi 0, %s32
      %p29 = scmp.ge.s32.totalorder %s28, 4
      %s38 = sphi 0, %s40
      %s41 = sphi 0, %s38
      %s42 = sphi 0, %s41
      %s58 = sphi 0, %s42
      %s62 = sphi 0, %s62
      %s64 = sphi 0, %s62
      %s65 = sphi 0, %s64
      %s79 = sphi 0, %s65
      %s83 = sphi 0, %s83
      %s85 = sphi 0, %s83
      %s86 = sphi 0, %s85
      %s100 = sphi 0, %s86
      %s104 = sphi 0, %s104
      %s106 = sphi 0, %s104
      %s107 = sphi 0, %s106
      %s121 = sphi 0, %s107
      %s125 = sphi 0, %s125
      %s127 = sphi 0, %s125
      %s128 = sphi 0, %s127
      %s142 = sphi 0, %s128
      %s146 = sphi 0, %s146
      %s148 = sphi 0, %s146
      %s149 = sphi 0, %s148
      %s163 = sphi 0, %s149
      %s167 = sphi 0, %s167
      %s169 = sphi 0, %s167
      %s170 = sphi 0, %s169
      %s184 = sphi 0, %s170
      %s188 = sphi 0, %s188
      %s190 = sphi 0, %s188
      %s191 = sphi 0, %s190
      %s205 = sphi 0, %s191
      %s209 = sphi 0, %s209
      %s211 = sphi 0, %s209
      %s212 = sphi 0, %s211
      %s226 = sphi 0, %s212
      %s230 = sphi 0, %s230
      %s232 = sphi 0, %s230
      %s233 = sphi 0, %s232
      %s247 = sphi 0, %s233
      %s251 = sphi 0, %s251
      %s253 = sphi 0, %s251
      %s254 = sphi 0, %s253
      %s268 = sphi 0, %s254
      %s272 = sphi 0, %s272
      %s274 = sphi 0, %s272
      %s275 = sphi 0, %s274
      %s289 = sphi 0, %s275
      %s293 = sphi 0, %s293
      %s295 = sphi 0, %s293
      %s296 = sphi 0, %s295
      %s310 = sphi 0, %s296
      %s314 = sphi 0, %s314
      %s316 = sphi 0, %s314
      %s317 = sphi 0, %s316
      %s331 = sphi 0, %s317
      %s335 = sphi 0, %s335
      %s337 = sphi 0, %s335
      %s338 = sphi 0, %s337
      %s352 = sphi 0, %s338
      %s356 = sphi 0, %s356
      %s358 = sphi 0, %s356
      %s359 = sphi 0, %s358
      %s373 = sphi 0, %s359
      %s377 = sphi 0, %s377
      %s379 = sphi 0, %s377
      %s380 = sphi 0, %s379
      %s394 = sphi 0, %s380
      %s398 = sphi 0, %s398
      %s400 = sphi 0, %s398
      %s401 = sphi 0, %s400
      %s415 = sphi 0, %s401
      %s419 = sphi 0, %s419
      %s421 = sphi 0, %s419
      %s422 = sphi 0, %s421
      %s436 = sphi 0, %s422
      %s442 = sphi 0, %s444
      %s445 = sphi 0, %s442
      %s446 = sphi 0, %s445
      %s462 = sphi 0, %s446
    $region4: #{_lambda_.3} parent=1 // loop_header_branch
      %31 = sbr.rel (%p29) target = $region8
    $region5: #{_lambda_.3} parent=1 // loop_body
      %s33 = ssub.s32 %s28, 1
      %s34 = ssub.s32 %s28, 2
      %s35 = sadd.s32 %s28, 1
      %s36 = ssub.s32 %s28, %s35
      %p37 = scmp.eq.s32.totalorder %s36, 0
      %s39 = sadd.s32 %s38, 1
      %s40 = scalar_select %p37, %s38, %s39
      %p43 = pneg %p37
      %p44 = scmp.eq.s32.totalorder %s28, 1
      %p45 = por %p43, %p44
      %p46 = scmp.ne.s32.totalorder %s38, %s41
      %p47 = scmp.eq.s32.totalorder %s28, 0
      %p48 = por %p46, %p47
      %p49 = scmp.ne.s32.totalorder %s38, %s41
      %p50 = scmp.eq.s32.totalorder %s33, 1
      %p51 = por %p49, %p50
      %p52 = scmp.ne.s32.totalorder %s41, %s42
      %p53 = scmp.eq.s32.totalorder %s33, 0
      %p54 = por %p52, %p53
      %p55 = scmp.ne.s32.totalorder %s41, %s42
      %p56 = scmp.eq.s32.totalorder %s34, 1
      %p57 = por %p55, %p56
      %p59 = scmp.ne.s32.totalorder %s42, %s58
      %p60 = scmp.eq.s32.totalorder %s34, 0
      %p61 = por %p59, %p60
      %s63 = sadd.s32 %s62, 1
      %p66 = scmp.eq.s32.totalorder %s28, 1
      %p67 = scmp.ne.s32.totalorder %s62, %s64
      %p68 = scmp.eq.s32.totalorder %s28, 0
      %p69 = por %p67, %p68
      %p70 = scmp.ne.s32.totalorder %s62, %s64
      %p71 = scmp.eq.s32.totalorder %s33, 1
      %p72 = por %p70, %p71
      %p73 = scmp.ne.s32.totalorder %s64, %s65
      %p74 = scmp.eq.s32.totalorder %s33, 0
      %p75 = por %p73, %p74
      %p76 = scmp.ne.s32.totalorder %s64, %s65
      %p77 = scmp.eq.s32.totalorder %s34, 1
      %p78 = por %p76, %p77
      %p80 = scmp.ne.s32.totalorder %s65, %s79
      %p81 = scmp.eq.s32.totalorder %s34, 0
      %p82 = por %p80, %p81
      %s84 = sadd.s32 %s83, 1
      %p87 = scmp.eq.s32.totalorder %s28, 1
      %p88 = scmp.ne.s32.totalorder %s83, %s85
      %p89 = scmp.eq.s32.totalorder %s28, 0
      %p90 = por %p88, %p89
      %p91 = scmp.ne.s32.totalorder %s83, %s85
      %p92 = scmp.eq.s32.totalorder %s33, 1
      %p93 = por %p91, %p92
      %p94 = scmp.ne.s32.totalorder %s85, %s86
      %p95 = scmp.eq.s32.totalorder %s33, 0
      %p96 = por %p94, %p95
      %p97 = scmp.ne.s32.totalorder %s85, %s86
      %p98 = scmp.eq.s32.totalorder %s34, 1
      %p99 = por %p97, %p98
      %p101 = scmp.ne.s32.totalorder %s86, %s100
      %p102 = scmp.eq.s32.totalorder %s34, 0
      %p103 = por %p101, %p102
      %s105 = sadd.s32 %s104, 1
      %p108 = scmp.eq.s32.totalorder %s28, 1
      %p109 = scmp.ne.s32.totalorder %s104, %s106
      %p110 = scmp.eq.s32.totalorder %s28, 0
      %p111 = por %p109, %p110
      %p112 = scmp.ne.s32.totalorder %s104, %s106
      %p113 = scmp.eq.s32.totalorder %s33, 1
      %p114 = por %p112, %p113
      %p115 = scmp.ne.s32.totalorder %s106, %s107
      %p116 = scmp.eq.s32.totalorder %s33, 0
      %p117 = por %p115, %p116
      %p118 = scmp.ne.s32.totalorder %s106, %s107
      %p119 = scmp.eq.s32.totalorder %s34, 1
      %p120 = por %p118, %p119
      %p122 = scmp.ne.s32.totalorder %s107, %s121
      %p123 = scmp.eq.s32.totalorder %s34, 0
      %p124 = por %p122, %p123
      %s126 = sadd.s32 %s125, 1
      %p129 = scmp.eq.s32.totalorder %s28, 1
      %p130 = scmp.ne.s32.totalorder %s125, %s127
      %p131 = scmp.eq.s32.totalorder %s28, 0
      %p132 = por %p130, %p131
      %p133 = scmp.ne.s32.totalorder %s125, %s127
      %p134 = scmp.eq.s32.totalorder %s33, 1
      %p135 = por %p133, %p134
      %p136 = scmp.ne.s32.totalorder %s127, %s128
      %p137 = scmp.eq.s32.totalorder %s33, 0
      %p138 = por %p136, %p137
      %p139 = scmp.ne.s32.totalorder %s127, %s128
      %p140 = scmp.eq.s32.totalorder %s34, 1
      %p141 = por %p139, %p140
      %p143 = scmp.ne.s32.totalorder %s128, %s142
      %p144 = scmp.eq.s32.totalorder %s34, 0
      %p145 = por %p143, %p144
      %s147 = sadd.s32 %s146, 1
      %p150 = scmp.eq.s32.totalorder %s28, 1
      %p151 = scmp.ne.s32.totalorder %s146, %s148
      %p152 = scmp.eq.s32.totalorder %s28, 0
      %p153 = por %p151, %p152
      %p154 = scmp.ne.s32.totalorder %s146, %s148
      %p155 = scmp.eq.s32.totalorder %s33, 1
      %p156 = por %p154, %p155
      %p157 = scmp.ne.s32.totalorder %s148, %s149
      %p158 = scmp.eq.s32.totalorder %s33, 0
      %p159 = por %p157, %p158
      %p160 = scmp.ne.s32.totalorder %s148, %s149
      %p161 = scmp.eq.s32.totalorder %s34, 1
      %p162 = por %p160, %p161
      %p164 = scmp.ne.s32.totalorder %s149, %s163
      %p165 = scmp.eq.s32.totalorder %s34, 0
      %p166 = por %p164, %p165
      %s168 = sadd.s32 %s167, 1
      %p171 = scmp.eq.s32.totalorder %s28, 1
      %p172 = scmp.ne.s32.totalorder %s167, %s169
      %p173 = scmp.eq.s32.totalorder %s28, 0
      %p174 = por %p172, %p173
      %p175 = scmp.ne.s32.totalorder %s167, %s169
      %p176 = scmp.eq.s32.totalorder %s33, 1
      %p177 = por %p175, %p176
      %p178 = scmp.ne.s32.totalorder %s169, %s170
      %p179 = scmp.eq.s32.totalorder %s33, 0
      %p180 = por %p178, %p179
      %p181 = scmp.ne.s32.totalorder %s169, %s170
      %p182 = scmp.eq.s32.totalorder %s34, 1
      %p183 = por %p181, %p182
      %p185 = scmp.ne.s32.totalorder %s170, %s184
      %p186 = scmp.eq.s32.totalorder %s34, 0
      %p187 = por %p185, %p186
      %s189 = sadd.s32 %s188, 1
      %p192 = scmp.eq.s32.totalorder %s28, 1
      %p193 = scmp.ne.s32.totalorder %s188, %s190
      %p194 = scmp.eq.s32.totalorder %s28, 0
      %p195 = por %p193, %p194
      %p196 = scmp.ne.s32.totalorder %s188, %s190
      %p197 = scmp.eq.s32.totalorder %s33, 1
      %p198 = por %p196, %p197
      %p199 = scmp.ne.s32.totalorder %s190, %s191
      %p200 = scmp.eq.s32.totalorder %s33, 0
      %p201 = por %p199, %p200
      %p202 = scmp.ne.s32.totalorder %s190, %s191
      %p203 = scmp.eq.s32.totalorder %s34, 1
      %p204 = por %p202, %p203
      %p206 = scmp.ne.s32.totalorder %s191, %s205
      %p207 = scmp.eq.s32.totalorder %s34, 0
      %p208 = por %p206, %p207
      %s210 = sadd.s32 %s209, 1
      %p213 = scmp.eq.s32.totalorder %s28, 1
      %p214 = scmp.ne.s32.totalorder %s209, %s211
      %p215 = scmp.eq.s32.totalorder %s28, 0
      %p216 = por %p214, %p215
      %p217 = scmp.ne.s32.totalorder %s209, %s211
      %p218 = scmp.eq.s32.totalorder %s33, 1
      %p219 = por %p217, %p218
      %p220 = scmp.ne.s32.totalorder %s211, %s212
      %p221 = scmp.eq.s32.totalorder %s33, 0
      %p222 = por %p220, %p221
      %p223 = scmp.ne.s32.totalorder %s211, %s212
      %p224 = scmp.eq.s32.totalorder %s34, 1
      %p225 = por %p223, %p224
      %p227 = scmp.ne.s32.totalorder %s212, %s226
      %p228 = scmp.eq.s32.totalorder %s34, 0
      %p229 = por %p227, %p228
      %s231 = sadd.s32 %s230, 1
      %p234 = scmp.eq.s32.totalorder %s28, 1
      %p235 = scmp.ne.s32.totalorder %s230, %s232
      %p236 = scmp.eq.s32.totalorder %s28, 0
      %p237 = por %p235, %p236
      %p238 = scmp.ne.s32.totalorder %s230, %s232
      %p239 = scmp.eq.s32.totalorder %s33, 1
      %p240 = por %p238, %p239
      %p241 = scmp.ne.s32.totalorder %s232, %s233
      %p242 = scmp.eq.s32.totalorder %s33, 0
      %p243 = por %p241, %p242
      %p244 = scmp.ne.s32.totalorder %s232, %s233
      %p245 = scmp.eq.s32.totalorder %s34, 1
      %p246 = por %p244, %p245
      %p248 = scmp.ne.s32.totalorder %s233, %s247
      %p249 = scmp.eq.s32.totalorder %s34, 0
      %p250 = por %p248, %p249
      %s252 = sadd.s32 %s251, 1
      %p255 = scmp.eq.s32.totalorder %s28, 1
      %p256 = scmp.ne.s32.totalorder %s251, %s253
      %p257 = scmp.eq.s32.totalorder %s28, 0
      %p258 = por %p256, %p257
      %p259 = scmp.ne.s32.totalorder %s251, %s253
      %p260 = scmp.eq.s32.totalorder %s33, 1
      %p261 = por %p259, %p260
      %p262 = scmp.ne.s32.totalorder %s253, %s254
      %p263 = scmp.eq.s32.totalorder %s33, 0
      %p264 = por %p262, %p263
      %p265 = scmp.ne.s32.totalorder %s253, %s254
      %p266 = scmp.eq.s32.totalorder %s34, 1
      %p267 = por %p265, %p266
      %p269 = scmp.ne.s32.totalorder %s254, %s268
      %p270 = scmp.eq.s32.totalorder %s34, 0
      %p271 = por %p269, %p270
      %s273 = sadd.s32 %s272, 1
      %p276 = scmp.eq.s32.totalorder %s28, 1
      %p277 = scmp.ne.s32.totalorder %s272, %s274
      %p278 = scmp.eq.s32.totalorder %s28, 0
      %p279 = por %p277, %p278
      %p280 = scmp.ne.s32.totalorder %s272, %s274
      %p281 = scmp.eq.s32.totalorder %s33, 1
      %p282 = por %p280, %p281
      %p283 = scmp.ne.s32.totalorder %s274, %s275
      %p284 = scmp.eq.s32.totalorder %s33, 0
      %p285 = por %p283, %p284
      %p286 = scmp.ne.s32.totalorder %s274, %s275
      %p287 = scmp.eq.s32.totalorder %s34, 1
      %p288 = por %p286, %p287
      %p290 = scmp.ne.s32.totalorder %s275, %s289
      %p291 = scmp.eq.s32.totalorder %s34, 0
      %p292 = por %p290, %p291
      %s294 = sadd.s32 %s293, 1
      %p297 = scmp.eq.s32.totalorder %s28, 1
      %p298 = scmp.ne.s32.totalorder %s293, %s295
      %p299 = scmp.eq.s32.totalorder %s28, 0
      %p300 = por %p298, %p299
      %p301 = scmp.ne.s32.totalorder %s293, %s295
      %p302 = scmp.eq.s32.totalorder %s33, 1
      %p303 = por %p301, %p302
      %p304 = scmp.ne.s32.totalorder %s295, %s296
      %p305 = scmp.eq.s32.totalorder %s33, 0
      %p306 = por %p304, %p305
      %p307 = scmp.ne.s32.totalorder %s295, %s296
      %p308 = scmp.eq.s32.totalorder %s34, 1
      %p309 = por %p307, %p308
      %p311 = scmp.ne.s32.totalorder %s296, %s310
      %p312 = scmp.eq.s32.totalorder %s34, 0
      %p313 = por %p311, %p312
      %s315 = sadd.s32 %s314, 1
      %p318 = scmp.eq.s32.totalorder %s28, 1
      %p319 = scmp.ne.s32.totalorder %s314, %s316
      %p320 = scmp.eq.s32.totalorder %s28, 0
      %p321 = por %p319, %p320
      %p322 = scmp.ne.s32.totalorder %s314, %s316
      %p323 = scmp.eq.s32.totalorder %s33, 1
      %p324 = por %p322, %p323
      %p325 = scmp.ne.s32.totalorder %s316, %s317
      %p326 = scmp.eq.s32.totalorder %s33, 0
      %p327 = por %p325, %p326
      %p328 = scmp.ne.s32.totalorder %s316, %s317
      %p329 = scmp.eq.s32.totalorder %s34, 1
      %p330 = por %p328, %p329
      %p332 = scmp.ne.s32.totalorder %s317, %s331
      %p333 = scmp.eq.s32.totalorder %s34, 0
      %p334 = por %p332, %p333
      %s336 = sadd.s32 %s335, 1
      %p339 = scmp.eq.s32.totalorder %s28, 1
      %p340 = scmp.ne.s32.totalorder %s335, %s337
      %p341 = scmp.eq.s32.totalorder %s28, 0
      %p342 = por %p340, %p341
      %p343 = scmp.ne.s32.totalorder %s335, %s337
      %p344 = scmp.eq.s32.totalorder %s33, 1
      %p345 = por %p343, %p344
      %p346 = scmp.ne.s32.totalorder %s337, %s338
      %p347 = scmp.eq.s32.totalorder %s33, 0
      %p348 = por %p346, %p347
      %p349 = scmp.ne.s32.totalorder %s337, %s338
      %p350 = scmp.eq.s32.totalorder %s34, 1
      %p351 = por %p349, %p350
      %p353 = scmp.ne.s32.totalorder %s338, %s352
      %p354 = scmp.eq.s32.totalorder %s34, 0
      %p355 = por %p353, %p354
      %s357 = sadd.s32 %s356, 1
      %p360 = scmp.eq.s32.totalorder %s28, 1
      %p361 = scmp.ne.s32.totalorder %s356, %s358
      %p362 = scmp.eq.s32.totalorder %s28, 0
      %p363 = por %p361, %p362
      %p364 = scmp.ne.s32.totalorder %s356, %s358
      %p365 = scmp.eq.s32.totalorder %s33, 1
      %p366 = por %p364, %p365
      %p367 = scmp.ne.s32.totalorder %s358, %s359
      %p368 = scmp.eq.s32.totalorder %s33, 0
      %p369 = por %p367, %p368
      %p370 = scmp.ne.s32.totalorder %s358, %s359
      %p371 = scmp.eq.s32.totalorder %s34, 1
      %p372 = por %p370, %p371
      %p374 = scmp.ne.s32.totalorder %s359, %s373
      %p375 = scmp.eq.s32.totalorder %s34, 0
      %p376 = por %p374, %p375
      %s378 = sadd.s32 %s377, 1
      %p381 = scmp.eq.s32.totalorder %s28, 1
      %p382 = scmp.ne.s32.totalorder %s377, %s379
      %p383 = scmp.eq.s32.totalorder %s28, 0
      %p384 = por %p382, %p383
      %p385 = scmp.ne.s32.totalorder %s377, %s379
      %p386 = scmp.eq.s32.totalorder %s33, 1
      %p387 = por %p385, %p386
      %p388 = scmp.ne.s32.totalorder %s379, %s380
      %p389 = scmp.eq.s32.totalorder %s33, 0
      %p390 = por %p388, %p389
      %p391 = scmp.ne.s32.totalorder %s379, %s380
      %p392 = scmp.eq.s32.totalorder %s34, 1
      %p393 = por %p391, %p392
      %p395 = scmp.ne.s32.totalorder %s380, %s394
      %p396 = scmp.eq.s32.totalorder %s34, 0
      %p397 = por %p395, %p396
      %s399 = sadd.s32 %s398, 1
      %p402 = scmp.eq.s32.totalorder %s28, 1
      %p403 = scmp.ne.s32.totalorder %s398, %s400
      %p404 = scmp.eq.s32.totalorder %s28, 0
      %p405 = por %p403, %p404
      %p406 = scmp.ne.s32.totalorder %s398, %s400
      %p407 = scmp.eq.s32.totalorder %s33, 1
      %p408 = por %p406, %p407
      %p409 = scmp.ne.s32.totalorder %s400, %s401
      %p410 = scmp.eq.s32.totalorder %s33, 0
      %p411 = por %p409, %p410
      %p412 = scmp.ne.s32.totalorder %s400, %s401
      %p413 = scmp.eq.s32.totalorder %s34, 1
      %p414 = por %p412, %p413
      %p416 = scmp.ne.s32.totalorder %s401, %s415
      %p417 = scmp.eq.s32.totalorder %s34, 0
      %p418 = por %p416, %p417
      %s420 = sadd.s32 %s419, 1
      %p423 = scmp.eq.s32.totalorder %s28, 1
      %p424 = scmp.ne.s32.totalorder %s419, %s421
      %p425 = scmp.eq.s32.totalorder %s28, 0
      %p426 = por %p424, %p425
      %p427 = scmp.ne.s32.totalorder %s419, %s421
      %p428 = scmp.eq.s32.totalorder %s33, 1
      %p429 = por %p427, %p428
      %p430 = scmp.ne.s32.totalorder %s421, %s422
      %p431 = scmp.eq.s32.totalorder %s33, 0
      %p432 = por %p430, %p431
      %p433 = scmp.ne.s32.totalorder %s421, %s422
      %p434 = scmp.eq.s32.totalorder %s34, 1
      %p435 = por %p433, %p434
      %p437 = scmp.ne.s32.totalorder %s422, %s436
      %p438 = scmp.eq.s32.totalorder %s34, 0
      %p439 = por %p437, %p438
      %s440 = ssub.s32 %s28, %s35
      %p441 = scmp.eq.s32.totalorder %s440, 0
      %s443 = sadd.s32 %s442, 1
      %s444 = scalar_select %p441, %s442, %s443
      %p447 = pneg %p441
      %p448 = scmp.eq.s32.totalorder %s28, 1
      %p449 = por %p447, %p448
      %p450 = scmp.ne.s32.totalorder %s442, %s445
      %p451 = scmp.eq.s32.totalorder %s28, 0
      %p452 = por %p450, %p451
      %p453 = scmp.ne.s32.totalorder %s442, %s445
      %p454 = scmp.eq.s32.totalorder %s33, 1
      %p455 = por %p453, %p454
      %p456 = scmp.ne.s32.totalorder %s445, %s446
      %p457 = scmp.eq.s32.totalorder %s33, 0
      %p458 = por %p456, %p457
      %p459 = scmp.ne.s32.totalorder %s445, %s446
      %p460 = scmp.eq.s32.totalorder %s34, 1
      %p461 = por %p459, %p460
      %p463 = scmp.ne.s32.totalorder %s446, %s462
      %p464 = scmp.eq.s32.totalorder %s34, 0
      %p465 = por %p463, %p464
      %p466 = scmp.le.s32.totalorder 1, %s28
      %p467 = scmp.lt.s32.totalorder %s28, 3
      %p468 = pnand %p466, %p467
      %p469 = pneg %p468
      // Predicated region
      $region9: #{_lambda_.3} parent=5 // pred_check
        _
      $region10: #{_lambda_.3} parent=5 // pred_check_branch
        %471 = sbr.rel (%p468) target = $region12
      $region11: #{_lambda_.3} parent=5 // pred_region
        %s472 = ssub.s32 %s28, 1
        // Predicated region
        $region13: #{_lambda_.3} parent=11 // pred_check
          %p473 = pneg %p75
        $region14: #{_lambda_.3} parent=11 // pred_check_branch
          %475 = sbr.rel (%p473) target = $region16
        $region15: #{_lambda_.3} parent=11 // pred_region
          _
        $region16: #{_lambda_.3} parent=11 // pred_fallthru
          _
        // Predicated region
        $region17: #{_lambda_.3} parent=11 // pred_check
          %p476 = pneg %p96
        $region18: #{_lambda_.3} parent=11 // pred_check_branch
          %478 = sbr.rel (%p476) target = $region20
        $region19: #{_lambda_.3} parent=11 // pred_region
          _
        $region20: #{_lambda_.3} parent=11 // pred_fallthru
          _
        // Predicated region
        $region21: #{_lambda_.3} parent=11 // pred_check
          %p479 = pneg %p117
        $region22: #{_lambda_.3} parent=11 // pred_check_branch
          %481 = sbr.rel (%p479) target = $region24
        $region23: #{_lambda_.3} parent=11 // pred_region
          _
        $region24: #{_lambda_.3} parent=11 // pred_fallthru
          _
        // Predicated region
        $region25: #{_lambda_.3} parent=11 // pred_check
          %p482 = pneg %p138
        $region26: #{_lambda_.3} parent=11 // pred_check_branch
          %484 = sbr.rel (%p482) target = $region28
        $region27: #{_lambda_.3} parent=11 // pred_region
          _
        $region28: #{_lambda_.3} parent=11 // pred_fallthru
          _
        // Predicated region
        $region29: #{_lambda_.3} parent=11 // pred_check
          %p485 = pneg %p159
        $region30: #{_lambda_.3} parent=11 // pred_check_branch
          %487 = sbr.rel (%p485) target = $region32
        $region31: #{_lambda_.3} parent=11 // pred_region
          _
        $region32: #{_lambda_.3} parent=11 // pred_fallthru
          _
        // Predicated region
        $region33: #{_lambda_.3} parent=11 // pred_check
          %p488 = pneg %p180
        $region34: #{_lambda_.3} parent=11 // pred_check_branch
          %490 = sbr.rel (%p488) target = $region36
        $region35: #{_lambda_.3} parent=11 // pred_region
          _
        $region36: #{_lambda_.3} parent=11 // pred_fallthru
          _
        // Predicated region
        $region37: #{_lambda_.3} parent=11 // pred_check
          %p491 = pneg %p201
        $region38: #{_lambda_.3} parent=11 // pred_check_branch
          %493 = sbr.rel (%p491) target = $region40
        $region39: #{_lambda_.3} parent=11 // pred_region
          _
        $region40: #{_lambda_.3} parent=11 // pred_fallthru
          _
        // Predicated region
        $region41: #{_lambda_.3} parent=11 // pred_check
          %p494 = pneg %p222
        $region42: #{_lambda_.3} parent=11 // pred_check_branch
          %496 = sbr.rel (%p494) target = $region44
        $region43: #{_lambda_.3} parent=11 // pred_region
          _
        $region44: #{_lambda_.3} parent=11 // pred_fallthru
          _
        // Predicated region
        $region45: #{_lambda_.3} parent=11 // pred_check
          %p497 = pneg %p243
        $region46: #{_lambda_.3} parent=11 // pred_check_branch
          %499 = sbr.rel (%p497) target = $region48
        $region47: #{_lambda_.3} parent=11 // pred_region
          _
        $region48: #{_lambda_.3} parent=11 // pred_fallthru
          _
        // Predicated region
        $region49: #{_lambda_.3} parent=11 // pred_check
          %p500 = pneg %p264
        $region50: #{_lambda_.3} parent=11 // pred_check_branch
          %502 = sbr.rel (%p500) target = $region52
        $region51: #{_lambda_.3} parent=11 // pred_region
          _
        $region52: #{_lambda_.3} parent=11 // pred_fallthru
          _
        // Predicated region
        $region53: #{_lambda_.3} parent=11 // pred_check
          %p503 = pneg %p285
        $region54: #{_lambda_.3} parent=11 // pred_check_branch
          %505 = sbr.rel (%p503) target = $region56
        $region55: #{_lambda_.3} parent=11 // pred_region
          _
        $region56: #{_lambda_.3} parent=11 // pred_fallthru
          _
        // Predicated region
        $region57: #{_lambda_.3} parent=11 // pred_check
          %p506 = pneg %p306
        $region58: #{_lambda_.3} parent=11 // pred_check_branch
          %508 = sbr.rel (%p506) target = $region60
        $region59: #{_lambda_.3} parent=11 // pred_region
          _
        $region60: #{_lambda_.3} parent=11 // pred_fallthru
          _
        // Predicated region
        $region61: #{_lambda_.3} parent=11 // pred_check
          %p509 = pneg %p327
        $region62: #{_lambda_.3} parent=11 // pred_check_branch
          %511 = sbr.rel (%p509) target = $region64
        $region63: #{_lambda_.3} parent=11 // pred_region
          _
        $region64: #{_lambda_.3} parent=11 // pred_fallthru
          _
        // Predicated region
        $region65: #{_lambda_.3} parent=11 // pred_check
          %p512 = pneg %p348
        $region66: #{_lambda_.3} parent=11 // pred_check_branch
          %514 = sbr.rel (%p512) target = $region68
        $region67: #{_lambda_.3} parent=11 // pred_region
          _
        $region68: #{_lambda_.3} parent=11 // pred_fallthru
          _
        // Predicated region
        $region69: #{_lambda_.3} parent=11 // pred_check
          %p515 = pneg %p369
        $region70: #{_lambda_.3} parent=11 // pred_check_branch
          %517 = sbr.rel (%p515) target = $region72
        $region71: #{_lambda_.3} parent=11 // pred_region
          _
        $region72: #{_lambda_.3} parent=11 // pred_fallthru
          _
        // Predicated region
        $region73: #{_lambda_.3} parent=11 // pred_check
          %p518 = pneg %p390
        $region74: #{_lambda_.3} parent=11 // pred_check_branch
          %520 = sbr.rel (%p518) target = $region76
        $region75: #{_lambda_.3} parent=11 // pred_region
          _
        $region76: #{_lambda_.3} parent=11 // pred_fallthru
          _
        // Predicated region
        $region77: #{_lambda_.3} parent=11 // pred_check
          %p521 = pneg %p411
        $region78: #{_lambda_.3} parent=11 // pred_check_branch
          %523 = sbr.rel (%p521) target = $region80
        $region79: #{_lambda_.3} parent=11 // pred_region
          _
        $region80: #{_lambda_.3} parent=11 // pred_fallthru
          _
        // Predicated region
        $region81: #{_lambda_.3} parent=11 // pred_check
          %p524 = pneg %p432
        $region82: #{_lambda_.3} parent=11 // pred_check_branch
          %526 = sbr.rel (%p524) target = $region84
        $region83: #{_lambda_.3} parent=11 // pred_region
          _
        $region84: #{_lambda_.3} parent=11 // pred_fallthru
          _
      $region12: #{_lambda_.3} parent=5 // pred_fallthru
        _
      %p527 = scmp.lt.s32.totalorder %s28, 2
      // Predicated region
      $region85: #{_lambda_.3} parent=5 // pred_check
        %p528 = pneg %p527
      $region86: #{_lambda_.3} parent=5 // pred_check_branch
        %530 = sbr.rel (%p528) target = $region88
      $region87: #{_lambda_.3} parent=5 // pred_region
        // Predicated region
        $region89: #{_lambda_.3} parent=87 // pred_check
          %p531 = pneg %p48
        $region90: #{_lambda_.3} parent=87 // pred_check_branch
          %533 = sbr.rel (%p531) target = $region92
        $region91: #{_lambda_.3} parent=87 // pred_region
          %p534 = scmp.lt.s32.totalorder %s28, 1
          %s535 = scalar_select %p534, %s28, 1
          %s536 = smul.addr %s535, 2
          %s537 = smul.addr %s536, 4
          %s538 = scalar_lea.vmem %s0, %s537
        $region92: #{_lambda_.3} parent=87 // pred_fallthru
          _
      $region88: #{_lambda_.3} parent=5 // pred_fallthru
        _
      %p539 = scmp.le.s32.totalorder 1, %s28
      %p540 = scmp.lt.s32.totalorder %s28, 3
      %p541 = pnand %p539, %p540
      %p542 = pneg %p541
      // Predicated region
      $region93: #{_lambda_.3} parent=5 // pred_check
        _
      $region94: #{_lambda_.3} parent=5 // pred_check_branch
        %544 = sbr.rel (%p541) target = $region96
      $region95: #{_lambda_.3} parent=5 // pred_region
        %s545 = ssub.s32 %s28, 1
        %p546 = scmp.lt.s32.totalorder %s33, 1
        %s547 = scalar_select %p546, %s33, 1
        %s548 = smul.addr %s547, 2
        %s549 = smul.addr %s548, 4
        %s550 = scalar_lea.vmem %s0, %s549
        %p551 = pneg %p54
        %p552 = pneg %p51
        %p553 = pneg %p75
        %p554 = pneg %p72
        %p555 = pneg %p96
        %p556 = pneg %p93
        %p557 = pneg %p117
        %p558 = pneg %p114
        %p559 = pneg %p138
        %p560 = pneg %p135
        %p561 = pneg %p159
        %p562 = pneg %p156
        %p563 = pneg %p180
        %p564 = pneg %p177
        %p565 = pneg %p201
        %p566 = pneg %p198
        %p567 = pneg %p222
        %p568 = pneg %p219
        %p569 = pneg %p243
        %p570 = pneg %p240
        %p571 = pneg %p264
        %p572 = pneg %p261
        %p573 = pneg %p285
        %p574 = pneg %p282
        %p575 = pneg %p306
        %p576 = pneg %p303
        %p577 = pneg %p327
        %p578 = pneg %p324
        %p579 = pneg %p348
        %p580 = pneg %p345
        %p581 = pneg %p369
        %p582 = pneg %p366
        %p583 = pneg %p390
        %p584 = pneg %p387
        %p585 = pneg %p411
        %p586 = pneg %p408
        %p587 = pneg %p432
        %p588 = pneg %p429
        %p589 = pneg %p458
        %p590 = pneg %p455
        %s591 = sand.u32 %s445, 1
        %s592 = scalar_lea.sflag [#allocation3], %s591
        %s593 = sand.u32 %s445, 1
        %s594 = scalar_lea.vmem [#allocation2], %s593
        %p595 = scmp.lt.s32.totalorder %s33, 1
        %s596 = scalar_select %p595, %s33, 1
        %s597 = smul.addr %s596, 2
        %s598 = smul.addr %s597, 4
        %s599 = scalar_lea.vmem %s0, %s598
        %v601 = vld [vmem:[%s599] sm:$0xf]
        %v602 = vld [vmem:[%s599 + $0x4] sm:$0x3]
        %v603 = vunpack.c.l.bf16 %v601
        %v604 = vunpack.c.l.bf16 %v602
        %vm607 = vcmask 1040384
        %v608 = vrot.slane %v603, 7
        %v609 = vrot.slane %v604, 7
        %v610 = vsel %vm607, %v608, %v609
        %v613 = vsel %vm607, 0.0, %v608
        %vm614 = vcmask 1046528
        %v615 = vrot.slane %v603, 1
        %v616 = vrot.slane %v604, 1
        %v617 = vsel %vm614, %v615, %v616
        %vm619 = vcmask 1041408
        %v620 = vsel %vm619, %v616, 0.0
        %621 = vrot.lane.b32.xlu0 %v603, 32
        %v622 = vpop.permute.xlu0 %621
        %623 = vrot.lane.b32.xlu0 %v604, 32
        %v624 = vpop.permute.xlu0 %623
        %628 = vrot.lane.b32.xlu0 %v617, 64
        %v629 = vpop.permute.xlu0 %628
        %630 = vrot.lane.b32.xlu0 %v620, 64
        %v631 = vpop.permute.xlu0 %630
        %vm634 = vcmask 261120
        %v635 = vsel %vm634, %v613, %v622
        %v636 = vsel %vm634, %v610, %v624
        %vm637 = vcmask 523264
        %v638 = vsel %vm637, %v635, %v629
        %v639 = vsel %vm637, %v636, %v631
        %v640 = vpack.c.bf16 %v639, %v638
        %v641 = vld [vmem:[%s1] sm:$0xf]
        %v642 = vld [vmem:[%s1 + $0x4] sm:$0xf]
        %v643 = vld [vmem:[%s1 + $0x8] sm:$0xf]
        %v644 = vld [vmem:[%s1 + $0xc] sm:$0xf]
        %v645 = vld [vmem:[%s1 + $0x10] sm:$0xf]
        %v646 = vld [vmem:[%s1 + $0x14] sm:$0xf]
        %v647 = vld [vmem:[%s1 + $0x18] sm:$0xf]
        %v648 = vld [vmem:[%s1 + $0x1c] sm:$0xf]
        %v649 = vld [vmem:[%s1 + $0x20] sm:$0xf]
        %v650 = vld [vmem:[%s1 + $0x24] sm:$0xf]
        %v651 = vld [vmem:[%s1 + $0x28] sm:$0xf]
        %v652 = vld [vmem:[%s1 + $0x2c] sm:$0xf]
        %v653 = vld [vmem:[%s2] sm:$0x1]
        %v655 = vlaneseq
        %v656 = vshrl.u32 %v655, 7
        %v657 = vsub.s32 0, %v656
        %v658 = vrot.slane %v653, %v657
        %v672 = vunpack.c.l.b16 %v641
        %v673 = vunpack.c.l.b16 %v642
        %v674 = vunpack.c.l.b16 %v643
        %v675 = vunpack.c.l.b16 %v644
        %v676 = vunpack.c.l.b16 %v645
        %v677 = vunpack.c.l.b16 %v646
        %v678 = vunpack.c.l.b16 %v647
        %v679 = vunpack.c.l.b16 %v648
        %v680 = vunpack.c.l.b16 %v649
        %v681 = vunpack.c.l.b16 %v650
        %v682 = vunpack.c.l.b16 %v651
        %v683 = vunpack.c.l.b16 %v652
        %v684 = vpack.c.b16 %v673, %v672
        %v685 = vpack.c.b16 %v675, %v674
        %v686 = vpack.c.b16 %v677, %v676
        %v687 = vpack.c.b16 %v679, %v678
        %v688 = vpack.c.b16 %v681, %v680
        %v689 = vpack.c.b16 %v683, %v682
        %vm696 = vcmask 785408
        %v698 = vsel %vm696, %v640, 0
        %700 = vmatprep.subr.bf16.mxu0 0
        %701 = vmatpush1.bf16.msra.mxu0 0
        %702 = vmatprep.subr.bf16.mxu0 0
        %703 = vmatpush1.bf16.msra.mxu0 0
        %704 = vmatprep.subr.bf16.mxu0 0
        %705 = vmatpush1.bf16.msra.mxu0 %v689
        %706 = vmatprep.subr.bf16.mxu0 0
        %707 = vmatpush1.bf16.msra.mxu0 %v688
        %708 = vmatprep.subr.bf16.mxu0 0
        %709 = vmatpush1.bf16.msra.mxu0 %v687
        %710 = vmatprep.subr.bf16.mxu0 0
        %711 = vmatpush1.bf16.msra.mxu0 %v686
        %712 = vmatprep.subr.bf16.mxu0 0
        %713 = vmatpush1.bf16.msra.mxu0 %v685
        %714 = vmatprep.subr.bf16.mxu0 0
        %715 = vmatpush1.bf16.msra.mxu0 %v684
        %716 = vmatprep.subr.bf16.mxu0 0
        %717 = vmatpush2.bf16.msra.mxu0 0
        %718 = vmatprep.subr.bf16.mxu0 0
        %719 = vmatpush2.bf16.msra.mxu0 0
        %720 = vmatprep.subr.bf16.mxu0 0
        %721 = vmatpush2.bf16.msra.mxu0 0
        %722 = vmatprep.subr.bf16.mxu0 0
        %723 = vmatpush2.bf16.msra.mxu0 0
        %724 = vmatprep.subr.bf16.mxu0 0
        %725 = vmatpush2.bf16.msra.mxu0 0
        %726 = vmatprep.subr.bf16.mxu0 0
        %727 = vmatpush2.bf16.msra.mxu0 0
        %728 = vmatprep.subr.bf16.mxu0 0
        %729 = vmatpush2.bf16.msra.mxu0 0
        %730 = vmatprep.subr.bf16.mxu0 0
        %731 = vmatpush2.bf16.msra.mxu0 0
        %732 = vmatprep.mubr.bf16.mxu0 0
        %733 = vmatmul.mubr.bf16.gmra.mxu0 %v698
        %v734 = vpop.f32.mrf.mxu0
        %v735 = vadd.f32 %v658, %v734
        %v736 = vpop.f32.mrf.mxu0
        %v737 = vpop.f32.mrf.mxu0
        %v738 = vadd.f32 %v658, %v737
        %v739 = vpop.f32.mrf.mxu0
        %740 = vdwg.mxu0
        %v741 = vmul.f32 %v735, 0.5
        %v742 = vmul.f32 %v738, 0.5
        %v743 = vmul.f32 %v735, 0.044715
        %v744 = vmul.f32 %v738, 0.044715
        %v745 = vmul.f32 %v743, %v735
        %v746 = vmul.f32 %v744, %v738
        %v747 = vmul.f32 %v745, %v735
        %v748 = vmul.f32 %v746, %v738
        %v749 = vadd.f32 %v735, %v747
        %v750 = vadd.f32 %v738, %v748
        %v751 = vmul.f32 %v749, 0.7978846
        %v752 = vmul.f32 %v750, 0.7978846
        %v753 = vtanh.pop %v751
        %v754 = vtanh.pop %v752
        %v755 = vadd.f32 %v753, 1.0
        %v756 = vadd.f32 %v754, 1.0
        %v757 = vmul.f32 %v741, %v755
        %v758 = vmul.f32 %v742, %v756
        %v759 = vadd.f32 %v603, %v757
        %v760 = vadd.f32 %v604, %v758
        %v761 = vld [vmem:[%s3] sm:$0x1]
        %v762 = vld [vmem:[%s4] sm:$0x1]
        %v763 = vsel %vm634, %v759, 0.0
        %764 = vadd.xlane.f32.xlu0 %v763
        %v765 = vpop.xlane.xlu0 %764
        %vm766 = vcmask 256000
        %v767 = vsel %vm766, %v760, 0.0
        %768 = vadd.xlane.f32.xlu0 %v767
        %v769 = vpop.xlane.xlu0 %768
        %v770 = vrcp.pop 32.0
        %v771 = vmul.f32 %v765, %v770
        %v772 = vmul.f32 %v769, %v770
        %v773 = vsub.f32 %v759, %v771
        %v774 = vsub.f32 %v760, %v772
        %v775 = vmul.f32 %v773, %v773
        %v776 = vmul.f32 %v774, %v774
        %v777 = vsel %vm634, %v775, 0.0
        %778 = vadd.xlane.f32.xlu0 %v777
        %v779 = vpop.xlane.xlu0 %778
        %v780 = vsel %vm766, %v776, 0.0
        %781 = vadd.xlane.f32.xlu0 %v780
        %v782 = vpop.xlane.xlu0 %781
        %v783 = vmul.f32 %v779, %v770
        %v784 = vmul.f32 %v782, %v770
        %v785 = vadd.f32 %v783, 1e-05
        %v786 = vadd.f32 %v784, 1e-05
        %v787 = vrsqrt.pop %v785
        %v788 = vrsqrt.pop %v786
        %v789 = vmul.f32 %v773, %v787
        %v790 = vmul.f32 %v774, %v788
        %v792 = vlaneseq
        %v793 = vshrl.u32 %v792, 7
        %v794 = vsub.s32 0, %v793
        %v795 = vrot.slane %v761, %v794
        %v797 = vmul.f32 %v789, %v795
        %v798 = vmul.f32 %v790, %v795
        %v800 = vlaneseq
        %v801 = vshrl.u32 %v800, 7
        %v802 = vsub.s32 0, %v801
        %v803 = vrot.slane %v762, %v802
        %v805 = vadd.f32 %v797, %v803
        %v806 = vadd.f32 %v798, %v803
        %v807 = vpack.c.bf16 %v806, %v805
        %v808 = vld [vmem:[%s5] sm:$0xf]
        %v809 = vld [vmem:[%s5 + $0x4] sm:$0xf]
        %v810 = vld [vmem:[%s5 + $0x8] sm:$0xf]
        %v811 = vld [vmem:[%s5 + $0xc] sm:$0xf]
        %v812 = vld [vmem:[%s6] sm:$0x1]
        %v814 = vlaneseq
        %v815 = vshrl.u32 %v814, 7
        %v816 = vsub.s32 0, %v815
        %v817 = vrot.slane %v812, %v816
        %v823 = vunpack.c.l.b16 %v808
        %v824 = vunpack.c.l.b16 %v809
        %v825 = vunpack.c.l.b16 %v810
        %v826 = vunpack.c.l.b16 %v811
        %v827 = vpack.c.b16 %v824, %v823
        %v828 = vpack.c.b16 %v826, %v825
        %v832 = vsel %vm634, %v807, 0
        %834 = vmatprep.subr.bf16.mxu0 0
        %835 = vmatpush1.bf16.msra.mxu0 0
        %836 = vmatprep.subr.bf16.mxu0 0
        %837 = vmatpush1.bf16.msra.mxu0 0
        %838 = vmatprep.subr.bf16.mxu0 0
        %839 = vmatpush1.bf16.msra.mxu0 0
        %840 = vmatprep.subr.bf16.mxu0 0
        %841 = vmatpush1.bf16.msra.mxu0 0
        %842 = vmatprep.subr.bf16.mxu0 0
        %843 = vmatpush1.bf16.msra.mxu0 0
        %844 = vmatprep.subr.bf16.mxu0 0
        %845 = vmatpush1.bf16.msra.mxu0 0
        %846 = vmatprep.subr.bf16.mxu0 0
        %847 = vmatpush1.bf16.msra.mxu0 %v828
        %848 = vmatprep.subr.bf16.mxu0 0
        %849 = vmatpush1.bf16.msra.mxu0 %v827
        %850 = vmatprep.subr.bf16.mxu0 0
        %851 = vmatpush2.bf16.msra.mxu0 0
        %852 = vmatprep.subr.bf16.mxu0 0
        %853 = vmatpush2.bf16.msra.mxu0 0
        %854 = vmatprep.subr.bf16.mxu0 0
        %855 = vmatpush2.bf16.msra.mxu0 0
        %856 = vmatprep.subr.bf16.mxu0 0
        %857 = vmatpush2.bf16.msra.mxu0 0
        %858 = vmatprep.subr.bf16.mxu0 0
        %859 = vmatpush2.bf16.msra.mxu0 0
        %860 = vmatprep.subr.bf16.mxu0 0
        %861 = vmatpush2.bf16.msra.mxu0 0
        %862 = vmatprep.subr.bf16.mxu0 0
        %863 = vmatpush2.bf16.msra.mxu0 0
        %864 = vmatprep.subr.bf16.mxu0 0
        %865 = vmatpush2.bf16.msra.mxu0 0
        %866 = vmatprep.mubr.bf16.mxu0 0
        %867 = vmatmul.mubr.bf16.gmra.mxu0 %v832
        %v868 = vpop.f32.mrf.mxu0
        %v869 = vadd.f32 %v817, %v868
        %v870 = vpop.f32.mrf.mxu0
        %v871 = vpop.f32.mrf.mxu0
        %v872 = vadd.f32 %v817, %v871
        %v873 = vpop.f32.mrf.mxu0
        %874 = vdwg.mxu0
        %v875 = vpack.c.bf16 %v872, %v869
        %877 = vrot.lane.b32.xlu0 %v875, 120
        %v878 = vpop.permute.xlu0 %877
        %879 = vrot.lane.b32.xlu0 %v875, 112
        %v880 = vpop.permute.xlu0 %879
        %881 = vrot.lane.b32.xlu0 %v875, 104
        %v882 = vpop.permute.xlu0 %881
        %883 = vrot.lane.b32.xlu0 %v875, 96
        %v884 = vpop.permute.xlu0 %883
        %vm885 = vcmask 64512
        %v887 = vsel %vm885, %v875, 0
        %v890 = vsel %vm885, %v884, 0
        %892 = vmatprep.subr.bf16.mxu0 0
        %893 = vmatpush1.bf16.xpose.msra.mxu0 0
        %894 = vmatprep.subr.bf16.mxu0 0
        %895 = vmatpush1.bf16.xpose.msra.mxu0 0
        %896 = vmatprep.subr.bf16.mxu0 0
        %897 = vmatpush1.bf16.xpose.msra.mxu0 0
        %898 = vmatprep.subr.bf16.mxu0 0
        %899 = vmatpush1.bf16.xpose.msra.mxu0 0
        %900 = vmatprep.subr.bf16.mxu0 0
        %901 = vmatpush1.bf16.xpose.msra.mxu0 0
        %902 = vmatprep.subr.bf16.mxu0 0
        %903 = vmatpush1.bf16.xpose.msra.mxu0 0
        %904 = vmatprep.subr.bf16.mxu0 0
        %905 = vmatpush1.bf16.xpose.msra.mxu0 0
        %906 = vmatprep.subr.bf16.mxu0 0
        %907 = vmatpush1.bf16.xpose.msra.mxu0 %v890
        %908 = vmatprep.subr.bf16.mxu0 0
        %909 = vmatpush2.bf16.xpose.msra.mxu0 0
        %910 = vmatprep.subr.bf16.mxu0 0
        %911 = vmatpush2.bf16.xpose.msra.mxu0 0
        %912 = vmatprep.subr.bf16.mxu0 0
        %913 = vmatpush2.bf16.xpose.msra.mxu0 0
        %914 = vmatprep.subr.bf16.mxu0 0
        %915 = vmatpush2.bf16.xpose.msra.mxu0 0
        %916 = vmatprep.subr.bf16.mxu0 0
        %917 = vmatpush2.bf16.xpose.msra.mxu0 0
        %918 = vmatprep.subr.bf16.mxu0 0
        %919 = vmatpush2.bf16.xpose.msra.mxu0 0
        %920 = vmatprep.subr.bf16.mxu0 0
        %921 = vmatpush2.bf16.xpose.msra.mxu0 0
        %922 = vmatprep.subr.bf16.mxu0 0
        %923 = vmatpush2.bf16.xpose.msra.mxu0 0
        %924 = vmatprep.mubr.bf16.mxu0 0
        %925 = vmatmul.mubr.bf16.gmra.mxu0 %v887
        %v926 = vpop.f32.mrf.mxu0
        %v927 = vadd.f32 0.0, %v926
        %v928 = vpop.f32.mrf.mxu0
        %v929 = vpop.f32.mrf.mxu0
        %v930 = vadd.f32 0.0, %v929
        %v931 = vpop.f32.mrf.mxu0
        %932 = vdwg.mxu0
        %933 = vrot.lane.b32.xlu0 %v878, 96
        %v934 = vpop.permute.xlu0 %933
        %v936 = vsel %vm885, %v878, 0
        %v939 = vsel %vm885, %v934, 0
        %941 = vmatprep.subr.bf16.mxu0 0
        %942 = vmatpush1.bf16.xpose.msra.mxu0 0
        %943 = vmatprep.subr.bf16.mxu0 0
        %944 = vmatpush1.bf16.xpose.msra.mxu0 0
        %945 = vmatprep.subr.bf16.mxu0 0
        %946 = vmatpush1.bf16.xpose.msra.mxu0 0
        %947 = vmatprep.subr.bf16.mxu0 0
        %948 = vmatpush1.bf16.xpose.msra.mxu0 0
        %949 = vmatprep.subr.bf16.mxu0 0
        %950 = vmatpush1.bf16.xpose.msra.mxu0 0
        %951 = vmatprep.subr.bf16.mxu0 0
        %952 = vmatpush1.bf16.xpose.msra.mxu0 0
        %953 = vmatprep.subr.bf16.mxu0 0
        %954 = vmatpush1.bf16.xpose.msra.mxu0 0
        %955 = vmatprep.subr.bf16.mxu0 0
        %956 = vmatpush1.bf16.xpose.msra.mxu0 %v939
        %957 = vmatprep.subr.bf16.mxu0 0
        %958 = vmatpush2.bf16.xpose.msra.mxu0 0
        %959 = vmatprep.subr.bf16.mxu0 0
        %960 = vmatpush2.bf16.xpose.msra.mxu0 0
        %961 = vmatprep.subr.bf16.mxu0 0
        %962 = vmatpush2.bf16.xpose.msra.mxu0 0
        %963 = vmatprep.subr.bf16.mxu0 0
        %964 = vmatpush2.bf16.xpose.msra.mxu0 0
        %965 = vmatprep.subr.bf16.mxu0 0
        %966 = vmatpush2.bf16.xpose.msra.mxu0 0
        %967 = vmatprep.subr.bf16.mxu0 0
        %968 = vmatpush2.bf16.xpose.msra.mxu0 0
        %969 = vmatprep.subr.bf16.mxu0 0
        %970 = vmatpush2.bf16.xpose.msra.mxu0 0
        %971 = vmatprep.subr.bf16.mxu0 0
        %972 = vmatpush2.bf16.xpose.msra.mxu0 0
        %973 = vmatprep.mubr.bf16.mxu0 0
        %974 = vmatmul.mubr.bf16.gmra.mxu0 %v936
        %v975 = vpop.f32.mrf.mxu0
        %v976 = vadd.f32 0.0, %v975
        %v977 = vpop.f32.mrf.mxu0
        %v978 = vpop.f32.mrf.mxu0
        %v979 = vadd.f32 0.0, %v978
        %v980 = vpop.f32.mrf.mxu0
        %981 = vdwg.mxu0
        %982 = vrot.lane.b32.xlu0 %v880, 96
        %v983 = vpop.permute.xlu0 %982
        %v985 = vsel %vm885, %v880, 0
        %v988 = vsel %vm885, %v983, 0
        %990 = vmatprep.subr.bf16.mxu0 0
        %991 = vmatpush1.bf16.xpose.msra.mxu0 0
        %992 = vmatprep.subr.bf16.mxu0 0
        %993 = vmatpush1.bf16.xpose.msra.mxu0 0
        %994 = vmatprep.subr.bf16.mxu0 0
        %995 = vmatpush1.bf16.xpose.msra.mxu0 0
        %996 = vmatprep.subr.bf16.mxu0 0
        %997 = vmatpush1.bf16.xpose.msra.mxu0 0
        %998 = vmatprep.subr.bf16.mxu0 0
        %999 = vmatpush1.bf16.xpose.msra.mxu0 0
        %1000 = vmatprep.subr.bf16.mxu0 0
        %1001 = vmatpush1.bf16.xpose.msra.mxu0 0
        %1002 = vmatprep.subr.bf16.mxu0 0
        %1003 = vmatpush1.bf16.xpose.msra.mxu0 0
        %1004 = vmatprep.subr.bf16.mxu0 0
        %1005 = vmatpush1.bf16.xpose.msra.mxu0 %v988
        %1006 = vmatprep.subr.bf16.mxu0 0
        %1007 = vmatpush2.bf16.xpose.msra.mxu0 0
        %1008 = vmatprep.subr.bf16.mxu0 0
        %1009 = vmatpush2.bf16.xpose.msra.mxu0 0
        %1010 = vmatprep.subr.bf16.mxu0 0
        %1011 = vmatpush2.bf16.xpose.msra.mxu0 0
        %1012 = vmatprep.subr.bf16.mxu0 0
        %1013 = vmatpush2.bf16.xpose.msra.mxu0 0
        %1014 = vmatprep.subr.bf16.mxu0 0
        %1015 = vmatpush2.bf16.xpose.msra.mxu0 0
        %1016 = vmatprep.subr.bf16.mxu0 0
        %1017 = vmatpush2.bf16.xpose.msra.mxu0 0
        %1018 = vmatprep.subr.bf16.mxu0 0
        %1019 = vmatpush2.bf16.xpose.msra.mxu0 0
        %1020 = vmatprep.subr.bf16.mxu0 0
        %1021 = vmatpush2.bf16.xpose.msra.mxu0 0
        %1022 = vmatprep.mubr.bf16.mxu0 0
        %1023 = vmatmul.mubr.bf16.gmra.mxu0 %v985
        %v1024 = vpop.f32.mrf.mxu0
        %v1025 = vadd.f32 0.0, %v1024
        %v1026 = vpop.f32.mrf.mxu0
        %v1027 = vpop.f32.mrf.mxu0
        %v1028 = vadd.f32 0.0, %v1027
        %v1029 = vpop.f32.mrf.mxu0
        %1030 = vdwg.mxu0
        %1031 = vrot.lane.b32.xlu0 %v882, 96
        %v1032 = vpop.permute.xlu0 %1031
        %v1034 = vsel %vm885, %v882, 0
        %v1037 = vsel %vm885, %v1032, 0
        %1039 = vmatprep.subr.bf16.mxu0 0
        %1040 = vmatpush1.bf16.xpose.msra.mxu0 0
        %1041 = vmatprep.subr.bf16.mxu0 0
        %1042 = vmatpush1.bf16.xpose.msra.mxu0 0
        %1043 = vmatprep.subr.bf16.mxu0 0
        %1044 = vmatpush1.bf16.xpose.msra.mxu0 0
        %1045 = vmatprep.subr.bf16.mxu0 0
        %1046 = vmatpush1.bf16.xpose.msra.mxu0 0
        %1047 = vmatprep.subr.bf16.mxu0 0
        %1048 = vmatpush1.bf16.xpose.msra.mxu0 0
        %1049 = vmatprep.subr.bf16.mxu0 0
        %1050 = vmatpush1.bf16.xpose.msra.mxu0 0
        %1051 = vmatprep.subr.bf16.mxu0 0
        %1052 = vmatpush1.bf16.xpose.msra.mxu0 0
        %1053 = vmatprep.subr.bf16.mxu0 0
        %1054 = vmatpush1.bf16.xpose.msra.mxu0 %v1037
        %1055 = vmatprep.subr.bf16.mxu0 0
        %1056 = vmatpush2.bf16.xpose.msra.mxu0 0
        %1057 = vmatprep.subr.bf16.mxu0 0
        %1058 = vmatpush2.bf16.xpose.msra.mxu0 0
        %1059 = vmatprep.subr.bf16.mxu0 0
        %1060 = vmatpush2.bf16.xpose.msra.mxu0 0
        %1061 = vmatprep.subr.bf16.mxu0 0
        %1062 = vmatpush2.bf16.xpose.msra.mxu0 0
        %1063 = vmatprep.subr.bf16.mxu0 0
        %1064 = vmatpush2.bf16.xpose.msra.mxu0 0
        %1065 = vmatprep.subr.bf16.mxu0 0
        %1066 = vmatpush2.bf16.xpose.msra.mxu0 0
        %1067 = vmatprep.subr.bf16.mxu0 0
        %1068 = vmatpush2.bf16.xpose.msra.mxu0 0
        %1069 = vmatprep.subr.bf16.mxu0 0
        %1070 = vmatpush2.bf16.xpose.msra.mxu0 0
        %1071 = vmatprep.mubr.bf16.mxu0 0
        %1072 = vmatmul.mubr.bf16.gmra.mxu0 %v1034
        %v1073 = vpop.f32.mrf.mxu0
        %v1074 = vadd.f32 0.0, %v1073
        %v1075 = vpop.f32.mrf.mxu0
        %v1076 = vpop.f32.mrf.mxu0
        %v1077 = vadd.f32 0.0, %v1076
        %v1078 = vpop.f32.mrf.mxu0
        %1079 = vdwg.mxu0
        %v1080 = vmul.f32 %v927, 0.35355338
        %v1081 = vmul.f32 %v930, 0.35355338
        %v1082 = vmul.f32 %v976, 0.35355338
        %v1083 = vmul.f32 %v979, 0.35355338
        %v1084 = vmul.f32 %v1025, 0.35355338
        %v1085 = vmul.f32 %v1028, 0.35355338
        %v1086 = vmul.f32 %v1074, 0.35355338
        %v1087 = vmul.f32 %v1077, 0.35355338
        %vm1088 = vcmask 89088
        %v1089 = vsel %vm1088, %v1080, -inf
        %1090 = vmax.xlane.f32.xlu0 %v1089
        %v1091 = vpop.xlane.xlu0 %1090
        %vm1092 = vcmask 83968
        %v1093 = vsel %vm1092, %v1081, -inf
        %1094 = vmax.xlane.f32.xlu0 %v1093
        %v1095 = vpop.xlane.xlu0 %1094
        %v1096 = vsel %vm1088, %v1082, -inf
        %1097 = vmax.xlane.f32.xlu0 %v1096
        %v1098 = vpop.xlane.xlu0 %1097
        %v1099 = vsel %vm1092, %v1083, -inf
        %1100 = vmax.xlane.f32.xlu0 %v1099
        %v1101 = vpop.xlane.xlu0 %1100
        %v1102 = vsel %vm1088, %v1084, -inf
        %1103 = vmax.xlane.f32.xlu0 %v1102
        %v1104 = vpop.xlane.xlu0 %1103
        %v1105 = vsel %vm1092, %v1085, -inf
        %1106 = vmax.xlane.f32.xlu0 %v1105
        %v1107 = vpop.xlane.xlu0 %1106
        %v1108 = vsel %vm1088, %v1086, -inf
        %1109 = vmax.xlane.f32.xlu0 %v1108
        %v1110 = vpop.xlane.xlu0 %1109
        %v1111 = vsel %vm1092, %v1087, -inf
        %1112 = vmax.xlane.f32.xlu0 %v1111
        %v1113 = vpop.xlane.xlu0 %1112
        %v1114 = vsub.f32 %v1080, %v1091
        %v1115 = vsub.f32 %v1081, %v1095
        %v1116 = vsub.f32 %v1082, %v1098
        %v1117 = vsub.f32 %v1083, %v1101
        %v1118 = vsub.f32 %v1084, %v1104
        %v1119 = vsub.f32 %v1085, %v1107
        %v1120 = vsub.f32 %v1086, %v1110
        %v1121 = vsub.f32 %v1087, %v1113
        %v1122 = vmul.f32 %v1114, 1.442695
        %v1123 = vpow.pop %v1122
        %v1124 = vmul.f32 %v1115, 1.442695
        %v1125 = vpow.pop %v1124
        %v1126 = vmul.f32 %v1116, 1.442695
        %v1127 = vpow.pop %v1126
        %v1128 = vmul.f32 %v1117, 1.442695
        %v1129 = vpow.pop %v1128
        %v1130 = vmul.f32 %v1118, 1.442695
        %v1131 = vpow.pop %v1130
        %v1132 = vmul.f32 %v1119, 1.442695
        %v1133 = vpow.pop %v1132
        %v1134 = vmul.f32 %v1120, 1.442695
        %v1135 = vpow.pop %v1134
        %v1136 = vmul.f32 %v1121, 1.442695
        %v1137 = vpow.pop %v1136
        %v1138 = vsel %vm1088, %v1123, 0.0
        %1139 = vadd.xlane.f32.xlu0 %v1138
        %v1140 = vpop.xlane.xlu0 %1139
        %v1141 = vsel %vm1092, %v1125, 0.0
        %1142 = vadd.xlane.f32.xlu0 %v1141
        %v1143 = vpop.xlane.xlu0 %1142
        %v1144 = vsel %vm1088, %v1127, 0.0
        %1145 = vadd.xlane.f32.xlu0 %v1144
        %v1146 = vpop.xlane.xlu0 %1145
        %v1147 = vsel %vm1092, %v1129, 0.0
        %1148 = vadd.xlane.f32.xlu0 %v1147
        %v1149 = vpop.xlane.xlu0 %1148
        %v1150 = vsel %vm1088, %v1131, 0.0
        %1151 = vadd.xlane.f32.xlu0 %v1150
        %v1152 = vpop.xlane.xlu0 %1151
        %v1153 = vsel %vm1092, %v1133, 0.0
        %1154 = vadd.xlane.f32.xlu0 %v1153
        %v1155 = vpop.xlane.xlu0 %1154
        %v1156 = vsel %vm1088, %v1135, 0.0
        %1157 = vadd.xlane.f32.xlu0 %v1156
        %v1158 = vpop.xlane.xlu0 %1157
        %v1159 = vsel %vm1092, %v1137, 0.0
        %1160 = vadd.xlane.f32.xlu0 %v1159
        %v1161 = vpop.xlane.xlu0 %1160
        %v1162 = vrcp.pop %v1140
        %v1163 = vrcp.pop %v1143
        %v1164 = vrcp.pop %v1146
        %v1165 = vrcp.pop %v1149
        %v1166 = vrcp.pop %v1152
        %v1167 = vrcp.pop %v1155
        %v1168 = vrcp.pop %v1158
        %v1169 = vrcp.pop %v1161
        %v1170 = vmul.f32 %v1123, %v1162
        %v1171 = vmul.f32 %v1125, %v1163
        %v1172 = vmul.f32 %v1127, %v1164
        %v1173 = vmul.f32 %v1129, %v1165
        %v1174 = vmul.f32 %v1131, %v1166
        %v1175 = vmul.f32 %v1133, %v1167
        %v1176 = vmul.f32 %v1135, %v1168
        %v1177 = vmul.f32 %v1137, %v1169
        %v1178 = vpack.c.bf16 %v1171, %v1170
        %v1179 = vpack.c.bf16 %v1173, %v1172
        %v1180 = vpack.c.bf16 %v1175, %v1174
        %v1181 = vpack.c.bf16 %v1177, %v1176
        %1182 = vrot.lane.b32.xlu0 %v875, 64
        %v1183 = vpop.permute.xlu0 %1182
        %v1185 = vsel %vm1088, %v1178, 0
        %vm1187 = vcmask 1044480
        %vm1188 = vcmask 1045504
        %v1189 = vsel %vm1187, 4294967295, 65535
        %v1190 = vsel %vm1188, %v1189, 0
        %v1192 = vand.u32 %v1183, %v1190
        %1194 = vmatprep.subr.bf16.mxu0 0
        %1195 = vmatpush1.bf16.msra.mxu0 0
        %1196 = vmatprep.subr.bf16.mxu0 0
        %1197 = vmatpush1.bf16.msra.mxu0 0
        %1198 = vmatprep.subr.bf16.mxu0 0
        %1199 = vmatpush1.bf16.msra.mxu0 0
        %1200 = vmatprep.subr.bf16.mxu0 0
        %1201 = vmatpush1.bf16.msra.mxu0 0
        %1202 = vmatprep.subr.bf16.mxu0 0
        %1203 = vmatpush1.bf16.msra.mxu0 0
        %1204 = vmatprep.subr.bf16.mxu0 0
        %1205 = vmatpush1.bf16.msra.mxu0 0
        %1206 = vmatprep.subr.bf16.mxu0 0
        %1207 = vmatpush1.bf16.msra.mxu0 0
        %1208 = vmatprep.subr.bf16.mxu0 0
        %1209 = vmatpush1.bf16.msra.mxu0 %v1192
        %1210 = vmatprep.subr.bf16.mxu0 0
        %1211 = vmatpush2.bf16.msra.mxu0 0
        %1212 = vmatprep.subr.bf16.mxu0 0
        %1213 = vmatpush2.bf16.msra.mxu0 0
        %1214 = vmatprep.subr.bf16.mxu0 0
        %1215 = vmatpush2.bf16.msra.mxu0 0
        %1216 = vmatprep.subr.bf16.mxu0 0
        %1217 = vmatpush2.bf16.msra.mxu0 0
        %1218 = vmatprep.subr.bf16.mxu0 0
        %1219 = vmatpush2.bf16.msra.mxu0 0
        %1220 = vmatprep.subr.bf16.mxu0 0
        %1221 = vmatpush2.bf16.msra.mxu0 0
        %1222 = vmatprep.subr.bf16.mxu0 0
        %1223 = vmatpush2.bf16.msra.mxu0 0
        %1224 = vmatprep.subr.bf16.mxu0 0
        %1225 = vmatpush2.bf16.msra.mxu0 0
        %1226 = vmatprep.mubr.bf16.mxu0 0
        %1227 = vmatmul.mubr.bf16.gmra.mxu0 %v1185
        %v1228 = vpop.f32.mrf.mxu0
        %v1229 = vadd.f32 0.0, %v1228
        %v1230 = vpop.f32.mrf.mxu0
        %v1231 = vpop.f32.mrf.mxu0
        %v1232 = vadd.f32 0.0, %v1231
        %v1233 = vpop.f32.mrf.mxu0
        %1234 = vdwg.mxu0
        %1235 = vrot.lane.b32.xlu0 %v878, 64
        %v1236 = vpop.permute.xlu0 %1235
        %v1238 = vsel %vm1088, %v1179, 0
        %v1241 = vand.u32 %v1236, %v1190
        %1243 = vmatprep.subr.bf16.mxu0 0
        %1244 = vmatpush1.bf16.msra.mxu0 0
        %1245 = vmatprep.subr.bf16.mxu0 0
        %1246 = vmatpush1.bf16.msra.mxu0 0
        %1247 = vmatprep.subr.bf16.mxu0 0
        %1248 = vmatpush1.bf16.msra.mxu0 0
        %1249 = vmatprep.subr.bf16.mxu0 0
        %1250 = vmatpush1.bf16.msra.mxu0 0
        %1251 = vmatprep.subr.bf16.mxu0 0
        %1252 = vmatpush1.bf16.msra.mxu0 0
        %1253 = vmatprep.subr.bf16.mxu0 0
        %1254 = vmatpush1.bf16.msra.mxu0 0
        %1255 = vmatprep.subr.bf16.mxu0 0
        %1256 = vmatpush1.bf16.msra.mxu0 0
        %1257 = vmatprep.subr.bf16.mxu0 0
        %1258 = vmatpush1.bf16.msra.mxu0 %v1241
        %1259 = vmatprep.subr.bf16.mxu0 0
        %1260 = vmatpush2.bf16.msra.mxu0 0
        %1261 = vmatprep.subr.bf16.mxu0 0
        %1262 = vmatpush2.bf16.msra.mxu0 0
        %1263 = vmatprep.subr.bf16.mxu0 0
        %1264 = vmatpush2.bf16.msra.mxu0 0
        %1265 = vmatprep.subr.bf16.mxu0 0
        %1266 = vmatpush2.bf16.msra.mxu0 0
        %1267 = vmatprep.subr.bf16.mxu0 0
        %1268 = vmatpush2.bf16.msra.mxu0 0
        %1269 = vmatprep.subr.bf16.mxu0 0
        %1270 = vmatpush2.bf16.msra.mxu0 0
        %1271 = vmatprep.subr.bf16.mxu0 0
        %1272 = vmatpush2.bf16.msra.mxu0 0
        %1273 = vmatprep.subr.bf16.mxu0 0
        %1274 = vmatpush2.bf16.msra.mxu0 0
        %1275 = vmatprep.mubr.bf16.mxu0 0
        %1276 = vmatmul.mubr.bf16.gmra.mxu0 %v1238
        %v1277 = vpop.f32.mrf.mxu0
        %v1278 = vadd.f32 0.0, %v1277
        %v1279 = vpop.f32.mrf.mxu0
        %v1280 = vpop.f32.mrf.mxu0
        %v1281 = vadd.f32 0.0, %v1280
        %v1282 = vpop.f32.mrf.mxu0
        %1283 = vdwg.mxu0
        %1284 = vrot.lane.b32.xlu0 %v880, 64
        %v1285 = vpop.permute.xlu0 %1284
        %v1287 = vsel %vm1088, %v1180, 0
        %v1290 = vand.u32 %v1285, %v1190
        %1292 = vmatprep.subr.bf16.mxu0 0
        %1293 = vmatpush1.bf16.msra.mxu0 0
        %1294 = vmatprep.subr.bf16.mxu0 0
        %1295 = vmatpush1.bf16.msra.mxu0 0
        %1296 = vmatprep.subr.bf16.mxu0 0
        %1297 = vmatpush1.bf16.msra.mxu0 0
        %1298 = vmatprep.subr.bf16.mxu0 0
        %1299 = vmatpush1.bf16.msra.mxu0 0
        %1300 = vmatprep.subr.bf16.mxu0 0
        %1301 = vmatpush1.bf16.msra.mxu0 0
        %1302 = vmatprep.subr.bf16.mxu0 0
        %1303 = vmatpush1.bf16.msra.mxu0 0
        %1304 = vmatprep.subr.bf16.mxu0 0
        %1305 = vmatpush1.bf16.msra.mxu0 0
        %1306 = vmatprep.subr.bf16.mxu0 0
        %1307 = vmatpush1.bf16.msra.mxu0 %v1290
        %1308 = vmatprep.subr.bf16.mxu0 0
        %1309 = vmatpush2.bf16.msra.mxu0 0
        %1310 = vmatprep.subr.bf16.mxu0 0
        %1311 = vmatpush2.bf16.msra.mxu0 0
        %1312 = vmatprep.subr.bf16.mxu0 0
        %1313 = vmatpush2.bf16.msra.mxu0 0
        %1314 = vmatprep.subr.bf16.mxu0 0
        %1315 = vmatpush2.bf16.msra.mxu0 0
        %1316 = vmatprep.subr.bf16.mxu0 0
        %1317 = vmatpush2.bf16.msra.mxu0 0
        %1318 = vmatprep.subr.bf16.mxu0 0
        %1319 = vmatpush2.bf16.msra.mxu0 0
        %1320 = vmatprep.subr.bf16.mxu0 0
        %1321 = vmatpush2.bf16.msra.mxu0 0
        %1322 = vmatprep.subr.bf16.mxu0 0
        %1323 = vmatpush2.bf16.msra.mxu0 0
        %1324 = vmatprep.mubr.bf16.mxu0 0
        %1325 = vmatmul.mubr.bf16.gmra.mxu0 %v1287
        %v1326 = vpop.f32.mrf.mxu0
        %v1327 = vadd.f32 0.0, %v1326
        %v1328 = vpop.f32.mrf.mxu0
        %v1329 = vpop.f32.mrf.mxu0
        %v1330 = vadd.f32 0.0, %v1329
        %v1331 = vpop.f32.mrf.mxu0
        %1332 = vdwg.mxu0
        %1333 = vrot.lane.b32.xlu0 %v882, 64
        %v1334 = vpop.permute.xlu0 %1333
        %v1336 = vsel %vm1088, %v1181, 0
        %v1339 = vand.u32 %v1334, %v1190
        %1341 = vmatprep.subr.bf16.mxu0 0
        %1342 = vmatpush1.bf16.msra.mxu0 0
        %1343 = vmatprep.subr.bf16.mxu0 0
        %1344 = vmatpush1.bf16.msra.mxu0 0
        %1345 = vmatprep.subr.bf16.mxu0 0
        %1346 = vmatpush1.bf16.msra.mxu0 0
        %1347 = vmatprep.subr.bf16.mxu0 0
        %1348 = vmatpush1.bf16.msra.mxu0 0
        %1349 = vmatprep.subr.bf16.mxu0 0
        %1350 = vmatpush1.bf16.msra.mxu0 0
        %1351 = vmatprep.subr.bf16.mxu0 0
        %1352 = vmatpush1.bf16.msra.mxu0 0
        %1353 = vmatprep.subr.bf16.mxu0 0
        %1354 = vmatpush1.bf16.msra.mxu0 0
        %1355 = vmatprep.subr.bf16.mxu0 0
        %1356 = vmatpush1.bf16.msra.mxu0 %v1339
        %1357 = vmatprep.subr.bf16.mxu0 0
        %1358 = vmatpush2.bf16.msra.mxu0 0
        %1359 = vmatprep.subr.bf16.mxu0 0
        %1360 = vmatpush2.bf16.msra.mxu0 0
        %1361 = vmatprep.subr.bf16.mxu0 0
        %1362 = vmatpush2.bf16.msra.mxu0 0
        %1363 = vmatprep.subr.bf16.mxu0 0
        %1364 = vmatpush2.bf16.msra.mxu0 0
        %1365 = vmatprep.subr.bf16.mxu0 0
        %1366 = vmatpush2.bf16.msra.mxu0 0
        %1367 = vmatprep.subr.bf16.mxu0 0
        %1368 = vmatpush2.bf16.msra.mxu0 0
        %1369 = vmatprep.subr.bf16.mxu0 0
        %1370 = vmatpush2.bf16.msra.mxu0 0
        %1371 = vmatprep.subr.bf16.mxu0 0
        %1372 = vmatpush2.bf16.msra.mxu0 0
        %1373 = vmatprep.mubr.bf16.mxu0 0
        %1374 = vmatmul.mubr.bf16.gmra.mxu0 %v1336
        %v1375 = vpop.f32.mrf.mxu0
        %v1376 = vadd.f32 0.0, %v1375
        %v1377 = vpop.f32.mrf.mxu0
        %v1378 = vpop.f32.mrf.mxu0
        %v1379 = vadd.f32 0.0, %v1378
        %v1380 = vpop.f32.mrf.mxu0
        %1381 = vdwg.mxu0
        %1384 = vrot.lane.b32.xlu0 %v1278, 8
        %v1385 = vpop.permute.xlu0 %1384
        %1386 = vrot.lane.b32.xlu0 %v1281, 8
        %v1387 = vpop.permute.xlu0 %1386
        %1392 = vrot.lane.b32.xlu0 %v1327, 16
        %v1393 = vpop.permute.xlu0 %1392
        %1394 = vrot.lane.b32.xlu0 %v1330, 16
        %v1395 = vpop.permute.xlu0 %1394
        %1400 = vrot.lane.b32.xlu0 %v1376, 24
        %v1401 = vpop.permute.xlu0 %1400
        %1402 = vrot.lane.b32.xlu0 %v1379, 24
        %v1403 = vpop.permute.xlu0 %1402
        %v1406 = vsel %vm885, %v1229, %v1385
        %v1407 = vsel %vm885, %v1232, %v1387
        %vm1408 = vcmask 130048
        %v1409 = vsel %vm1408, %v1406, %v1393
        %v1410 = vsel %vm1408, %v1407, %v1395
        %vm1411 = vcmask 195584
        %v1412 = vsel %vm1411, %v1409, %v1401
        %v1413 = vsel %vm1411, %v1410, %v1403
        %v1414 = vpack.c.bf16 %v1413, %v1412
        %v1415 = vld [vmem:[%s7] sm:$0xf]
        %v1416 = vld [vmem:[%s7 + $0x4] sm:$0xf]
        %v1417 = vld [vmem:[%s7 + $0x8] sm:$0xf]
        %v1418 = vld [vmem:[%s7 + $0xc] sm:$0xf]
        %v1419 = vld [vmem:[%s8] sm:$0x1]
        %v1421 = vlaneseq
        %v1422 = vshrl.u32 %v1421, 7
        %v1423 = vsub.s32 0, %v1422
        %v1424 = vrot.slane %v1419, %v1423
        %v1430 = vunpack.c.l.b16 %v1415
        %v1431 = vunpack.c.l.b16 %v1416
        %v1432 = vunpack.c.l.b16 %v1417
        %v1433 = vunpack.c.l.b16 %v1418
        %v1434 = vpack.c.b16 %v1431, %v1430
        %v1435 = vpack.c.b16 %v1433, %v1432
        %v1439 = vsel %vm634, %v1414, 0
        %1441 = vmatprep.subr.bf16.mxu0 0
        %1442 = vmatpush1.bf16.msra.mxu0 0
        %1443 = vmatprep.subr.bf16.mxu0 0
        %1444 = vmatpush1.bf16.msra.mxu0 0
        %1445 = vmatprep.subr.bf16.mxu0 0
        %1446 = vmatpush1.bf16.msra.mxu0 0
        %1447 = vmatprep.subr.bf16.mxu0 0
        %1448 = vmatpush1.bf16.msra.mxu0 0
        %1449 = vmatprep.subr.bf16.mxu0 0
        %1450 = vmatpush1.bf16.msra.mxu0 0
        %1451 = vmatprep.subr.bf16.mxu0 0
        %1452 = vmatpush1.bf16.msra.mxu0 0
        %1453 = vmatprep.subr.bf16.mxu0 0
        %1454 = vmatpush1.bf16.msra.mxu0 %v1435
        %1455 = vmatprep.subr.bf16.mxu0 0
        %1456 = vmatpush1.bf16.msra.mxu0 %v1434
        %1457 = vmatprep.subr.bf16.mxu0 0
        %1458 = vmatpush2.bf16.msra.mxu0 0
        %1459 = vmatprep.subr.bf16.mxu0 0
        %1460 = vmatpush2.bf16.msra.mxu0 0
        %1461 = vmatprep.subr.bf16.mxu0 0
        %1462 = vmatpush2.bf16.msra.mxu0 0
        %1463 = vmatprep.subr.bf16.mxu0 0
        %1464 = vmatpush2.bf16.msra.mxu0 0
        %1465 = vmatprep.subr.bf16.mxu0 0
        %1466 = vmatpush2.bf16.msra.mxu0 0
        %1467 = vmatprep.subr.bf16.mxu0 0
        %1468 = vmatpush2.bf16.msra.mxu0 0
        %1469 = vmatprep.subr.bf16.mxu0 0
        %1470 = vmatpush2.bf16.msra.mxu0 0
        %1471 = vmatprep.subr.bf16.mxu0 0
        %1472 = vmatpush2.bf16.msra.mxu0 0
        %1473 = vmatprep.mubr.bf16.mxu0 0
        %1474 = vmatmul.mubr.bf16.gmra.mxu0 %v1439
        %v1475 = vpop.f32.mrf.mxu0
        %v1476 = vadd.f32 %v1424, %v1475
        %v1477 = vpop.f32.mrf.mxu0
        %v1478 = vpop.f32.mrf.mxu0
        %v1479 = vadd.f32 %v1424, %v1478
        %v1480 = vpop.f32.mrf.mxu0
        %1481 = vdwg.mxu0
        %v1482 = vadd.f32 %v805, %v1476
        %v1483 = vadd.f32 %v806, %v1479
        %v1484 = vld [vmem:[%s9] sm:$0x1]
        %v1485 = vld [vmem:[%s10] sm:$0x1]
        %v1486 = vsel %vm634, %v1482, 0.0
        %1487 = vadd.xlane.f32.xlu0 %v1486
        %v1488 = vpop.xlane.xlu0 %1487
        %v1489 = vsel %vm766, %v1483, 0.0
        %1490 = vadd.xlane.f32.xlu0 %v1489
        %v1491 = vpop.xlane.xlu0 %1490
        %v1492 = vmul.f32 %v1488, %v770
        %v1493 = vmul.f32 %v1491, %v770
        %v1494 = vsub.f32 %v1482, %v1492
        %v1495 = vsub.f32 %v1483, %v1493
        %v1496 = vmul.f32 %v1494, %v1494
        %v1497 = vmul.f32 %v1495, %v1495
        %v1498 = vsel %vm634, %v1496, 0.0
        %1499 = vadd.xlane.f32.xlu0 %v1498
        %v1500 = vpop.xlane.xlu0 %1499
        %v1501 = vsel %vm766, %v1497, 0.0
        %1502 = vadd.xlane.f32.xlu0 %v1501
        %v1503 = vpop.xlane.xlu0 %1502
        %v1504 = vmul.f32 %v1500, %v770
        %v1505 = vmul.f32 %v1503, %v770
        %v1506 = vadd.f32 %v1504, 1e-05
        %v1507 = vadd.f32 %v1505, 1e-05
        %v1508 = vrsqrt.pop %v1506
        %v1509 = vrsqrt.pop %v1507
        %v1510 = vmul.f32 %v1494, %v1508
        %v1511 = vmul.f32 %v1495, %v1509
        %v1513 = vlaneseq
        %v1514 = vshrl.u32 %v1513, 7
        %v1515 = vsub.s32 0, %v1514
        %v1516 = vrot.slane %v1484, %v1515
        %v1518 = vmul.f32 %v1510, %v1516
        %v1519 = vmul.f32 %v1511, %v1516
        %v1521 = vlaneseq
        %v1522 = vshrl.u32 %v1521, 7
        %v1523 = vsub.s32 0, %v1522
        %v1524 = vrot.slane %v1485, %v1523
        %v1526 = vadd.f32 %v1518, %v1524
        %v1527 = vadd.f32 %v1519, %v1524
        %v1528 = vpack.c.bf16 %v1527, %v1526
        %v1529 = vld [vmem:[%s11] sm:$0xf]
        %v1530 = vld [vmem:[%s11 + $0x4] sm:$0xf]
        %v1531 = vld [vmem:[%s11 + $0x8] sm:$0xf]
        %v1532 = vld [vmem:[%s11 + $0xc] sm:$0xf]
        %v1533 = vld [vmem:[%s12] sm:$0x1]
        %v1535 = vlaneseq
        %v1536 = vshrl.u32 %v1535, 7
        %v1537 = vsub.s32 0, %v1536
        %v1538 = vrot.slane %v1533, %v1537
        %v1544 = vunpack.c.l.b16 %v1529
        %v1545 = vunpack.c.l.b16 %v1530
        %v1546 = vunpack.c.l.b16 %v1531
        %v1547 = vunpack.c.l.b16 %v1532
        %v1548 = vpack.c.b16 %v1545, %v1544
        %v1549 = vpack.c.b16 %v1547, %v1546
        %v1553 = vsel %vm634, %v1528, 0
        %1555 = vmatprep.subr.bf16.mxu0 0
        %1556 = vmatpush1.bf16.msra.mxu0 0
        %1557 = vmatprep.subr.bf16.mxu0 0
        %1558 = vmatpush1.bf16.msra.mxu0 0
        %1559 = vmatprep.subr.bf16.mxu0 0
        %1560 = vmatpush1.bf16.msra.mxu0 0
        %1561 = vmatprep.subr.bf16.mxu0 0
        %1562 = vmatpush1.bf16.msra.mxu0 0
        %1563 = vmatprep.subr.bf16.mxu0 0
        %1564 = vmatpush1.bf16.msra.mxu0 0
        %1565 = vmatprep.subr.bf16.mxu0 0
        %1566 = vmatpush1.bf16.msra.mxu0 0
        %1567 = vmatprep.subr.bf16.mxu0 0
        %1568 = vmatpush1.bf16.msra.mxu0 %v1549
        %1569 = vmatprep.subr.bf16.mxu0 0
        %1570 = vmatpush1.bf16.msra.mxu0 %v1548
        %1571 = vmatprep.subr.bf16.mxu0 0
        %1572 = vmatpush2.bf16.msra.mxu0 0
        %1573 = vmatprep.subr.bf16.mxu0 0
        %1574 = vmatpush2.bf16.msra.mxu0 0
        %1575 = vmatprep.subr.bf16.mxu0 0
        %1576 = vmatpush2.bf16.msra.mxu0 0
        %1577 = vmatprep.subr.bf16.mxu0 0
        %1578 = vmatpush2.bf16.msra.mxu0 0
        %1579 = vmatprep.subr.bf16.mxu0 0
        %1580 = vmatpush2.bf16.msra.mxu0 0
        %1581 = vmatprep.subr.bf16.mxu0 0
        %1582 = vmatpush2.bf16.msra.mxu0 0
        %1583 = vmatprep.subr.bf16.mxu0 0
        %1584 = vmatpush2.bf16.msra.mxu0 0
        %1585 = vmatprep.subr.bf16.mxu0 0
        %1586 = vmatpush2.bf16.msra.mxu0 0
        %1587 = vmatprep.mubr.bf16.mxu0 0
        %1588 = vmatmul.mubr.bf16.gmra.mxu0 %v1553
        %v1589 = vpop.f32.mrf.mxu0
        %v1590 = vadd.f32 %v1538, %v1589
        %v1591 = vpop.f32.mrf.mxu0
        %v1592 = vpop.f32.mrf.mxu0
        %v1593 = vadd.f32 %v1538, %v1592
        %v1594 = vpop.f32.mrf.mxu0
        %1595 = vdwg.mxu0
        %v1596 = vmul.f32 %v1590, 0.5
        %v1597 = vmul.f32 %v1593, 0.5
        %v1598 = vmul.f32 %v1590, 0.044715
        %v1599 = vmul.f32 %v1593, 0.044715
        %v1600 = vmul.f32 %v1598, %v1590
        %v1601 = vmul.f32 %v1599, %v1593
        %v1602 = vmul.f32 %v1600, %v1590
        %v1603 = vmul.f32 %v1601, %v1593
        %v1604 = vadd.f32 %v1590, %v1602
        %v1605 = vadd.f32 %v1593, %v1603
        %v1606 = vmul.f32 %v1604, 0.7978846
        %v1607 = vmul.f32 %v1605, 0.7978846
        %v1608 = vtanh.pop %v1606
        %v1609 = vtanh.pop %v1607
        %v1610 = vadd.f32 %v1608, 1.0
        %v1611 = vadd.f32 %v1609, 1.0
        %v1612 = vmul.f32 %v1596, %v1610
        %v1613 = vmul.f32 %v1597, %v1611
        %v1614 = vpack.c.bf16 %v1613, %v1612
        %v1615 = vld [vmem:[%s13] sm:$0xf]
        %v1616 = vld [vmem:[%s13 + $0x4] sm:$0xf]
        %v1617 = vld [vmem:[%s13 + $0x8] sm:$0xf]
        %v1618 = vld [vmem:[%s13 + $0xc] sm:$0xf]
        %v1619 = vld [vmem:[%s13 + $0x10] sm:$0xf]
        %v1620 = vld [vmem:[%s13 + $0x14] sm:$0xf]
        %v1621 = vld [vmem:[%s13 + $0x18] sm:$0xf]
        %v1622 = vld [vmem:[%s13 + $0x1c] sm:$0xf]
        %v1623 = vld [vmem:[%s14] sm:$0x1]
        %v1625 = vlaneseq
        %v1626 = vshrl.u32 %v1625, 7
        %v1627 = vsub.s32 0, %v1626
        %v1628 = vrot.slane %v1623, %v1627
        %v1638 = vunpack.c.l.b16 %v1615
        %v1639 = vunpack.c.l.b16 %v1616
        %v1640 = vunpack.c.l.b16 %v1617
        %v1641 = vunpack.c.l.b16 %v1618
        %v1642 = vunpack.c.l.b16 %v1619
        %v1643 = vunpack.c.l.b16 %v1620
        %v1644 = vunpack.c.l.b16 %v1621
        %v1645 = vunpack.c.l.b16 %v1622
        %v1646 = vpack.c.b16 %v1639, %v1638
        %v1647 = vpack.c.b16 %v1641, %v1640
        %v1648 = vpack.c.b16 %v1643, %v1642
        %v1649 = vpack.c.b16 %v1645, %v1644
        %v1655 = vsel %vm637, %v1614, 0
        %1657 = vmatprep.subr.bf16.mxu0 0
        %1658 = vmatpush1.bf16.msra.mxu0 0
        %1659 = vmatprep.subr.bf16.mxu0 0
        %1660 = vmatpush1.bf16.msra.mxu0 0
        %1661 = vmatprep.subr.bf16.mxu0 0
        %1662 = vmatpush1.bf16.msra.mxu0 0
        %1663 = vmatprep.subr.bf16.mxu0 0
        %1664 = vmatpush1.bf16.msra.mxu0 0
        %1665 = vmatprep.subr.bf16.mxu0 0
        %1666 = vmatpush1.bf16.msra.mxu0 %v1649
        %1667 = vmatprep.subr.bf16.mxu0 0
        %1668 = vmatpush1.bf16.msra.mxu0 %v1648
        %1669 = vmatprep.subr.bf16.mxu0 0
        %1670 = vmatpush1.bf16.msra.mxu0 %v1647
        %1671 = vmatprep.subr.bf16.mxu0 0
        %1672 = vmatpush1.bf16.msra.mxu0 %v1646
        %1673 = vmatprep.subr.bf16.mxu0 0
        %1674 = vmatpush2.bf16.msra.mxu0 0
        %1675 = vmatprep.subr.bf16.mxu0 0
        %1676 = vmatpush2.bf16.msra.mxu0 0
        %1677 = vmatprep.subr.bf16.mxu0 0
        %1678 = vmatpush2.bf16.msra.mxu0 0
        %1679 = vmatprep.subr.bf16.mxu0 0
        %1680 = vmatpush2.bf16.msra.mxu0 0
        %1681 = vmatprep.subr.bf16.mxu0 0
        %1682 = vmatpush2.bf16.msra.mxu0 0
        %1683 = vmatprep.subr.bf16.mxu0 0
        %1684 = vmatpush2.bf16.msra.mxu0 0
        %1685 = vmatprep.subr.bf16.mxu0 0
        %1686 = vmatpush2.bf16.msra.mxu0 0
        %1687 = vmatprep.subr.bf16.mxu0 0
        %1688 = vmatpush2.bf16.msra.mxu0 0
        %1689 = vmatprep.mubr.bf16.mxu0 0
        %1690 = vmatmul.mubr.bf16.gmra.mxu0 %v1655
        %v1691 = vpop.f32.mrf.mxu0
        %v1692 = vadd.f32 %v1628, %v1691
        %v1693 = vpop.f32.mrf.mxu0
        %v1694 = vpop.f32.mrf.mxu0
        %v1695 = vadd.f32 %v1628, %v1694
        %v1696 = vpop.f32.mrf.mxu0
        %1697 = vdwg.mxu0
        %v1698 = vadd.f32 %v1526, %v1692
        %v1699 = vadd.f32 %v1527, %v1695
        %v1700 = vld [vmem:[%s15] sm:$0x1]
        %v1701 = vld [vmem:[%s16] sm:$0x1]
        %v1702 = vsel %vm634, %v1698, 0.0
        %1703 = vadd.xlane.f32.xlu0 %v1702
        %v1704 = vpop.xlane.xlu0 %1703
        %v1705 = vsel %vm766, %v1699, 0.0
        %1706 = vadd.xlane.f32.xlu0 %v1705
        %v1707 = vpop.xlane.xlu0 %1706
        %v1708 = vmul.f32 %v1704, %v770
        %v1709 = vmul.f32 %v1707, %v770
        %v1710 = vsub.f32 %v1698, %v1708
        %v1711 = vsub.f32 %v1699, %v1709
        %v1712 = vmul.f32 %v1710, %v1710
        %v1713 = vmul.f32 %v1711, %v1711
        %v1714 = vsel %vm634, %v1712, 0.0
        %1715 = vadd.xlane.f32.xlu0 %v1714
        %v1716 = vpop.xlane.xlu0 %1715
        %v1717 = vsel %vm766, %v1713, 0.0
        %1718 = vadd.xlane.f32.xlu0 %v1717
        %v1719 = vpop.xlane.xlu0 %1718
        %v1720 = vmul.f32 %v1716, %v770
        %v1721 = vmul.f32 %v1719, %v770
        %v1722 = vadd.f32 %v1720, 1e-05
        %v1723 = vadd.f32 %v1721, 1e-05
        %v1724 = vrsqrt.pop %v1722
        %v1725 = vrsqrt.pop %v1723
        %v1726 = vmul.f32 %v1710, %v1724
        %v1727 = vmul.f32 %v1711, %v1725
        %v1729 = vlaneseq
        %v1730 = vshrl.u32 %v1729, 7
        %v1731 = vsub.s32 0, %v1730
        %v1732 = vrot.slane %v1700, %v1731
        %v1734 = vmul.f32 %v1726, %v1732
        %v1735 = vmul.f32 %v1727, %v1732
        %v1737 = vlaneseq
        %v1738 = vshrl.u32 %v1737, 7
        %v1739 = vsub.s32 0, %v1738
        %v1740 = vrot.slane %v1701, %v1739
        %v1742 = vadd.f32 %v1734, %v1740
        %v1743 = vadd.f32 %v1735, %v1740
        %v1744 = vpack.c.bf16 %v1743, %v1742
        %s1745 = scalar_lea.vmem %s5, 16
        %v1746 = vld [vmem:[%s1745] sm:$0xf]
        %v1747 = vld [vmem:[%s1745 + $0x4] sm:$0xf]
        %v1748 = vld [vmem:[%s1745 + $0x8] sm:$0xf]
        %v1749 = vld [vmem:[%s1745 + $0xc] sm:$0xf]
        %s1750 = scalar_lea.vmem %s6, 1
        %v1751 = vld [vmem:[%s1750] sm:$0x1]
        %v1753 = vlaneseq
        %v1754 = vshrl.u32 %v1753, 7
        %v1755 = vsub.s32 0, %v1754
        %v1756 = vrot.slane %v1751, %v1755
        %v1762 = vunpack.c.l.b16 %v1746
        %v1763 = vunpack.c.l.b16 %v1747
        %v1764 = vunpack.c.l.b16 %v1748
        %v1765 = vunpack.c.l.b16 %v1749
        %v1766 = vpack.c.b16 %v1763, %v1762
        %v1767 = vpack.c.b16 %v1765, %v1764
        %v1771 = vsel %vm634, %v1744, 0
        %1773 = vmatprep.subr.bf16.mxu0 0
        %1774 = vmatpush1.bf16.msra.mxu0 0
        %1775 = vmatprep.subr.bf16.mxu0 0
        %1776 = vmatpush1.bf16.msra.mxu0 0
        %1777 = vmatprep.subr.bf16.mxu0 0
        %1778 = vmatpush1.bf16.msra.mxu0 0
        %1779 = vmatprep.subr.bf16.mxu0 0
        %1780 = vmatpush1.bf16.msra.mxu0 0
        %1781 = vmatprep.subr.bf16.mxu0 0
        %1782 = vmatpush1.bf16.msra.mxu0 0
        %1783 = vmatprep.subr.bf16.mxu0 0
        %1784 = vmatpush1.bf16.msra.mxu0 0
        %1785 = vmatprep.subr.bf16.mxu0 0
        %1786 = vmatpush1.bf16.msra.mxu0 %v1767
        %1787 = vmatprep.subr.bf16.mxu0 0
        %1788 = vmatpush1.bf16.msra.mxu0 %v1766
        %1789 = vmatprep.subr.bf16.mxu0 0
        %1790 = vmatpush2.bf16.msra.mxu0 0
        %1791 = vmatprep.subr.bf16.mxu0 0
        %1792 = vmatpush2.bf16.msra.mxu0 0
        %1793 = vmatprep.subr.bf16.mxu0 0
        %1794 = vmatpush2.bf16.msra.mxu0 0
        %1795 = vmatprep.subr.bf16.mxu0 0
        %1796 = vmatpush2.bf16.msra.mxu0 0
        %1797 = vmatprep.subr.bf16.mxu0 0
        %1798 = vmatpush2.bf16.msra.mxu0 0
        %1799 = vmatprep.subr.bf16.mxu0 0
        %1800 = vmatpush2.bf16.msra.mxu0 0
        %1801 = vmatprep.subr.bf16.mxu0 0
        %1802 = vmatpush2.bf16.msra.mxu0 0
        %1803 = vmatprep.subr.bf16.mxu0 0
        %1804 = vmatpush2.bf16.msra.mxu0 0
        %1805 = vmatprep.mubr.bf16.mxu0 0
        %1806 = vmatmul.mubr.bf16.gmra.mxu0 %v1771
        %v1807 = vpop.f32.mrf.mxu0
        %v1808 = vadd.f32 %v1756, %v1807
        %v1809 = vpop.f32.mrf.mxu0
        %v1810 = vpop.f32.mrf.mxu0
        %v1811 = vadd.f32 %v1756, %v1810
        %v1812 = vpop.f32.mrf.mxu0
        %1813 = vdwg.mxu0
        %v1814 = vpack.c.bf16 %v1811, %v1808
        %1816 = vrot.lane.b32.xlu0 %v1814, 120
        %v1817 = vpop.permute.xlu0 %1816
        %1818 = vrot.lane.b32.xlu0 %v1814, 112
        %v1819 = vpop.permute.xlu0 %1818
        %1820 = vrot.lane.b32.xlu0 %v1814, 104
        %v1821 = vpop.permute.xlu0 %1820
        %1822 = vrot.lane.b32.xlu0 %v1814, 96
        %v1823 = vpop.permute.xlu0 %1822
        %v1825 = vsel %vm885, %v1814, 0
        %v1828 = vsel %vm885, %v1823, 0
        %1830 = vmatprep.subr.bf16.mxu0 0
        %1831 = vmatpush1.bf16.xpose.msra.mxu0 0
        %1832 = vmatprep.subr.bf16.mxu0 0
        %1833 = vmatpush1.bf16.xpose.msra.mxu0 0
        %1834 = vmatprep.subr.bf16.mxu0 0
        %1835 = vmatpush1.bf16.xpose.msra.mxu0 0
        %1836 = vmatprep.subr.bf16.mxu0 0
        %1837 = vmatpush1.bf16.xpose.msra.mxu0 0
        %1838 = vmatprep.subr.bf16.mxu0 0
        %1839 = vmatpush1.bf16.xpose.msra.mxu0 0
        %1840 = vmatprep.subr.bf16.mxu0 0
        %1841 = vmatpush1.bf16.xpose.msra.mxu0 0
        %1842 = vmatprep.subr.bf16.mxu0 0
        %1843 = vmatpush1.bf16.xpose.msra.mxu0 0
        %1844 = vmatprep.subr.bf16.mxu0 0
        %1845 = vmatpush1.bf16.xpose.msra.mxu0 %v1828
        %1846 = vmatprep.subr.bf16.mxu0 0
        %1847 = vmatpush2.bf16.xpose.msra.mxu0 0
        %1848 = vmatprep.subr.bf16.mxu0 0
        %1849 = vmatpush2.bf16.xpose.msra.mxu0 0
        %1850 = vmatprep.subr.bf16.mxu0 0
        %1851 = vmatpush2.bf16.xpose.msra.mxu0 0
        %1852 = vmatprep.subr.bf16.mxu0 0
        %1853 = vmatpush2.bf16.xpose.msra.mxu0 0
        %1854 = vmatprep.subr.bf16.mxu0 0
        %1855 = vmatpush2.bf16.xpose.msra.mxu0 0
        %1856 = vmatprep.subr.bf16.mxu0 0
        %1857 = vmatpush2.bf16.xpose.msra.mxu0 0
        %1858 = vmatprep.subr.bf16.mxu0 0
        %1859 = vmatpush2.bf16.xpose.msra.mxu0 0
        %1860 = vmatprep.subr.bf16.mxu0 0
        %1861 = vmatpush2.bf16.xpose.msra.mxu0 0
        %1862 = vmatprep.mubr.bf16.mxu0 0
        %1863 = vmatmul.mubr.bf16.gmra.mxu0 %v1825
        %v1864 = vpop.f32.mrf.mxu0
        %v1865 = vadd.f32 0.0, %v1864
        %v1866 = vpop.f32.mrf.mxu0
        %v1867 = vpop.f32.mrf.mxu0
        %v1868 = vadd.f32 0.0, %v1867
        %v1869 = vpop.f32.mrf.mxu0
        %1870 = vdwg.mxu0
        %1871 = vrot.lane.b32.xlu0 %v1817, 96
        %v1872 = vpop.permute.xlu0 %1871
        %v1874 = vsel %vm885, %v1817, 0
        %v1877 = vsel %vm885, %v1872, 0
        %1879 = vmatprep.subr.bf16.mxu0 0
        %1880 = vmatpush1.bf16.xpose.msra.mxu0 0
        %1881 = vmatprep.subr.bf16.mxu0 0
        %1882 = vmatpush1.bf16.xpose.msra.mxu0 0
        %1883 = vmatprep.subr.bf16.mxu0 0
        %1884 = vmatpush1.bf16.xpose.msra.mxu0 0
        %1885 = vmatprep.subr.bf16.mxu0 0
        %1886 = vmatpush1.bf16.xpose.msra.mxu0 0
        %1887 = vmatprep.subr.bf16.mxu0 0
        %1888 = vmatpush1.bf16.xpose.msra.mxu0 0
        %1889 = vmatprep.subr.bf16.mxu0 0
        %1890 = vmatpush1.bf16.xpose.msra.mxu0 0
        %1891 = vmatprep.subr.bf16.mxu0 0
        %1892 = vmatpush1.bf16.xpose.msra.mxu0 0
        %1893 = vmatprep.subr.bf16.mxu0 0
        %1894 = vmatpush1.bf16.xpose.msra.mxu0 %v1877
        %1895 = vmatprep.subr.bf16.mxu0 0
        %1896 = vmatpush2.bf16.xpose.msra.mxu0 0
        %1897 = vmatprep.subr.bf16.mxu0 0
        %1898 = vmatpush2.bf16.xpose.msra.mxu0 0
        %1899 = vmatprep.subr.bf16.mxu0 0
        %1900 = vmatpush2.bf16.xpose.msra.mxu0 0
        %1901 = vmatprep.subr.bf16.mxu0 0
        %1902 = vmatpush2.bf16.xpose.msra.mxu0 0
        %1903 = vmatprep.subr.bf16.mxu0 0
        %1904 = vmatpush2.bf16.xpose.msra.mxu0 0
        %1905 = vmatprep.subr.bf16.mxu0 0
        %1906 = vmatpush2.bf16.xpose.msra.mxu0 0
        %1907 = vmatprep.subr.bf16.mxu0 0
        %1908 = vmatpush2.bf16.xpose.msra.mxu0 0
        %1909 = vmatprep.subr.bf16.mxu0 0
        %1910 = vmatpush2.bf16.xpose.msra.mxu0 0
        %1911 = vmatprep.mubr.bf16.mxu0 0
        %1912 = vmatmul.mubr.bf16.gmra.mxu0 %v1874
        %v1913 = vpop.f32.mrf.mxu0
        %v1914 = vadd.f32 0.0, %v1913
        %v1915 = vpop.f32.mrf.mxu0
        %v1916 = vpop.f32.mrf.mxu0
        %v1917 = vadd.f32 0.0, %v1916
        %v1918 = vpop.f32.mrf.mxu0
        %1919 = vdwg.mxu0
        %1920 = vrot.lane.b32.xlu0 %v1819, 96
        %v1921 = vpop.permute.xlu0 %1920
        %v1923 = vsel %vm885, %v1819, 0
        %v1926 = vsel %vm885, %v1921, 0
        %1928 = vmatprep.subr.bf16.mxu0 0
        %1929 = vmatpush1.bf16.xpose.msra.mxu0 0
        %1930 = vmatprep.subr.bf16.mxu0 0
        %1931 = vmatpush1.bf16.xpose.msra.mxu0 0
        %1932 = vmatprep.subr.bf16.mxu0 0
        %1933 = vmatpush1.bf16.xpose.msra.mxu0 0
        %1934 = vmatprep.subr.bf16.mxu0 0
        %1935 = vmatpush1.bf16.xpose.msra.mxu0 0
        %1936 = vmatprep.subr.bf16.mxu0 0
        %1937 = vmatpush1.bf16.xpose.msra.mxu0 0
        %1938 = vmatprep.subr.bf16.mxu0 0
        %1939 = vmatpush1.bf16.xpose.msra.mxu0 0
        %1940 = vmatprep.subr.bf16.mxu0 0
        %1941 = vmatpush1.bf16.xpose.msra.mxu0 0
        %1942 = vmatprep.subr.bf16.mxu0 0
        %1943 = vmatpush1.bf16.xpose.msra.mxu0 %v1926
        %1944 = vmatprep.subr.bf16.mxu0 0
        %1945 = vmatpush2.bf16.xpose.msra.mxu0 0
        %1946 = vmatprep.subr.bf16.mxu0 0
        %1947 = vmatpush2.bf16.xpose.msra.mxu0 0
        %1948 = vmatprep.subr.bf16.mxu0 0
        %1949 = vmatpush2.bf16.xpose.msra.mxu0 0
        %1950 = vmatprep.subr.bf16.mxu0 0
        %1951 = vmatpush2.bf16.xpose.msra.mxu0 0
        %1952 = vmatprep.subr.bf16.mxu0 0
        %1953 = vmatpush2.bf16.xpose.msra.mxu0 0
        %1954 = vmatprep.subr.bf16.mxu0 0
        %1955 = vmatpush2.bf16.xpose.msra.mxu0 0
        %1956 = vmatprep.subr.bf16.mxu0 0
        %1957 = vmatpush2.bf16.xpose.msra.mxu0 0
        %1958 = vmatprep.subr.bf16.mxu0 0
        %1959 = vmatpush2.bf16.xpose.msra.mxu0 0
        %1960 = vmatprep.mubr.bf16.mxu0 0
        %1961 = vmatmul.mubr.bf16.gmra.mxu0 %v1923
        %v1962 = vpop.f32.mrf.mxu0
        %v1963 = vadd.f32 0.0, %v1962
        %v1964 = vpop.f32.mrf.mxu0
        %v1965 = vpop.f32.mrf.mxu0
        %v1966 = vadd.f32 0.0, %v1965
        %v1967 = vpop.f32.mrf.mxu0
        %1968 = vdwg.mxu0
        %1969 = vrot.lane.b32.xlu0 %v1821, 96
        %v1970 = vpop.permute.xlu0 %1969
        %v1972 = vsel %vm885, %v1821, 0
        %v1975 = vsel %vm885, %v1970, 0
        %1977 = vmatprep.subr.bf16.mxu0 0
        %1978 = vmatpush1.bf16.xpose.msra.mxu0 0
        %1979 = vmatprep.subr.bf16.mxu0 0
        %1980 = vmatpush1.bf16.xpose.msra.mxu0 0
        %1981 = vmatprep.subr.bf16.mxu0 0
        %1982 = vmatpush1.bf16.xpose.msra.mxu0 0
        %1983 = vmatprep.subr.bf16.mxu0 0
        %1984 = vmatpush1.bf16.xpose.msra.mxu0 0
        %1985 = vmatprep.subr.bf16.mxu0 0
        %1986 = vmatpush1.bf16.xpose.msra.mxu0 0
        %1987 = vmatprep.subr.bf16.mxu0 0
        %1988 = vmatpush1.bf16.xpose.msra.mxu0 0
        %1989 = vmatprep.subr.bf16.mxu0 0
        %1990 = vmatpush1.bf16.xpose.msra.mxu0 0
        %1991 = vmatprep.subr.bf16.mxu0 0
        %1992 = vmatpush1.bf16.xpose.msra.mxu0 %v1975
        %1993 = vmatprep.subr.bf16.mxu0 0
        %1994 = vmatpush2.bf16.xpose.msra.mxu0 0
        %1995 = vmatprep.subr.bf16.mxu0 0
        %1996 = vmatpush2.bf16.xpose.msra.mxu0 0
        %1997 = vmatprep.subr.bf16.mxu0 0
        %1998 = vmatpush2.bf16.xpose.msra.mxu0 0
        %1999 = vmatprep.subr.bf16.mxu0 0
        %2000 = vmatpush2.bf16.xpose.msra.mxu0 0
        %2001 = vmatprep.subr.bf16.mxu0 0
        %2002 = vmatpush2.bf16.xpose.msra.mxu0 0
        %2003 = vmatprep.subr.bf16.mxu0 0
        %2004 = vmatpush2.bf16.xpose.msra.mxu0 0
        %2005 = vmatprep.subr.bf16.mxu0 0
        %2006 = vmatpush2.bf16.xpose.msra.mxu0 0
        %2007 = vmatprep.subr.bf16.mxu0 0
        %2008 = vmatpush2.bf16.xpose.msra.mxu0 0
        %2009 = vmatprep.mubr.bf16.mxu0 0
        %2010 = vmatmul.mubr.bf16.gmra.mxu0 %v1972
        %v2011 = vpop.f32.mrf.mxu0
        %v2012 = vadd.f32 0.0, %v2011
        %v2013 = vpop.f32.mrf.mxu0
        %v2014 = vpop.f32.mrf.mxu0
        %v2015 = vadd.f32 0.0, %v2014
        %v2016 = vpop.f32.mrf.mxu0
        %2017 = vdwg.mxu0
        %v2018 = vmul.f32 %v1865, 0.35355338
        %v2019 = vmul.f32 %v1868, 0.35355338
        %v2020 = vmul.f32 %v1914, 0.35355338
        %v2021 = vmul.f32 %v1917, 0.35355338
        %v2022 = vmul.f32 %v1963, 0.35355338
        %v2023 = vmul.f32 %v1966, 0.35355338
        %v2024 = vmul.f32 %v2012, 0.35355338
        %v2025 = vmul.f32 %v2015, 0.35355338
        %v2026 = vsel %vm1088, %v2018, -inf
        %2027 = vmax.xlane.f32.xlu0 %v2026
        %v2028 = vpop.xlane.xlu0 %2027
        %v2029 = vsel %vm1092, %v2019, -inf
        %2030 = vmax.xlane.f32.xlu0 %v2029
        %v2031 = vpop.xlane.xlu0 %2030
        %v2032 = vsel %vm1088, %v2020, -inf
        %2033 = vmax.xlane.f32.xlu0 %v2032
        %v2034 = vpop.xlane.xlu0 %2033
        %v2035 = vsel %vm1092, %v2021, -inf
        %2036 = vmax.xlane.f32.xlu0 %v2035
        %v2037 = vpop.xlane.xlu0 %2036
        %v2038 = vsel %vm1088, %v2022, -inf
        %2039 = vmax.xlane.f32.xlu0 %v2038
        %v2040 = vpop.xlane.xlu0 %2039
        %v2041 = vsel %vm1092, %v2023, -inf
        %2042 = vmax.xlane.f32.xlu0 %v2041
        %v2043 = vpop.xlane.xlu0 %2042
        %v2044 = vsel %vm1088, %v2024, -inf
        %2045 = vmax.xlane.f32.xlu0 %v2044
        %v2046 = vpop.xlane.xlu0 %2045
        %v2047 = vsel %vm1092, %v2025, -inf
        %2048 = vmax.xlane.f32.xlu0 %v2047
        %v2049 = vpop.xlane.xlu0 %2048
        %v2050 = vsub.f32 %v2018, %v2028
        %v2051 = vsub.f32 %v2019, %v2031
        %v2052 = vsub.f32 %v2020, %v2034
        %v2053 = vsub.f32 %v2021, %v2037
        %v2054 = vsub.f32 %v2022, %v2040
        %v2055 = vsub.f32 %v2023, %v2043
        %v2056 = vsub.f32 %v2024, %v2046
        %v2057 = vsub.f32 %v2025, %v2049
        %v2058 = vmul.f32 %v2050, 1.442695
        %v2059 = vpow.pop %v2058
        %v2060 = vmul.f32 %v2051, 1.442695
        %v2061 = vpow.pop %v2060
        %v2062 = vmul.f32 %v2052, 1.442695
        %v2063 = vpow.pop %v2062
        %v2064 = vmul.f32 %v2053, 1.442695
        %v2065 = vpow.pop %v2064
        %v2066 = vmul.f32 %v2054, 1.442695
        %v2067 = vpow.pop %v2066
        %v2068 = vmul.f32 %v2055, 1.442695
        %v2069 = vpow.pop %v2068
        %v2070 = vmul.f32 %v2056, 1.442695
        %v2071 = vpow.pop %v2070
        %v2072 = vmul.f32 %v2057, 1.442695
        %v2073 = vpow.pop %v2072
        %v2074 = vsel %vm1088, %v2059, 0.0
        %2075 = vadd.xlane.f32.xlu0 %v2074
        %v2076 = vpop.xlane.xlu0 %2075
        %v2077 = vsel %vm1092, %v2061, 0.0
        %2078 = vadd.xlane.f32.xlu0 %v2077
        %v2079 = vpop.xlane.xlu0 %2078
        %v2080 = vsel %vm1088, %v2063, 0.0
        %2081 = vadd.xlane.f32.xlu0 %v2080
        %v2082 = vpop.xlane.xlu0 %2081
        %v2083 = vsel %vm1092, %v2065, 0.0
        %2084 = vadd.xlane.f32.xlu0 %v2083
        %v2085 = vpop.xlane.xlu0 %2084
        %v2086 = vsel %vm1088, %v2067, 0.0
        %2087 = vadd.xlane.f32.xlu0 %v2086
        %v2088 = vpop.xlane.xlu0 %2087
        %v2089 = vsel %vm1092, %v2069, 0.0
        %2090 = vadd.xlane.f32.xlu0 %v2089
        %v2091 = vpop.xlane.xlu0 %2090
        %v2092 = vsel %vm1088, %v2071, 0.0
        %2093 = vadd.xlane.f32.xlu0 %v2092
        %v2094 = vpop.xlane.xlu0 %2093
        %v2095 = vsel %vm1092, %v2073, 0.0
        %2096 = vadd.xlane.f32.xlu0 %v2095
        %v2097 = vpop.xlane.xlu0 %2096
        %v2098 = vrcp.pop %v2076
        %v2099 = vrcp.pop %v2079
        %v2100 = vrcp.pop %v2082
        %v2101 = vrcp.pop %v2085
        %v2102 = vrcp.pop %v2088
        %v2103 = vrcp.pop %v2091
        %v2104 = vrcp.pop %v2094
        %v2105 = vrcp.pop %v2097
        %v2106 = vmul.f32 %v2059, %v2098
        %v2107 = vmul.f32 %v2061, %v2099
        %v2108 = vmul.f32 %v2063, %v2100
        %v2109 = vmul.f32 %v2065, %v2101
        %v2110 = vmul.f32 %v2067, %v2102
        %v2111 = vmul.f32 %v2069, %v2103
        %v2112 = vmul.f32 %v2071, %v2104
        %v2113 = vmul.f32 %v2073, %v2105
        %v2114 = vpack.c.bf16 %v2107, %v2106
        %v2115 = vpack.c.bf16 %v2109, %v2108
        %v2116 = vpack.c.bf16 %v2111, %v2110
        %v2117 = vpack.c.bf16 %v2113, %v2112
        %2118 = vrot.lane.b32.xlu0 %v1814, 64
        %v2119 = vpop.permute.xlu0 %2118
        %v2121 = vsel %vm1088, %v2114, 0
        %v2124 = vand.u32 %v2119, %v1190
        %2126 = vmatprep.subr.bf16.mxu0 0
        %2127 = vmatpush1.bf16.msra.mxu0 0
        %2128 = vmatprep.subr.bf16.mxu0 0
        %2129 = vmatpush1.bf16.msra.mxu0 0
        %2130 = vmatprep.subr.bf16.mxu0 0
        %2131 = vmatpush1.bf16.msra.mxu0 0
        %2132 = vmatprep.subr.bf16.mxu0 0
        %2133 = vmatpush1.bf16.msra.mxu0 0
        %2134 = vmatprep.subr.bf16.mxu0 0
        %2135 = vmatpush1.bf16.msra.mxu0 0
        %2136 = vmatprep.subr.bf16.mxu0 0
        %2137 = vmatpush1.bf16.msra.mxu0 0
        %2138 = vmatprep.subr.bf16.mxu0 0
        %2139 = vmatpush1.bf16.msra.mxu0 0
        %2140 = vmatprep.subr.bf16.mxu0 0
        %2141 = vmatpush1.bf16.msra.mxu0 %v2124
        %2142 = vmatprep.subr.bf16.mxu0 0
        %2143 = vmatpush2.bf16.msra.mxu0 0
        %2144 = vmatprep.subr.bf16.mxu0 0
        %2145 = vmatpush2.bf16.msra.mxu0 0
        %2146 = vmatprep.subr.bf16.mxu0 0
        %2147 = vmatpush2.bf16.msra.mxu0 0
        %2148 = vmatprep.subr.bf16.mxu0 0
        %2149 = vmatpush2.bf16.msra.mxu0 0
        %2150 = vmatprep.subr.bf16.mxu0 0
        %2151 = vmatpush2.bf16.msra.mxu0 0
        %2152 = vmatprep.subr.bf16.mxu0 0
        %2153 = vmatpush2.bf16.msra.mxu0 0
        %2154 = vmatprep.subr.bf16.mxu0 0
        %2155 = vmatpush2.bf16.msra.mxu0 0
        %2156 = vmatprep.subr.bf16.mxu0 0
        %2157 = vmatpush2.bf16.msra.mxu0 0
        %2158 = vmatprep.mubr.bf16.mxu0 0
        %2159 = vmatmul.mubr.bf16.gmra.mxu0 %v2121
        %v2160 = vpop.f32.mrf.mxu0
        %v2161 = vadd.f32 0.0, %v2160
        %v2162 = vpop.f32.mrf.mxu0
        %v2163 = vpop.f32.mrf.mxu0
        %v2164 = vadd.f32 0.0, %v2163
        %v2165 = vpop.f32.mrf.mxu0
        %2166 = vdwg.mxu0
        %2167 = vrot.lane.b32.xlu0 %v1817, 64
        %v2168 = vpop.permute.xlu0 %2167
        %v2170 = vsel %vm1088, %v2115, 0
        %v2173 = vand.u32 %v2168, %v1190
        %2175 = vmatprep.subr.bf16.mxu0 0
        %2176 = vmatpush1.bf16.msra.mxu0 0
        %2177 = vmatprep.subr.bf16.mxu0 0
        %2178 = vmatpush1.bf16.msra.mxu0 0
        %2179 = vmatprep.subr.bf16.mxu0 0
        %2180 = vmatpush1.bf16.msra.mxu0 0
        %2181 = vmatprep.subr.bf16.mxu0 0
        %2182 = vmatpush1.bf16.msra.mxu0 0
        %2183 = vmatprep.subr.bf16.mxu0 0
        %2184 = vmatpush1.bf16.msra.mxu0 0
        %2185 = vmatprep.subr.bf16.mxu0 0
        %2186 = vmatpush1.bf16.msra.mxu0 0
        %2187 = vmatprep.subr.bf16.mxu0 0
        %2188 = vmatpush1.bf16.msra.mxu0 0
        %2189 = vmatprep.subr.bf16.mxu0 0
        %2190 = vmatpush1.bf16.msra.mxu0 %v2173
        %2191 = vmatprep.subr.bf16.mxu0 0
        %2192 = vmatpush2.bf16.msra.mxu0 0
        %2193 = vmatprep.subr.bf16.mxu0 0
        %2194 = vmatpush2.bf16.msra.mxu0 0
        %2195 = vmatprep.subr.bf16.mxu0 0
        %2196 = vmatpush2.bf16.msra.mxu0 0
        %2197 = vmatprep.subr.bf16.mxu0 0
        %2198 = vmatpush2.bf16.msra.mxu0 0
        %2199 = vmatprep.subr.bf16.mxu0 0
        %2200 = vmatpush2.bf16.msra.mxu0 0
        %2201 = vmatprep.subr.bf16.mxu0 0
        %2202 = vmatpush2.bf16.msra.mxu0 0
        %2203 = vmatprep.subr.bf16.mxu0 0
        %2204 = vmatpush2.bf16.msra.mxu0 0
        %2205 = vmatprep.subr.bf16.mxu0 0
        %2206 = vmatpush2.bf16.msra.mxu0 0
        %2207 = vmatprep.mubr.bf16.mxu0 0
        %2208 = vmatmul.mubr.bf16.gmra.mxu0 %v2170
        %v2209 = vpop.f32.mrf.mxu0
        %v2210 = vadd.f32 0.0, %v2209
        %v2211 = vpop.f32.mrf.mxu0
        %v2212 = vpop.f32.mrf.mxu0
        %v2213 = vadd.f32 0.0, %v2212
        %v2214 = vpop.f32.mrf.mxu0
        %2215 = vdwg.mxu0
        %2216 = vrot.lane.b32.xlu0 %v1819, 64
        %v2217 = vpop.permute.xlu0 %2216
        %v2219 = vsel %vm1088, %v2116, 0
        %v2222 = vand.u32 %v2217, %v1190
        %2224 = vmatprep.subr.bf16.mxu0 0
        %2225 = vmatpush1.bf16.msra.mxu0 0
        %2226 = vmatprep.subr.bf16.mxu0 0
        %2227 = vmatpush1.bf16.msra.mxu0 0
        %2228 = vmatprep.subr.bf16.mxu0 0
        %2229 = vmatpush1.bf16.msra.mxu0 0
        %2230 = vmatprep.subr.bf16.mxu0 0
        %2231 = vmatpush1.bf16.msra.mxu0 0
        %2232 = vmatprep.subr.bf16.mxu0 0
        %2233 = vmatpush1.bf16.msra.mxu0 0
        %2234 = vmatprep.subr.bf16.mxu0 0
        %2235 = vmatpush1.bf16.msra.mxu0 0
        %2236 = vmatprep.subr.bf16.mxu0 0
        %2237 = vmatpush1.bf16.msra.mxu0 0
        %2238 = vmatprep.subr.bf16.mxu0 0
        %2239 = vmatpush1.bf16.msra.mxu0 %v2222
        %2240 = vmatprep.subr.bf16.mxu0 0
        %2241 = vmatpush2.bf16.msra.mxu0 0
        %2242 = vmatprep.subr.bf16.mxu0 0
        %2243 = vmatpush2.bf16.msra.mxu0 0
        %2244 = vmatprep.subr.bf16.mxu0 0
        %2245 = vmatpush2.bf16.msra.mxu0 0
        %2246 = vmatprep.subr.bf16.mxu0 0
        %2247 = vmatpush2.bf16.msra.mxu0 0
        %2248 = vmatprep.subr.bf16.mxu0 0
        %2249 = vmatpush2.bf16.msra.mxu0 0
        %2250 = vmatprep.subr.bf16.mxu0 0
        %2251 = vmatpush2.bf16.msra.mxu0 0
        %2252 = vmatprep.subr.bf16.mxu0 0
        %2253 = vmatpush2.bf16.msra.mxu0 0
        %2254 = vmatprep.subr.bf16.mxu0 0
        %2255 = vmatpush2.bf16.msra.mxu0 0
        %2256 = vmatprep.mubr.bf16.mxu0 0
        %2257 = vmatmul.mubr.bf16.gmra.mxu0 %v2219
        %v2258 = vpop.f32.mrf.mxu0
        %v2259 = vadd.f32 0.0, %v2258
        %v2260 = vpop.f32.mrf.mxu0
        %v2261 = vpop.f32.mrf.mxu0
        %v2262 = vadd.f32 0.0, %v2261
        %v2263 = vpop.f32.mrf.mxu0
        %2264 = vdwg.mxu0
        %2265 = vrot.lane.b32.xlu0 %v1821, 64
        %v2266 = vpop.permute.xlu0 %2265
        %v2268 = vsel %vm1088, %v2117, 0
        %v2271 = vand.u32 %v2266, %v1190
        %2273 = vmatprep.subr.bf16.mxu0 0
        %2274 = vmatpush1.bf16.msra.mxu0 0
        %2275 = vmatprep.subr.bf16.mxu0 0
        %2276 = vmatpush1.bf16.msra.mxu0 0
        %2277 = vmatprep.subr.bf16.mxu0 0
        %2278 = vmatpush1.bf16.msra.mxu0 0
        %2279 = vmatprep.subr.bf16.mxu0 0
        %2280 = vmatpush1.bf16.msra.mxu0 0
        %2281 = vmatprep.subr.bf16.mxu0 0
        %2282 = vmatpush1.bf16.msra.mxu0 0
        %2283 = vmatprep.subr.bf16.mxu0 0
        %2284 = vmatpush1.bf16.msra.mxu0 0
        %2285 = vmatprep.subr.bf16.mxu0 0
        %2286 = vmatpush1.bf16.msra.mxu0 0
        %2287 = vmatprep.subr.bf16.mxu0 0
        %2288 = vmatpush1.bf16.msra.mxu0 %v2271
        %2289 = vmatprep.subr.bf16.mxu0 0
        %2290 = vmatpush2.bf16.msra.mxu0 0
        %2291 = vmatprep.subr.bf16.mxu0 0
        %2292 = vmatpush2.bf16.msra.mxu0 0
        %2293 = vmatprep.subr.bf16.mxu0 0
        %2294 = vmatpush2.bf16.msra.mxu0 0
        %2295 = vmatprep.subr.bf16.mxu0 0
        %2296 = vmatpush2.bf16.msra.mxu0 0
        %2297 = vmatprep.subr.bf16.mxu0 0
        %2298 = vmatpush2.bf16.msra.mxu0 0
        %2299 = vmatprep.subr.bf16.mxu0 0
        %2300 = vmatpush2.bf16.msra.mxu0 0
        %2301 = vmatprep.subr.bf16.mxu0 0
        %2302 = vmatpush2.bf16.msra.mxu0 0
        %2303 = vmatprep.subr.bf16.mxu0 0
        %2304 = vmatpush2.bf16.msra.mxu0 0
        %2305 = vmatprep.mubr.bf16.mxu0 0
        %2306 = vmatmul.mubr.bf16.gmra.mxu0 %v2268
        %v2307 = vpop.f32.mrf.mxu0
        %v2308 = vadd.f32 0.0, %v2307
        %v2309 = vpop.f32.mrf.mxu0
        %v2310 = vpop.f32.mrf.mxu0
        %v2311 = vadd.f32 0.0, %v2310
        %v2312 = vpop.f32.mrf.mxu0
        %2313 = vdwg.mxu0
        %2316 = vrot.lane.b32.xlu0 %v2210, 8
        %v2317 = vpop.permute.xlu0 %2316
        %2318 = vrot.lane.b32.xlu0 %v2213, 8
        %v2319 = vpop.permute.xlu0 %2318
        %2324 = vrot.lane.b32.xlu0 %v2259, 16
        %v2325 = vpop.permute.xlu0 %2324
        %2326 = vrot.lane.b32.xlu0 %v2262, 16
        %v2327 = vpop.permute.xlu0 %2326
        %2332 = vrot.lane.b32.xlu0 %v2308, 24
        %v2333 = vpop.permute.xlu0 %2332
        %2334 = vrot.lane.b32.xlu0 %v2311, 24
        %v2335 = vpop.permute.xlu0 %2334
        %v2338 = vsel %vm885, %v2161, %v2317
        %v2339 = vsel %vm885, %v2164, %v2319
        %v2340 = vsel %vm1408, %v2338, %v2325
        %v2341 = vsel %vm1408, %v2339, %v2327
        %v2342 = vsel %vm1411, %v2340, %v2333
        %v2343 = vsel %vm1411, %v2341, %v2335
        %v2344 = vpack.c.bf16 %v2343, %v2342
        %s2345 = scalar_lea.vmem %s7, 16
        %v2346 = vld [vmem:[%s2345] sm:$0xf]
        %v2347 = vld [vmem:[%s2345 + $0x4] sm:$0xf]
        %v2348 = vld [vmem:[%s2345 + $0x8] sm:$0xf]
        %v2349 = vld [vmem:[%s2345 + $0xc] sm:$0xf]
        %s2350 = scalar_lea.vmem %s8, 1
        %v2351 = vld [vmem:[%s2350] sm:$0x1]
        %v2353 = vlaneseq
        %v2354 = vshrl.u32 %v2353, 7
        %v2355 = vsub.s32 0, %v2354
        %v2356 = vrot.slane %v2351, %v2355
        %v2362 = vunpack.c.l.b16 %v2346
        %v2363 = vunpack.c.l.b16 %v2347
        %v2364 = vunpack.c.l.b16 %v2348
        %v2365 = vunpack.c.l.b16 %v2349
        %v2366 = vpack.c.b16 %v2363, %v2362
        %v2367 = vpack.c.b16 %v2365, %v2364
        %v2371 = vsel %vm634, %v2344, 0
        %2373 = vmatprep.subr.bf16.mxu0 0
        %2374 = vmatpush1.bf16.msra.mxu0 0
        %2375 = vmatprep.subr.bf16.mxu0 0
        %2376 = vmatpush1.bf16.msra.mxu0 0
        %2377 = vmatprep.subr.bf16.mxu0 0
        %2378 = vmatpush1.bf16.msra.mxu0 0
        %2379 = vmatprep.subr.bf16.mxu0 0
        %2380 = vmatpush1.bf16.msra.mxu0 0
        %2381 = vmatprep.subr.bf16.mxu0 0
        %2382 = vmatpush1.bf16.msra.mxu0 0
        %2383 = vmatprep.subr.bf16.mxu0 0
        %2384 = vmatpush1.bf16.msra.mxu0 0
        %2385 = vmatprep.subr.bf16.mxu0 0
        %2386 = vmatpush1.bf16.msra.mxu0 %v2367
        %2387 = vmatprep.subr.bf16.mxu0 0
        %2388 = vmatpush1.bf16.msra.mxu0 %v2366
        %2389 = vmatprep.subr.bf16.mxu0 0
        %2390 = vmatpush2.bf16.msra.mxu0 0
        %2391 = vmatprep.subr.bf16.mxu0 0
        %2392 = vmatpush2.bf16.msra.mxu0 0
        %2393 = vmatprep.subr.bf16.mxu0 0
        %2394 = vmatpush2.bf16.msra.mxu0 0
        %2395 = vmatprep.subr.bf16.mxu0 0
        %2396 = vmatpush2.bf16.msra.mxu0 0
        %2397 = vmatprep.subr.bf16.mxu0 0
        %2398 = vmatpush2.bf16.msra.mxu0 0
        %2399 = vmatprep.subr.bf16.mxu0 0
        %2400 = vmatpush2.bf16.msra.mxu0 0
        %2401 = vmatprep.subr.bf16.mxu0 0
        %2402 = vmatpush2.bf16.msra.mxu0 0
        %2403 = vmatprep.subr.bf16.mxu0 0
        %2404 = vmatpush2.bf16.msra.mxu0 0
        %2405 = vmatprep.mubr.bf16.mxu0 0
        %2406 = vmatmul.mubr.bf16.gmra.mxu0 %v2371
        %v2407 = vpop.f32.mrf.mxu0
        %v2408 = vadd.f32 %v2356, %v2407
        %v2409 = vpop.f32.mrf.mxu0
        %v2410 = vpop.f32.mrf.mxu0
        %v2411 = vadd.f32 %v2356, %v2410
        %v2412 = vpop.f32.mrf.mxu0
        %2413 = vdwg.mxu0
        %v2414 = vadd.f32 %v1742, %v2408
        %v2415 = vadd.f32 %v1743, %v2411
        %s2416 = scalar_lea.vmem %s9, 1
        %v2417 = vld [vmem:[%s2416] sm:$0x1]
        %s2418 = scalar_lea.vmem %s10, 1
        %v2419 = vld [vmem:[%s2418] sm:$0x1]
        %v2420 = vsel %vm634, %v2414, 0.0
        %2421 = vadd.xlane.f32.xlu0 %v2420
        %v2422 = vpop.xlane.xlu0 %2421
        %v2423 = vsel %vm766, %v2415, 0.0
        %2424 = vadd.xlane.f32.xlu0 %v2423
        %v2425 = vpop.xlane.xlu0 %2424
        %v2426 = vmul.f32 %v2422, %v770
        %v2427 = vmul.f32 %v2425, %v770
        %v2428 = vsub.f32 %v2414, %v2426
        %v2429 = vsub.f32 %v2415, %v2427
        %v2430 = vmul.f32 %v2428, %v2428
        %v2431 = vmul.f32 %v2429, %v2429
        %v2432 = vsel %vm634, %v2430, 0.0
        %2433 = vadd.xlane.f32.xlu0 %v2432
        %v2434 = vpop.xlane.xlu0 %2433
        %v2435 = vsel %vm766, %v2431, 0.0
        %2436 = vadd.xlane.f32.xlu0 %v2435
        %v2437 = vpop.xlane.xlu0 %2436
        %v2438 = vmul.f32 %v2434, %v770
        %v2439 = vmul.f32 %v2437, %v770
        %v2440 = vadd.f32 %v2438, 1e-05
        %v2441 = vadd.f32 %v2439, 1e-05
        %v2442 = vrsqrt.pop %v2440
        %v2443 = vrsqrt.pop %v2441
        %v2444 = vmul.f32 %v2428, %v2442
        %v2445 = vmul.f32 %v2429, %v2443
        %v2447 = vlaneseq
        %v2448 = vshrl.u32 %v2447, 7
        %v2449 = vsub.s32 0, %v2448
        %v2450 = vrot.slane %v2417, %v2449
        %v2452 = vmul.f32 %v2444, %v2450
        %v2453 = vmul.f32 %v2445, %v2450
        %v2455 = vlaneseq
        %v2456 = vshrl.u32 %v2455, 7
        %v2457 = vsub.s32 0, %v2456
        %v2458 = vrot.slane %v2419, %v2457
        %v2460 = vadd.f32 %v2452, %v2458
        %v2461 = vadd.f32 %v2453, %v2458
        %v2462 = vpack.c.bf16 %v2461, %v2460
        %s2463 = scalar_lea.vmem %s11, 16
        %v2464 = vld [vmem:[%s2463] sm:$0xf]
        %v2465 = vld [vmem:[%s2463 + $0x4] sm:$0xf]
        %v2466 = vld [vmem:[%s2463 + $0x8] sm:$0xf]
        %v2467 = vld [vmem:[%s2463 + $0xc] sm:$0xf]
        %s2468 = scalar_lea.vmem %s12, 1
        %v2469 = vld [vmem:[%s2468] sm:$0x1]
        %v2471 = vlaneseq
        %v2472 = vshrl.u32 %v2471, 7
        %v2473 = vsub.s32 0, %v2472
        %v2474 = vrot.slane %v2469, %v2473
        %v2480 = vunpack.c.l.b16 %v2464
        %v2481 = vunpack.c.l.b16 %v2465
        %v2482 = vunpack.c.l.b16 %v2466
        %v2483 = vunpack.c.l.b16 %v2467
        %v2484 = vpack.c.b16 %v2481, %v2480
        %v2485 = vpack.c.b16 %v2483, %v2482
        %v2489 = vsel %vm634, %v2462, 0
        %2491 = vmatprep.subr.bf16.mxu0 0
        %2492 = vmatpush1.bf16.msra.mxu0 0
        %2493 = vmatprep.subr.bf16.mxu0 0
        %2494 = vmatpush1.bf16.msra.mxu0 0
        %2495 = vmatprep.subr.bf16.mxu0 0
        %2496 = vmatpush1.bf16.msra.mxu0 0
        %2497 = vmatprep.subr.bf16.mxu0 0
        %2498 = vmatpush1.bf16.msra.mxu0 0
        %2499 = vmatprep.subr.bf16.mxu0 0
        %2500 = vmatpush1.bf16.msra.mxu0 0
        %2501 = vmatprep.subr.bf16.mxu0 0
        %2502 = vmatpush1.bf16.msra.mxu0 0
        %2503 = vmatprep.subr.bf16.mxu0 0
        %2504 = vmatpush1.bf16.msra.mxu0 %v2485
        %2505 = vmatprep.subr.bf16.mxu0 0
        %2506 = vmatpush1.bf16.msra.mxu0 %v2484
        %2507 = vmatprep.subr.bf16.mxu0 0
        %2508 = vmatpush2.bf16.msra.mxu0 0
        %2509 = vmatprep.subr.bf16.mxu0 0
        %2510 = vmatpush2.bf16.msra.mxu0 0
        %2511 = vmatprep.subr.bf16.mxu0 0
        %2512 = vmatpush2.bf16.msra.mxu0 0
        %2513 = vmatprep.subr.bf16.mxu0 0
        %2514 = vmatpush2.bf16.msra.mxu0 0
        %2515 = vmatprep.subr.bf16.mxu0 0
        %2516 = vmatpush2.bf16.msra.mxu0 0
        %2517 = vmatprep.subr.bf16.mxu0 0
        %2518 = vmatpush2.bf16.msra.mxu0 0
        %2519 = vmatprep.subr.bf16.mxu0 0
        %2520 = vmatpush2.bf16.msra.mxu0 0
        %2521 = vmatprep.subr.bf16.mxu0 0
        %2522 = vmatpush2.bf16.msra.mxu0 0
        %2523 = vmatprep.mubr.bf16.mxu0 0
        %2524 = vmatmul.mubr.bf16.gmra.mxu0 %v2489
        %v2525 = vpop.f32.mrf.mxu0
        %v2526 = vadd.f32 %v2474, %v2525
        %v2527 = vpop.f32.mrf.mxu0
        %v2528 = vpop.f32.mrf.mxu0
        %v2529 = vadd.f32 %v2474, %v2528
        %v2530 = vpop.f32.mrf.mxu0
        %2531 = vdwg.mxu0
        %v2532 = vmul.f32 %v2526, 0.5
        %v2533 = vmul.f32 %v2529, 0.5
        %v2534 = vmul.f32 %v2526, 0.044715
        %v2535 = vmul.f32 %v2529, 0.044715
        %v2536 = vmul.f32 %v2534, %v2526
        %v2537 = vmul.f32 %v2535, %v2529
        %v2538 = vmul.f32 %v2536, %v2526
        %v2539 = vmul.f32 %v2537, %v2529
        %v2540 = vadd.f32 %v2526, %v2538
        %v2541 = vadd.f32 %v2529, %v2539
        %v2542 = vmul.f32 %v2540, 0.7978846
        %v2543 = vmul.f32 %v2541, 0.7978846
        %v2544 = vtanh.pop %v2542
        %v2545 = vtanh.pop %v2543
        %v2546 = vadd.f32 %v2544, 1.0
        %v2547 = vadd.f32 %v2545, 1.0
        %v2548 = vmul.f32 %v2532, %v2546
        %v2549 = vmul.f32 %v2533, %v2547
        %v2550 = vpack.c.bf16 %v2549, %v2548
        %s2551 = scalar_lea.vmem %s13, 32
        %v2552 = vld [vmem:[%s2551] sm:$0xf]
        %v2553 = vld [vmem:[%s2551 + $0x4] sm:$0xf]
        %v2554 = vld [vmem:[%s2551 + $0x8] sm:$0xf]
        %v2555 = vld [vmem:[%s2551 + $0xc] sm:$0xf]
        %v2556 = vld [vmem:[%s2551 + $0x10] sm:$0xf]
        %v2557 = vld [vmem:[%s2551 + $0x14] sm:$0xf]
        %v2558 = vld [vmem:[%s2551 + $0x18] sm:$0xf]
        %v2559 = vld [vmem:[%s2551 + $0x1c] sm:$0xf]
        %s2560 = scalar_lea.vmem %s14, 1
        %v2561 = vld [vmem:[%s2560] sm:$0x1]
        %v2563 = vlaneseq
        %v2564 = vshrl.u32 %v2563, 7
        %v2565 = vsub.s32 0, %v2564
        %v2566 = vrot.slane %v2561, %v2565
        %v2576 = vunpack.c.l.b16 %v2552
        %v2577 = vunpack.c.l.b16 %v2553
        %v2578 = vunpack.c.l.b16 %v2554
        %v2579 = vunpack.c.l.b16 %v2555
        %v2580 = vunpack.c.l.b16 %v2556
        %v2581 = vunpack.c.l.b16 %v2557
        %v2582 = vunpack.c.l.b16 %v2558
        %v2583 = vunpack.c.l.b16 %v2559
        %v2584 = vpack.c.b16 %v2577, %v2576
        %v2585 = vpack.c.b16 %v2579, %v2578
        %v2586 = vpack.c.b16 %v2581, %v2580
        %v2587 = vpack.c.b16 %v2583, %v2582
        %v2593 = vsel %vm637, %v2550, 0
        %2595 = vmatprep.subr.bf16.mxu0 0
        %2596 = vmatpush1.bf16.msra.mxu0 0
        %2597 = vmatprep.subr.bf16.mxu0 0
        %2598 = vmatpush1.bf16.msra.mxu0 0
        %2599 = vmatprep.subr.bf16.mxu0 0
        %2600 = vmatpush1.bf16.msra.mxu0 0
        %2601 = vmatprep.subr.bf16.mxu0 0
        %2602 = vmatpush1.bf16.msra.mxu0 0
        %2603 = vmatprep.subr.bf16.mxu0 0
        %2604 = vmatpush1.bf16.msra.mxu0 %v2587
        %2605 = vmatprep.subr.bf16.mxu0 0
        %2606 = vmatpush1.bf16.msra.mxu0 %v2586
        %2607 = vmatprep.subr.bf16.mxu0 0
        %2608 = vmatpush1.bf16.msra.mxu0 %v2585
        %2609 = vmatprep.subr.bf16.mxu0 0
        %2610 = vmatpush1.bf16.msra.mxu0 %v2584
        %2611 = vmatprep.subr.bf16.mxu0 0
        %2612 = vmatpush2.bf16.msra.mxu0 0
        %2613 = vmatprep.subr.bf16.mxu0 0
        %2614 = vmatpush2.bf16.msra.mxu0 0
        %2615 = vmatprep.subr.bf16.mxu0 0
        %2616 = vmatpush2.bf16.msra.mxu0 0
        %2617 = vmatprep.subr.bf16.mxu0 0
        %2618 = vmatpush2.bf16.msra.mxu0 0
        %2619 = vmatprep.subr.bf16.mxu0 0
        %2620 = vmatpush2.bf16.msra.mxu0 0
        %2621 = vmatprep.subr.bf16.mxu0 0
        %2622 = vmatpush2.bf16.msra.mxu0 0
        %2623 = vmatprep.subr.bf16.mxu0 0
        %2624 = vmatpush2.bf16.msra.mxu0 0
        %2625 = vmatprep.subr.bf16.mxu0 0
        %2626 = vmatpush2.bf16.msra.mxu0 0
        %2627 = vmatprep.mubr.bf16.mxu0 0
        %2628 = vmatmul.mubr.bf16.gmra.mxu0 %v2593
        %v2629 = vpop.f32.mrf.mxu0
        %v2630 = vadd.f32 %v2566, %v2629
        %v2631 = vpop.f32.mrf.mxu0
        %v2632 = vpop.f32.mrf.mxu0
        %v2633 = vpop.f32.mrf.mxu0
        %2634 = vdwg.mxu0
        %v2635 = vadd.f32 %v2460, %v2630
        %s2636 = scalar_lea.vmem %s15, 1
        %v2637 = vld [vmem:[%s2636] sm:$0x1]
        %s2638 = scalar_lea.vmem %s16, 1
        %v2639 = vld [vmem:[%s2638] sm:$0x1]
        %v2640 = vsel %vm634, %v2635, 0.0
        %2641 = vadd.xlane.f32.xlu0 %v2640
        %v2642 = vpop.xlane.xlu0 %2641
        %v2643 = vmul.f32 %v2642, %v770
        %v2644 = vsub.f32 %v2635, %v2643
        %v2645 = vmul.f32 %v2644, %v2644
        %v2646 = vsel %vm634, %v2645, 0.0
        %2647 = vadd.xlane.f32.xlu0 %v2646
        %v2648 = vpop.xlane.xlu0 %2647
        %v2649 = vmul.f32 %v2648, %v770
        %v2650 = vadd.f32 %v2649, 1e-05
        %v2651 = vrsqrt.pop %v2650
        %v2652 = vmul.f32 %v2644, %v2651
        %v2654 = vlaneseq
        %v2655 = vshrl.u32 %v2654, 7
        %v2656 = vsub.s32 0, %v2655
        %v2657 = vrot.slane %v2637, %v2656
        %v2659 = vmul.f32 %v2652, %v2657
        %v2661 = vlaneseq
        %v2662 = vshrl.u32 %v2661, 7
        %v2663 = vsub.s32 0, %v2662
        %v2664 = vrot.slane %v2639, %v2663
        %v2666 = vadd.f32 %v2659, %v2664
        %v2667 = vpack.c.bf16 %v2666, %v2666
        %v2668 = vld [vmem:[%s17] sm:$0xf]
        %v2669 = vld [vmem:[%s17 + $0x4] sm:$0xf]
        %v2670 = vld [vmem:[%s17 + $0x8] sm:$0xf]
        %v2671 = vld [vmem:[%s17 + $0xc] sm:$0xf]
        %v2672 = vld [vmem:[%s18] sm:$0x1]
        %v2677 = vunpack.c.l.b16 %v2668
        %v2678 = vunpack.c.l.b16 %v2669
        %v2679 = vunpack.c.l.b16 %v2670
        %v2680 = vunpack.c.l.b16 %v2671
        %v2681 = vpack.c.b16 %v2678, %v2677
        %v2682 = vpack.c.b16 %v2680, %v2679
        %v2686 = vsel %vm634, %v2667, 0
        %2688 = vmatprep.subr.bf16.mxu0 0
        %2689 = vmatpush1.bf16.msra.mxu0 0
        %2690 = vmatprep.subr.bf16.mxu0 0
        %2691 = vmatpush1.bf16.msra.mxu0 0
        %2692 = vmatprep.subr.bf16.mxu0 0
        %2693 = vmatpush1.bf16.msra.mxu0 0
        %2694 = vmatprep.subr.bf16.mxu0 0
        %2695 = vmatpush1.bf16.msra.mxu0 0
        %2696 = vmatprep.subr.bf16.mxu0 0
        %2697 = vmatpush1.bf16.msra.mxu0 0
        %2698 = vmatprep.subr.bf16.mxu0 0
        %2699 = vmatpush1.bf16.msra.mxu0 0
        %2700 = vmatprep.subr.bf16.mxu0 0
        %2701 = vmatpush1.bf16.msra.mxu0 %v2682
        %2702 = vmatprep.subr.bf16.mxu0 0
        %2703 = vmatpush1.bf16.msra.mxu0 %v2681
        %2704 = vmatprep.subr.bf16.mxu0 0
        %2705 = vmatpush2.bf16.msra.mxu0 0
        %2706 = vmatprep.subr.bf16.mxu0 0
        %2707 = vmatpush2.bf16.msra.mxu0 0
        %2708 = vmatprep.subr.bf16.mxu0 0
        %2709 = vmatpush2.bf16.msra.mxu0 0
        %2710 = vmatprep.subr.bf16.mxu0 0
        %2711 = vmatpush2.bf16.msra.mxu0 0
        %2712 = vmatprep.subr.bf16.mxu0 0
        %2713 = vmatpush2.bf16.msra.mxu0 0
        %2714 = vmatprep.subr.bf16.mxu0 0
        %2715 = vmatpush2.bf16.msra.mxu0 0
        %2716 = vmatprep.subr.bf16.mxu0 0
        %2717 = vmatpush2.bf16.msra.mxu0 0
        %2718 = vmatprep.subr.bf16.mxu0 0
        %2719 = vmatpush2.bf16.msra.mxu0 0
        %2720 = vmatprep.mubr.bf16.mxu0 0
        %2721 = vmatmul.mubr.bf16.gmra.mxu0 %v2686
        %v2722 = vpop.f32.mrf.mxu0
        %v2723 = vadd.f32 %v2672, %v2722
        %v2724 = vpop.f32.mrf.mxu0
        %v2725 = vpop.f32.mrf.mxu0
        %v2726 = vpop.f32.mrf.mxu0
        %2727 = vdwg.mxu0
        %2728 = vst [vmem:[%s594] sm:$0x1] %v2723
        %s2729 = sand.u32 %s445, 1
        %s2730 = scalar_lea.sflag [#allocation3], %s2729
        %s2731 = sand.u32 %s445, 1
        %s2732 = scalar_lea.vmem [#allocation2], %s2731
        // Predicated region
        $region97: #{_lambda_.3} parent=95 // pred_check
          %p2733 = pneg %p455
        $region98: #{_lambda_.3} parent=95 // pred_check_branch
          %2735 = sbr.rel (%p2733) target = $region100
        $region99: #{_lambda_.3} parent=95 // pred_region
          %s2737 = ssub.s32 16, 16
          %2738 = vsyncadd %s2730, %s2737
          %s2739 = smul.addr %s33, 16
          %s2740 = scalar_lea.hbm %s19, %s2739
          %s2742 = sshll.u32 %s2732, 4
          %s2743 = int_to_ptr.vmem [resolvable:$true] %s2742
          %2745 = dma.vmem_to_hbm [thread:$0]  %s2743, 16, %s2740, %s2730
        $region100: #{_lambda_.3} parent=95 // pred_fallthru
          _
      $region96: #{_lambda_.3} parent=5 // pred_fallthru
        _
      %p2746 = scmp.le.s32.totalorder 2, %s28
      // Predicated region
      $region101: #{_lambda_.3} parent=5 // pred_check
        %p2747 = pneg %p2746
      $region102: #{_lambda_.3} parent=5 // pred_check_branch
        %2749 = sbr.rel (%p2747) target = $region104
      $region103: #{_lambda_.3} parent=5 // pred_region
        %s2750 = ssub.s32 %s28, 2
        // Predicated region
        $region105: #{_lambda_.3} parent=103 // pred_check
          %p2751 = pneg %p461
        $region106: #{_lambda_.3} parent=103 // pred_check_branch
          %2753 = sbr.rel (%p2751) target = $region108
        $region107: #{_lambda_.3} parent=103 // pred_region
          %s2754 = sand.u32 %s446, 1
          %s2755 = scalar_lea.sflag [#allocation3], %s2754
          %s2756 = sand.u32 %s446, 1
          %s2757 = scalar_lea.vmem [#allocation2], %s2756
          %2758 = dma.done %s2755, 16
        $region108: #{_lambda_.3} parent=103 // pred_fallthru
          _
      $region104: #{_lambda_.3} parent=5 // pred_fallthru
        _
    $region6: #{_lambda_.3} parent=1 // loop_footer
      %s32 = sadd.s32 1, %s28
    $region7: #{_lambda_.3} parent=1 // loop_footer_branch
      %27 = sbr.rel target = $region3
    $region8: #{_lambda_.3} parent=1 // loop_exit
      _
    %2759 = vsyncpa [#allocation3], 1
    %s2760 = scalar_lea.sflag [#allocation3], 1
    %2761 = vsyncpa %s2760, 1

</llo_original>
